<compile_context>
chip_gen: v7x
topology: tpu7x:2x2x1
jax: 0.10.0
libtpu: 0.0.40
codegen_flags: <defaults>
</compile_context>

<pallas_src>
import jax
import jax.numpy as jnp
import numpy as np
from jax import lax
from jax.experimental import pallas as pl
from jax.experimental.pallas import tpu as pltpu


# ---------------------------------------------------------------------------
# Fused Pallas kernel: whole sequence in one invocation.
# ---------------------------------------------------------------------------
def _lv_behavior_kernel(x_ref,      # (B, T, I)   batch-first input (as in PyTorch)
                        wih_ref,    # (I, 3H)     GRU input weights (pre-transposed)
                        whh_ref,    # (H, 3H)     GRU hidden weights (pre-transposed)
                        bih_ref,    # (1, 3H)
                        bhh_ref,    # (1, 3H)
                        w1_ref,     # (H, M)      MLP layer 1 (pre-transposed)
                        b1_ref,     # (1, M)
                        w2_ref,     # (M, O)      MLP layer 2 (pre-transposed)
                        b2_ref,     # (1, O)
                        out_ref,    # (B, T, O)   log-probs (batch-first)
                        hs_ref):    # VMEM scratch (T, BP, H): per-step hidden states
    B, T, I = x_ref.shape
    BP = hs_ref.shape[1]            # batch padded to the f32 sublane granule (8)
    H = whh_ref.shape[0]
    O = out_ref.shape[-1]

    # ---- Hoisted input projection: one MXU matmul for all timesteps. ----
    x2 = x_ref[...].reshape(B * T, I)                       # rows ordered b*T + t
    if BP > B:                                              # pad batch rows with zeros
        x2 = jnp.concatenate(
            [x2, jnp.zeros(((BP - B) * T, I), x2.dtype)], axis=0)
    gi_all = jnp.dot(x2, wih_ref[...],
                     preferred_element_type=jnp.float32) + bih_ref[...]
    gi_all = gi_all.reshape(BP, T, 3 * H)                   # (BP, T, 3H)

    # ---- Sequential GRU recurrence: only h @ W_hh remains per step. ----
    whh = whh_ref[...]                                      # hoisted weight/bias loads
    bhh = bhh_ref[...]
    h = jnp.zeros((BP, H), jnp.float32)                     # h_0 = 0 (PyTorch default)
    for t in range(T):                                      # static unroll; h stays in vregs
        gi = gi_all[:, t, :]                                # (BP, 3H), static slice
        gh = jnp.dot(h, whh, preferred_element_type=jnp.float32) + bhh
        r = jax.nn.sigmoid(gi[:, 0 * H:1 * H] + gh[:, 0 * H:1 * H])
        z = jax.nn.sigmoid(gi[:, 1 * H:2 * H] + gh[:, 1 * H:2 * H])
        n = jnp.tanh(gi[:, 2 * H:3 * H] + r * gh[:, 2 * H:3 * H])
        h = (1.0 - z) * n + z * h
        hs_ref[t] = h                                       # leading-index store to scratch

    # ---- Batched MLP head + log-softmax over all (BP*T) rows at once. ----
    h_all = hs_ref[...].reshape(T * BP, H)                  # time-major rows t*BP + b
    a = jnp.dot(h_all, w1_ref[...],
                preferred_element_type=jnp.float32) + b1_ref[...]
    a = jnp.maximum(a, 0.0)
    logits = jnp.dot(a, w2_ref[...],
                     preferred_element_type=jnp.float32) + b2_ref[...]
    m = jnp.max(logits, axis=-1, keepdims=True)
    lse = jnp.log(jnp.sum(jnp.exp(logits - m), axis=-1, keepdims=True)) + m
    logp = (logits - lse).reshape(T, BP, O)                 # (T, BP, O)

    # ---- Write batch-first output; drop padded batch rows. ----
    for b in range(B):                                      # B tiny: a few (T, O) stores
        out_ref[b] = logp[:, b, :]


# ---------------------------------------------------------------------------
# Wrapper: single pallas_call, no grid, no transposes.
# ---------------------------------------------------------------------------
@jax.jit
def lv_behavior_forward(x, params):
    """x: (B, T, input_size), batch_first like the PyTorch module."""
    B, T, I = x.shape
    wih, whh, bih, bhh, w1, b1, w2, b2 = params
    H = whh.shape[0]
    O = w2.shape[1]
    BP = ((B + 7) // 8) * 8          # pad batch to the f32 sublane granule

    return pl.pallas_call(
        _lv_behavior_kernel,
        out_shape=jax.ShapeDtypeStruct((B, T, O), jnp.float32),
        scratch_shapes=[pltpu.VMEM((T, BP, H), jnp.float32)],
    )(x, wih, whh, bih, bhh, w1, b1, w2, b2)


# ---------------------------------------------------------------------------
# Pure-JAX reference (mirrors the PyTorch forward) for a correctness check.
# ---------------------------------------------------------------------------
def lv_behavior_reference(x, params):
    wih, whh, bih, bhh, w1, b1, w2, b2 = params
    B, T, I = x.shape
    H = whh.shape[0]

    def step(h, x_t):
        gi = x_t @ wih + bih
        gh = h @ whh + bhh
        r = jax.nn.sigmoid(gi[:, :H] + gh[:, :H])
        z = jax.nn.sigmoid(gi[:, H:2 * H] + gh[:, H:2 * H])
        n = jnp.tanh(gi[:, 2 * H:] + r * gh[:, 2 * H:])
        h_new = (1.0 - z) * n + z * h
        return h_new, h_new

    _, hs = lax.scan(step, jnp.zeros((B, H), jnp.float32),
                     jnp.transpose(x, (1, 0, 2)))
    gru_out = jnp.transpose(hs, (1, 0, 2))                  # (B, T, H)
    a = jnp.maximum(gru_out @ w1 + b1, 0.0)
    logits = a @ w2 + b2
    return jax.nn.log_softmax(logits, axis=2)


# ---------------------------------------------------------------------------
# Deterministic parameter init (PyTorch-style uniform(-1/sqrt(H), 1/sqrt(H))).
# ---------------------------------------------------------------------------
def init_params(key, input_size, gru_hidden, mlp_hidden, output_size):
    ks = jax.random.split(key, 8)
    s_gru = 1.0 / np.sqrt(gru_hidden)
    s_m1 = 1.0 / np.sqrt(gru_hidden)
    s_m2 = 1.0 / np.sqrt(mlp_hidden)
    u = lambda k, shape, s: jax.random.uniform(k, shape, jnp.float32, -s, s)
    # Weights stored pre-transposed for right-multiplication in the kernel.
    wih = u(ks[0], (input_size, 3 * gru_hidden), s_gru)     # (I, 3H)
    whh = u(ks[1], (gru_hidden, 3 * gru_hidden), s_gru)     # (H, 3H)
    bih = u(ks[2], (1, 3 * gru_hidden), s_gru)
    bhh = u(ks[3], (1, 3 * gru_hidden), s_gru)
    w1 = u(ks[4], (gru_hidden, mlp_hidden), s_m1)           # (H, M)
    b1 = u(ks[5], (1, mlp_hidden), s_m1)
    w2 = u(ks[6], (mlp_hidden, output_size), s_m2)          # (M, O)
    b2 = u(ks[7], (1, output_size), s_m2)
    return (wih, whh, bih, bhh, w1, b1, w2, b2)


if __name__ == "__main__":
    B, T = 2, 8
    input_size, gru_hidden, mlp_hidden, output_size = 4, 32, 32, 5

    key = jax.random.PRNGKey(0)
    k_x, k_p = jax.random.split(key)
    x = jax.random.normal(k_x, (B, T, input_size), jnp.float32)
    params = init_params(k_p, input_size, gru_hidden, mlp_hidden, output_size)

    out = jax.block_until_ready(lv_behavior_forward(x, params))
    ref = jax.block_until_ready(lv_behavior_reference(x, params))

    assert out.shape == (B, T, output_size), out.shape
    err = float(np.max(np.abs(np.asarray(out) - np.asarray(ref))))
    assert np.allclose(np.asarray(out), np.asarray(ref), atol=2e-3, rtol=2e-3), (
        f"kernel / reference mismatch: max abs err = {err}")

    print("KERNEL_OK")
</pallas_src>

<mosaic_0001>
module attributes {stable_mosaic.version = 11 : i64} {
  func.func @_lv_behavior_kernel(%arg0: memref<2x8x4xf32, #tpu.memory_space<vmem>>, %arg1: memref<4x96xf32, #tpu.memory_space<vmem>>, %arg2: memref<32x96xf32, #tpu.memory_space<vmem>>, %arg3: memref<1x96xf32, #tpu.memory_space<vmem>>, %arg4: memref<1x96xf32, #tpu.memory_space<vmem>>, %arg5: memref<32x32xf32, #tpu.memory_space<vmem>>, %arg6: memref<1x32xf32, #tpu.memory_space<vmem>>, %arg7: memref<32x5xf32, #tpu.memory_space<vmem>>, %arg8: memref<1x5xf32, #tpu.memory_space<vmem>>, %arg9: memref<2x8x5xf32, #tpu.memory_space<vmem>>, %arg10: memref<8x8x32xf32, #tpu.memory_space<vmem>>) attributes {dimension_semantics = [], scalar_prefetch = 0 : i64, scratch_operands = 1 : i64, tpu.core_type = #tpu.core_type<tc>} {
    %c0 = arith.constant 0 : index
    %c0_0 = arith.constant 0 : index
    %c0_1 = arith.constant 0 : index
    %0 = vector.load %arg0[%c0, %c0_0, %c0_1] : memref<2x8x4xf32, #tpu.memory_space<vmem>>, vector<2x8x4xf32>
    %1 = vector.shape_cast %0 : vector<2x8x4xf32> to vector<16x4xf32>
    %cst = arith.constant 0.000000e+00 : f32
    %2 = vector.broadcast %cst : f32 to vector<48x4xf32>
    %3 = tpu.concatenate %1, %2 in 0 : vector<16x4xf32>, vector<48x4xf32> -> vector<64x4xf32>
    %c0_2 = arith.constant 0 : index
    %c0_3 = arith.constant 0 : index
    %4 = vector.load %arg1[%c0_2, %c0_3] : memref<4x96xf32, #tpu.memory_space<vmem>>, vector<4x96xf32>
    %cst_4 = arith.constant dense<0.000000e+00> : vector<64x96xf32>
    %5 = tpu.matmul %3, %4, %cst_4 {dimension_numbers = #tpu.dot_dimension_numbers<[1], [0], [0], [1], [0, 0, 1, 1], [], []>} : vector<64x4xf32>, vector<4x96xf32>, vector<64x96xf32> -> vector<64x96xf32>
    %c0_5 = arith.constant 0 : index
    %c0_6 = arith.constant 0 : index
    %6 = vector.load %arg3[%c0_5, %c0_6] : memref<1x96xf32, #tpu.memory_space<vmem>>, vector<1x96xf32>
    %7 = vector.broadcast %6 : vector<1x96xf32> to vector<64x96xf32>
    %8 = arith.addf %5, %7 : vector<64x96xf32>
    %9 = vector.shape_cast %8 : vector<64x96xf32> to vector<8x8x96xf32>
    %c0_7 = arith.constant 0 : index
    %c0_8 = arith.constant 0 : index
    %10 = vector.load %arg2[%c0_7, %c0_8] : memref<32x96xf32, #tpu.memory_space<vmem>>, vector<32x96xf32>
    %c0_9 = arith.constant 0 : index
    %c0_10 = arith.constant 0 : index
    %11 = vector.load %arg4[%c0_9, %c0_10] : memref<1x96xf32, #tpu.memory_space<vmem>>, vector<1x96xf32>
    %cst_11 = arith.constant 0.000000e+00 : f32
    %12 = vector.broadcast %cst_11 : f32 to vector<8x32xf32>
    %13 = vector.extract_strided_slice %9 {offsets = [0, 0, 0], sizes = [8, 1, 96], strides = [1, 1, 1]} : vector<8x8x96xf32> to vector<8x1x96xf32>
    %14 = vector.shape_cast %13 : vector<8x1x96xf32> to vector<8x96xf32>
    %cst_12 = arith.constant dense<0.000000e+00> : vector<8x96xf32>
    %15 = tpu.matmul %12, %10, %cst_12 {dimension_numbers = #tpu.dot_dimension_numbers<[1], [0], [0], [1], [0, 0, 1, 1], [], []>} : vector<8x32xf32>, vector<32x96xf32>, vector<8x96xf32> -> vector<8x96xf32>
    %16 = vector.broadcast %11 : vector<1x96xf32> to vector<8x96xf32>
    %17 = arith.addf %15, %16 : vector<8x96xf32>
    %18 = vector.extract_strided_slice %14 {offsets = [0, 0], sizes = [8, 32], strides = [1, 1]} : vector<8x96xf32> to vector<8x32xf32>
    %19 = vector.extract_strided_slice %17 {offsets = [0, 0], sizes = [8, 32], strides = [1, 1]} : vector<8x96xf32> to vector<8x32xf32>
    %20 = arith.addf %18, %19 : vector<8x32xf32>
    %21 = arith.negf %20 : vector<8x32xf32>
    %22 = math.exp %21 : vector<8x32xf32>
    %cst_13 = arith.constant 1.000000e+00 : f32
    %23 = vector.broadcast %cst_13 : f32 to vector<8x32xf32>
    %24 = arith.addf %23, %22 : vector<8x32xf32>
    %25 = arith.divf %23, %24 : vector<8x32xf32>
    %26 = vector.extract_strided_slice %14 {offsets = [0, 32], sizes = [8, 32], strides = [1, 1]} : vector<8x96xf32> to vector<8x32xf32>
    %27 = vector.extract_strided_slice %17 {offsets = [0, 32], sizes = [8, 32], strides = [1, 1]} : vector<8x96xf32> to vector<8x32xf32>
    %28 = arith.addf %26, %27 : vector<8x32xf32>
    %29 = arith.negf %28 : vector<8x32xf32>
    %30 = math.exp %29 : vector<8x32xf32>
    %cst_14 = arith.constant 1.000000e+00 : f32
    %31 = vector.broadcast %cst_14 : f32 to vector<8x32xf32>
    %32 = arith.addf %31, %30 : vector<8x32xf32>
    %33 = arith.divf %31, %32 : vector<8x32xf32>
    %34 = vector.extract_strided_slice %14 {offsets = [0, 64], sizes = [8, 32], strides = [1, 1]} : vector<8x96xf32> to vector<8x32xf32>
    %35 = vector.extract_strided_slice %17 {offsets = [0, 64], sizes = [8, 32], strides = [1, 1]} : vector<8x96xf32> to vector<8x32xf32>
    %36 = arith.mulf %25, %35 : vector<8x32xf32>
    %37 = arith.addf %34, %36 : vector<8x32xf32>
    %38 = math.tanh %37 : vector<8x32xf32>
    %cst_15 = arith.constant 1.000000e+00 : f32
    %39 = vector.broadcast %cst_15 : f32 to vector<8x32xf32>
    %40 = arith.subf %39, %33 : vector<8x32xf32>
    %41 = arith.mulf %40, %38 : vector<8x32xf32>
    %42 = arith.mulf %33, %12 : vector<8x32xf32>
    %43 = arith.addf %41, %42 : vector<8x32xf32>
    %c0_16 = arith.constant 0 : index
    %c0_17 = arith.constant 0 : index
    %c0_18 = arith.constant 0 : index
    %44 = vector.load %arg10[%c0_16, %c0_17, %c0_18] : memref<8x8x32xf32, #tpu.memory_space<vmem>>, vector<1x8x32xf32>
    %45 = vector.shape_cast %44 : vector<1x8x32xf32> to vector<8x32xf32>
    %46 = vector.shape_cast %43 : vector<8x32xf32> to vector<1x8x32xf32>
    tpu.vector_store %arg10[%c0_16, %c0_17, %c0_18], %46 {strides = array<i32>} : memref<8x8x32xf32, #tpu.memory_space<vmem>>, vector<1x8x32xf32>,
    %47 = vector.extract_strided_slice %9 {offsets = [0, 1, 0], sizes = [8, 1, 96], strides = [1, 1, 1]} : vector<8x8x96xf32> to vector<8x1x96xf32>
    %48 = vector.shape_cast %47 : vector<8x1x96xf32> to vector<8x96xf32>
    %cst_19 = arith.constant dense<0.000000e+00> : vector<8x96xf32>
    %49 = tpu.matmul %43, %10, %cst_19 {dimension_numbers = #tpu.dot_dimension_numbers<[1], [0], [0], [1], [0, 0, 1, 1], [], []>} : vector<8x32xf32>, vector<32x96xf32>, vector<8x96xf32> -> vector<8x96xf32>
    %50 = vector.broadcast %11 : vector<1x96xf32> to vector<8x96xf32>
    %51 = arith.addf %49, %50 : vector<8x96xf32>
    %52 = vector.extract_strided_slice %48 {offsets = [0, 0], sizes = [8, 32], strides = [1, 1]} : vector<8x96xf32> to vector<8x32xf32>
    %53 = vector.extract_strided_slice %51 {offsets = [0, 0], sizes = [8, 32], strides = [1, 1]} : vector<8x96xf32> to vector<8x32xf32>
    %54 = arith.addf %52, %53 : vector<8x32xf32>
    %55 = arith.negf %54 : vector<8x32xf32>
    %56 = math.exp %55 : vector<8x32xf32>
    %cst_20 = arith.constant 1.000000e+00 : f32
    %57 = vector.broadcast %cst_20 : f32 to vector<8x32xf32>
    %58 = arith.addf %57, %56 : vector<8x32xf32>
    %59 = arith.divf %57, %58 : vector<8x32xf32>
    %60 = vector.extract_strided_slice %48 {offsets = [0, 32], sizes = [8, 32], strides = [1, 1]} : vector<8x96xf32> to vector<8x32xf32>
    %61 = vector.extract_strided_slice %51 {offsets = [0, 32], sizes = [8, 32], strides = [1, 1]} : vector<8x96xf32> to vector<8x32xf32>
    %62 = arith.addf %60, %61 : vector<8x32xf32>
    %63 = arith.negf %62 : vector<8x32xf32>
    %64 = math.exp %63 : vector<8x32xf32>
    %cst_21 = arith.constant 1.000000e+00 : f32
    %65 = vector.broadcast %cst_21 : f32 to vector<8x32xf32>
    %66 = arith.addf %65, %64 : vector<8x32xf32>
    %67 = arith.divf %65, %66 : vector<8x32xf32>
    %68 = vector.extract_strided_slice %48 {offsets = [0, 64], sizes = [8, 32], strides = [1, 1]} : vector<8x96xf32> to vector<8x32xf32>
    %69 = vector.extract_strided_slice %51 {offsets = [0, 64], sizes = [8, 32], strides = [1, 1]} : vector<8x96xf32> to vector<8x32xf32>
    %70 = arith.mulf %59, %69 : vector<8x32xf32>
    %71 = arith.addf %68, %70 : vector<8x32xf32>
    %72 = math.tanh %71 : vector<8x32xf32>
    %cst_22 = arith.constant 1.000000e+00 : f32
    %73 = vector.broadcast %cst_22 : f32 to vector<8x32xf32>
    %74 = arith.subf %73, %67 : vector<8x32xf32>
    %75 = arith.mulf %74, %72 : vector<8x32xf32>
    %76 = arith.mulf %67, %43 : vector<8x32xf32>
    %77 = arith.addf %75, %76 : vector<8x32xf32>
    %c1 = arith.constant 1 : index
    %c0_23 = arith.constant 0 : index
    %c0_24 = arith.constant 0 : index
    %78 = vector.load %arg10[%c1, %c0_23, %c0_24] : memref<8x8x32xf32, #tpu.memory_space<vmem>>, vector<1x8x32xf32>
    %79 = vector.shape_cast %78 : vector<1x8x32xf32> to vector<8x32xf32>
    %80 = vector.shape_cast %77 : vector<8x32xf32> to vector<1x8x32xf32>
    tpu.vector_store %arg10[%c1, %c0_23, %c0_24], %80 {strides = array<i32>} : memref<8x8x32xf32, #tpu.memory_space<vmem>>, vector<1x8x32xf32>,
    %81 = vector.extract_strided_slice %9 {offsets = [0, 2, 0], sizes = [8, 1, 96], strides = [1, 1, 1]} : vector<8x8x96xf32> to vector<8x1x96xf32>
    %82 = vector.shape_cast %81 : vector<8x1x96xf32> to vector<8x96xf32>
    %cst_25 = arith.constant dense<0.000000e+00> : vector<8x96xf32>
    %83 = tpu.matmul %77, %10, %cst_25 {dimension_numbers = #tpu.dot_dimension_numbers<[1], [0], [0], [1], [0, 0, 1, 1], [], []>} : vector<8x32xf32>, vector<32x96xf32>, vector<8x96xf32> -> vector<8x96xf32>
    %84 = vector.broadcast %11 : vector<1x96xf32> to vector<8x96xf32>
    %85 = arith.addf %83, %84 : vector<8x96xf32>
    %86 = vector.extract_strided_slice %82 {offsets = [0, 0], sizes = [8, 32], strides = [1, 1]} : vector<8x96xf32> to vector<8x32xf32>
    %87 = vector.extract_strided_slice %85 {offsets = [0, 0], sizes = [8, 32], strides = [1, 1]} : vector<8x96xf32> to vector<8x32xf32>
    %88 = arith.addf %86, %87 : vector<8x32xf32>
    %89 = arith.negf %88 : vector<8x32xf32>
    %90 = math.exp %89 : vector<8x32xf32>
    %cst_26 = arith.constant 1.000000e+00 : f32
    %91 = vector.broadcast %cst_26 : f32 to vector<8x32xf32>
    %92 = arith.addf %91, %90 : vector<8x32xf32>
    %93 = arith.divf %91, %92 : vector<8x32xf32>
    %94 = vector.extract_strided_slice %82 {offsets = [0, 32], sizes = [8, 32], strides = [1, 1]} : vector<8x96xf32> to vector<8x32xf32>
    %95 = vector.extract_strided_slice %85 {offsets = [0, 32], sizes = [8, 32], strides = [1, 1]} : vector<8x96xf32> to vector<8x32xf32>
    %96 = arith.addf %94, %95 : vector<8x32xf32>
    %97 = arith.negf %96 : vector<8x32xf32>
    %98 = math.exp %97 : vector<8x32xf32>
    %cst_27 = arith.constant 1.000000e+00 : f32
    %99 = vector.broadcast %cst_27 : f32 to vector<8x32xf32>
    %100 = arith.addf %99, %98 : vector<8x32xf32>
    %101 = arith.divf %99, %100 : vector<8x32xf32>
    %102 = vector.extract_strided_slice %82 {offsets = [0, 64], sizes = [8, 32], strides = [1, 1]} : vector<8x96xf32> to vector<8x32xf32>
    %103 = vector.extract_strided_slice %85 {offsets = [0, 64], sizes = [8, 32], strides = [1, 1]} : vector<8x96xf32> to vector<8x32xf32>
    %104 = arith.mulf %93, %103 : vector<8x32xf32>
    %105 = arith.addf %102, %104 : vector<8x32xf32>
    %106 = math.tanh %105 : vector<8x32xf32>
    %cst_28 = arith.constant 1.000000e+00 : f32
    %107 = vector.broadcast %cst_28 : f32 to vector<8x32xf32>
    %108 = arith.subf %107, %101 : vector<8x32xf32>
    %109 = arith.mulf %108, %106 : vector<8x32xf32>
    %110 = arith.mulf %101, %77 : vector<8x32xf32>
    %111 = arith.addf %109, %110 : vector<8x32xf32>
    %c2 = arith.constant 2 : index
    %c0_29 = arith.constant 0 : index
    %c0_30 = arith.constant 0 : index
    %112 = vector.load %arg10[%c2, %c0_29, %c0_30] : memref<8x8x32xf32, #tpu.memory_space<vmem>>, vector<1x8x32xf32>
    %113 = vector.shape_cast %112 : vector<1x8x32xf32> to vector<8x32xf32>
    %114 = vector.shape_cast %111 : vector<8x32xf32> to vector<1x8x32xf32>
    tpu.vector_store %arg10[%c2, %c0_29, %c0_30], %114 {strides = array<i32>} : memref<8x8x32xf32, #tpu.memory_space<vmem>>, vector<1x8x32xf32>,
    %115 = vector.extract_strided_slice %9 {offsets = [0, 3, 0], sizes = [8, 1, 96], strides = [1, 1, 1]} : vector<8x8x96xf32> to vector<8x1x96xf32>
    %116 = vector.shape_cast %115 : vector<8x1x96xf32> to vector<8x96xf32>
    %cst_31 = arith.constant dense<0.000000e+00> : vector<8x96xf32>
    %117 = tpu.matmul %111, %10, %cst_31 {dimension_numbers = #tpu.dot_dimension_numbers<[1], [0], [0], [1], [0, 0, 1, 1], [], []>} : vector<8x32xf32>, vector<32x96xf32>, vector<8x96xf32> -> vector<8x96xf32>
    %118 = vector.broadcast %11 : vector<1x96xf32> to vector<8x96xf32>
    %119 = arith.addf %117, %118 : vector<8x96xf32>
    %120 = vector.extract_strided_slice %116 {offsets = [0, 0], sizes = [8, 32], strides = [1, 1]} : vector<8x96xf32> to vector<8x32xf32>
    %121 = vector.extract_strided_slice %119 {offsets = [0, 0], sizes = [8, 32], strides = [1, 1]} : vector<8x96xf32> to vector<8x32xf32>
    %122 = arith.addf %120, %121 : vector<8x32xf32>
    %123 = arith.negf %122 : vector<8x32xf32>
    %124 = math.exp %123 : vector<8x32xf32>
    %cst_32 = arith.constant 1.000000e+00 : f32
    %125 = vector.broadcast %cst_32 : f32 to vector<8x32xf32>
    %126 = arith.addf %125, %124 : vector<8x32xf32>
    %127 = arith.divf %125, %126 : vector<8x32xf32>
    %128 = vector.extract_strided_slice %116 {offsets = [0, 32], sizes = [8, 32], strides = [1, 1]} : vector<8x96xf32> to vector<8x32xf32>
    %129 = vector.extract_strided_slice %119 {offsets = [0, 32], sizes = [8, 32], strides = [1, 1]} : vector<8x96xf32> to vector<8x32xf32>
    %130 = arith.addf %128, %129 : vector<8x32xf32>
    %131 = arith.negf %130 : vector<8x32xf32>
    %132 = math.exp %131 : vector<8x32xf32>
    %cst_33 = arith.constant 1.000000e+00 : f32
    %133 = vector.broadcast %cst_33 : f32 to vector<8x32xf32>
    %134 = arith.addf %133, %132 : vector<8x32xf32>
    %135 = arith.divf %133, %134 : vector<8x32xf32>
    %136 = vector.extract_strided_slice %116 {offsets = [0, 64], sizes = [8, 32], strides = [1, 1]} : vector<8x96xf32> to vector<8x32xf32>
    %137 = vector.extract_strided_slice %119 {offsets = [0, 64], sizes = [8, 32], strides = [1, 1]} : vector<8x96xf32> to vector<8x32xf32>
    %138 = arith.mulf %127, %137 : vector<8x32xf32>
    %139 = arith.addf %136, %138 : vector<8x32xf32>
    %140 = math.tanh %139 : vector<8x32xf32>
    %cst_34 = arith.constant 1.000000e+00 : f32
    %141 = vector.broadcast %cst_34 : f32 to vector<8x32xf32>
    %142 = arith.subf %141, %135 : vector<8x32xf32>
    %143 = arith.mulf %142, %140 : vector<8x32xf32>
    %144 = arith.mulf %135, %111 : vector<8x32xf32>
    %145 = arith.addf %143, %144 : vector<8x32xf32>
    %c3 = arith.constant 3 : index
    %c0_35 = arith.constant 0 : index
    %c0_36 = arith.constant 0 : index
    %146 = vector.load %arg10[%c3, %c0_35, %c0_36] : memref<8x8x32xf32, #tpu.memory_space<vmem>>, vector<1x8x32xf32>
    %147 = vector.shape_cast %146 : vector<1x8x32xf32> to vector<8x32xf32>
    %148 = vector.shape_cast %145 : vector<8x32xf32> to vector<1x8x32xf32>
    tpu.vector_store %arg10[%c3, %c0_35, %c0_36], %148 {strides = array<i32>} : memref<8x8x32xf32, #tpu.memory_space<vmem>>, vector<1x8x32xf32>,
    %149 = vector.extract_strided_slice %9 {offsets = [0, 4, 0], sizes = [8, 1, 96], strides = [1, 1, 1]} : vector<8x8x96xf32> to vector<8x1x96xf32>
    %150 = vector.shape_cast %149 : vector<8x1x96xf32> to vector<8x96xf32>
    %cst_37 = arith.constant dense<0.000000e+00> : vector<8x96xf32>
    %151 = tpu.matmul %145, %10, %cst_37 {dimension_numbers = #tpu.dot_dimension_numbers<[1], [0], [0], [1], [0, 0, 1, 1], [], []>} : vector<8x32xf32>, vector<32x96xf32>, vector<8x96xf32> -> vector<8x96xf32>
    %152 = vector.broadcast %11 : vector<1x96xf32> to vector<8x96xf32>
    %153 = arith.addf %151, %152 : vector<8x96xf32>
    %154 = vector.extract_strided_slice %150 {offsets = [0, 0], sizes = [8, 32], strides = [1, 1]} : vector<8x96xf32> to vector<8x32xf32>
    %155 = vector.extract_strided_slice %153 {offsets = [0, 0], sizes = [8, 32], strides = [1, 1]} : vector<8x96xf32> to vector<8x32xf32>
    %156 = arith.addf %154, %155 : vector<8x32xf32>
    %157 = arith.negf %156 : vector<8x32xf32>
    %158 = math.exp %157 : vector<8x32xf32>
    %cst_38 = arith.constant 1.000000e+00 : f32
    %159 = vector.broadcast %cst_38 : f32 to vector<8x32xf32>
    %160 = arith.addf %159, %158 : vector<8x32xf32>
    %161 = arith.divf %159, %160 : vector<8x32xf32>
    %162 = vector.extract_strided_slice %150 {offsets = [0, 32], sizes = [8, 32], strides = [1, 1]} : vector<8x96xf32> to vector<8x32xf32>
    %163 = vector.extract_strided_slice %153 {offsets = [0, 32], sizes = [8, 32], strides = [1, 1]} : vector<8x96xf32> to vector<8x32xf32>
    %164 = arith.addf %162, %163 : vector<8x32xf32>
    %165 = arith.negf %164 : vector<8x32xf32>
    %166 = math.exp %165 : vector<8x32xf32>
    %cst_39 = arith.constant 1.000000e+00 : f32
    %167 = vector.broadcast %cst_39 : f32 to vector<8x32xf32>
    %168 = arith.addf %167, %166 : vector<8x32xf32>
    %169 = arith.divf %167, %168 : vector<8x32xf32>
    %170 = vector.extract_strided_slice %150 {offsets = [0, 64], sizes = [8, 32], strides = [1, 1]} : vector<8x96xf32> to vector<8x32xf32>
    %171 = vector.extract_strided_slice %153 {offsets = [0, 64], sizes = [8, 32], strides = [1, 1]} : vector<8x96xf32> to vector<8x32xf32>
    %172 = arith.mulf %161, %171 : vector<8x32xf32>
    %173 = arith.addf %170, %172 : vector<8x32xf32>
    %174 = math.tanh %173 : vector<8x32xf32>
    %cst_40 = arith.constant 1.000000e+00 : f32
    %175 = vector.broadcast %cst_40 : f32 to vector<8x32xf32>
    %176 = arith.subf %175, %169 : vector<8x32xf32>
    %177 = arith.mulf %176, %174 : vector<8x32xf32>
    %178 = arith.mulf %169, %145 : vector<8x32xf32>
    %179 = arith.addf %177, %178 : vector<8x32xf32>
    %c4 = arith.constant 4 : index
    %c0_41 = arith.constant 0 : index
    %c0_42 = arith.constant 0 : index
    %180 = vector.load %arg10[%c4, %c0_41, %c0_42] : memref<8x8x32xf32, #tpu.memory_space<vmem>>, vector<1x8x32xf32>
    %181 = vector.shape_cast %180 : vector<1x8x32xf32> to vector<8x32xf32>
    %182 = vector.shape_cast %179 : vector<8x32xf32> to vector<1x8x32xf32>
    tpu.vector_store %arg10[%c4, %c0_41, %c0_42], %182 {strides = array<i32>} : memref<8x8x32xf32, #tpu.memory_space<vmem>>, vector<1x8x32xf32>,
    %183 = vector.extract_strided_slice %9 {offsets = [0, 5, 0], sizes = [8, 1, 96], strides = [1, 1, 1]} : vector<8x8x96xf32> to vector<8x1x96xf32>
    %184 = vector.shape_cast %183 : vector<8x1x96xf32> to vector<8x96xf32>
    %cst_43 = arith.constant dense<0.000000e+00> : vector<8x96xf32>
    %185 = tpu.matmul %179, %10, %cst_43 {dimension_numbers = #tpu.dot_dimension_numbers<[1], [0], [0], [1], [0, 0, 1, 1], [], []>} : vector<8x32xf32>, vector<32x96xf32>, vector<8x96xf32> -> vector<8x96xf32>
    %186 = vector.broadcast %11 : vector<1x96xf32> to vector<8x96xf32>
    %187 = arith.addf %185, %186 : vector<8x96xf32>
    %188 = vector.extract_strided_slice %184 {offsets = [0, 0], sizes = [8, 32], strides = [1, 1]} : vector<8x96xf32> to vector<8x32xf32>
    %189 = vector.extract_strided_slice %187 {offsets = [0, 0], sizes = [8, 32], strides = [1, 1]} : vector<8x96xf32> to vector<8x32xf32>
    %190 = arith.addf %188, %189 : vector<8x32xf32>
    %191 = arith.negf %190 : vector<8x32xf32>
    %192 = math.exp %191 : vector<8x32xf32>
    %cst_44 = arith.constant 1.000000e+00 : f32
    %193 = vector.broadcast %cst_44 : f32 to vector<8x32xf32>
    %194 = arith.addf %193, %192 : vector<8x32xf32>
    %195 = arith.divf %193, %194 : vector<8x32xf32>
    %196 = vector.extract_strided_slice %184 {offsets = [0, 32], sizes = [8, 32], strides = [1, 1]} : vector<8x96xf32> to vector<8x32xf32>
    %197 = vector.extract_strided_slice %187 {offsets = [0, 32], sizes = [8, 32], strides = [1, 1]} : vector<8x96xf32> to vector<8x32xf32>
    %198 = arith.addf %196, %197 : vector<8x32xf32>
    %199 = arith.negf %198 : vector<8x32xf32>
    %200 = math.exp %199 : vector<8x32xf32>
    %cst_45 = arith.constant 1.000000e+00 : f32
    %201 = vector.broadcast %cst_45 : f32 to vector<8x32xf32>
    %202 = arith.addf %201, %200 : vector<8x32xf32>
    %203 = arith.divf %201, %202 : vector<8x32xf32>
    %204 = vector.extract_strided_slice %184 {offsets = [0, 64], sizes = [8, 32], strides = [1, 1]} : vector<8x96xf32> to vector<8x32xf32>
    %205 = vector.extract_strided_slice %187 {offsets = [0, 64], sizes = [8, 32], strides = [1, 1]} : vector<8x96xf32> to vector<8x32xf32>
    %206 = arith.mulf %195, %205 : vector<8x32xf32>
    %207 = arith.addf %204, %206 : vector<8x32xf32>
    %208 = math.tanh %207 : vector<8x32xf32>
    %cst_46 = arith.constant 1.000000e+00 : f32
    %209 = vector.broadcast %cst_46 : f32 to vector<8x32xf32>
    %210 = arith.subf %209, %203 : vector<8x32xf32>
    %211 = arith.mulf %210, %208 : vector<8x32xf32>
    %212 = arith.mulf %203, %179 : vector<8x32xf32>
    %213 = arith.addf %211, %212 : vector<8x32xf32>
    %c5 = arith.constant 5 : index
    %c0_47 = arith.constant 0 : index
    %c0_48 = arith.constant 0 : index
    %214 = vector.load %arg10[%c5, %c0_47, %c0_48] : memref<8x8x32xf32, #tpu.memory_space<vmem>>, vector<1x8x32xf32>
    %215 = vector.shape_cast %214 : vector<1x8x32xf32> to vector<8x32xf32>
    %216 = vector.shape_cast %213 : vector<8x32xf32> to vector<1x8x32xf32>
    tpu.vector_store %arg10[%c5, %c0_47, %c0_48], %216 {strides = array<i32>} : memref<8x8x32xf32, #tpu.memory_space<vmem>>, vector<1x8x32xf32>,
    %217 = vector.extract_strided_slice %9 {offsets = [0, 6, 0], sizes = [8, 1, 96], strides = [1, 1, 1]} : vector<8x8x96xf32> to vector<8x1x96xf32>
    %218 = vector.shape_cast %217 : vector<8x1x96xf32> to vector<8x96xf32>
    %cst_49 = arith.constant dense<0.000000e+00> : vector<8x96xf32>
    %219 = tpu.matmul %213, %10, %cst_49 {dimension_numbers = #tpu.dot_dimension_numbers<[1], [0], [0], [1], [0, 0, 1, 1], [], []>} : vector<8x32xf32>, vector<32x96xf32>, vector<8x96xf32> -> vector<8x96xf32>
    %220 = vector.broadcast %11 : vector<1x96xf32> to vector<8x96xf32>
    %221 = arith.addf %219, %220 : vector<8x96xf32>
    %222 = vector.extract_strided_slice %218 {offsets = [0, 0], sizes = [8, 32], strides = [1, 1]} : vector<8x96xf32> to vector<8x32xf32>
    %223 = vector.extract_strided_slice %221 {offsets = [0, 0], sizes = [8, 32], strides = [1, 1]} : vector<8x96xf32> to vector<8x32xf32>
    %224 = arith.addf %222, %223 : vector<8x32xf32>
    %225 = arith.negf %224 : vector<8x32xf32>
    %226 = math.exp %225 : vector<8x32xf32>
    %cst_50 = arith.constant 1.000000e+00 : f32
    %227 = vector.broadcast %cst_50 : f32 to vector<8x32xf32>
    %228 = arith.addf %227, %226 : vector<8x32xf32>
    %229 = arith.divf %227, %228 : vector<8x32xf32>
    %230 = vector.extract_strided_slice %218 {offsets = [0, 32], sizes = [8, 32], strides = [1, 1]} : vector<8x96xf32> to vector<8x32xf32>
    %231 = vector.extract_strided_slice %221 {offsets = [0, 32], sizes = [8, 32], strides = [1, 1]} : vector<8x96xf32> to vector<8x32xf32>
    %232 = arith.addf %230, %231 : vector<8x32xf32>
    %233 = arith.negf %232 : vector<8x32xf32>
    %234 = math.exp %233 : vector<8x32xf32>
    %cst_51 = arith.constant 1.000000e+00 : f32
    %235 = vector.broadcast %cst_51 : f32 to vector<8x32xf32>
    %236 = arith.addf %235, %234 : vector<8x32xf32>
    %237 = arith.divf %235, %236 : vector<8x32xf32>
    %238 = vector.extract_strided_slice %218 {offsets = [0, 64], sizes = [8, 32], strides = [1, 1]} : vector<8x96xf32> to vector<8x32xf32>
    %239 = vector.extract_strided_slice %221 {offsets = [0, 64], sizes = [8, 32], strides = [1, 1]} : vector<8x96xf32> to vector<8x32xf32>
    %240 = arith.mulf %229, %239 : vector<8x32xf32>
    %241 = arith.addf %238, %240 : vector<8x32xf32>
    %242 = math.tanh %241 : vector<8x32xf32>
    %cst_52 = arith.constant 1.000000e+00 : f32
    %243 = vector.broadcast %cst_52 : f32 to vector<8x32xf32>
    %244 = arith.subf %243, %237 : vector<8x32xf32>
    %245 = arith.mulf %244, %242 : vector<8x32xf32>
    %246 = arith.mulf %237, %213 : vector<8x32xf32>
    %247 = arith.addf %245, %246 : vector<8x32xf32>
    %c6 = arith.constant 6 : index
    %c0_53 = arith.constant 0 : index
    %c0_54 = arith.constant 0 : index
    %248 = vector.load %arg10[%c6, %c0_53, %c0_54] : memref<8x8x32xf32, #tpu.memory_space<vmem>>, vector<1x8x32xf32>
    %249 = vector.shape_cast %248 : vector<1x8x32xf32> to vector<8x32xf32>
    %250 = vector.shape_cast %247 : vector<8x32xf32> to vector<1x8x32xf32>
    tpu.vector_store %arg10[%c6, %c0_53, %c0_54], %250 {strides = array<i32>} : memref<8x8x32xf32, #tpu.memory_space<vmem>>, vector<1x8x32xf32>,
    %251 = vector.extract_strided_slice %9 {offsets = [0, 7, 0], sizes = [8, 1, 96], strides = [1, 1, 1]} : vector<8x8x96xf32> to vector<8x1x96xf32>
    %252 = vector.shape_cast %251 : vector<8x1x96xf32> to vector<8x96xf32>
    %cst_55 = arith.constant dense<0.000000e+00> : vector<8x96xf32>
    %253 = tpu.matmul %247, %10, %cst_55 {dimension_numbers = #tpu.dot_dimension_numbers<[1], [0], [0], [1], [0, 0, 1, 1], [], []>} : vector<8x32xf32>, vector<32x96xf32>, vector<8x96xf32> -> vector<8x96xf32>
    %254 = vector.broadcast %11 : vector<1x96xf32> to vector<8x96xf32>
    %255 = arith.addf %253, %254 : vector<8x96xf32>
    %256 = vector.extract_strided_slice %252 {offsets = [0, 0], sizes = [8, 32], strides = [1, 1]} : vector<8x96xf32> to vector<8x32xf32>
    %257 = vector.extract_strided_slice %255 {offsets = [0, 0], sizes = [8, 32], strides = [1, 1]} : vector<8x96xf32> to vector<8x32xf32>
    %258 = arith.addf %256, %257 : vector<8x32xf32>
    %259 = arith.negf %258 : vector<8x32xf32>
    %260 = math.exp %259 : vector<8x32xf32>
    %cst_56 = arith.constant 1.000000e+00 : f32
    %261 = vector.broadcast %cst_56 : f32 to vector<8x32xf32>
    %262 = arith.addf %261, %260 : vector<8x32xf32>
    %263 = arith.divf %261, %262 : vector<8x32xf32>
    %264 = vector.extract_strided_slice %252 {offsets = [0, 32], sizes = [8, 32], strides = [1, 1]} : vector<8x96xf32> to vector<8x32xf32>
    %265 = vector.extract_strided_slice %255 {offsets = [0, 32], sizes = [8, 32], strides = [1, 1]} : vector<8x96xf32> to vector<8x32xf32>
    %266 = arith.addf %264, %265 : vector<8x32xf32>
    %267 = arith.negf %266 : vector<8x32xf32>
    %268 = math.exp %267 : vector<8x32xf32>
    %cst_57 = arith.constant 1.000000e+00 : f32
    %269 = vector.broadcast %cst_57 : f32 to vector<8x32xf32>
    %270 = arith.addf %269, %268 : vector<8x32xf32>
    %271 = arith.divf %269, %270 : vector<8x32xf32>
    %272 = vector.extract_strided_slice %252 {offsets = [0, 64], sizes = [8, 32], strides = [1, 1]} : vector<8x96xf32> to vector<8x32xf32>
    %273 = vector.extract_strided_slice %255 {offsets = [0, 64], sizes = [8, 32], strides = [1, 1]} : vector<8x96xf32> to vector<8x32xf32>
    %274 = arith.mulf %263, %273 : vector<8x32xf32>
    %275 = arith.addf %272, %274 : vector<8x32xf32>
    %276 = math.tanh %275 : vector<8x32xf32>
    %cst_58 = arith.constant 1.000000e+00 : f32
    %277 = vector.broadcast %cst_58 : f32 to vector<8x32xf32>
    %278 = arith.subf %277, %271 : vector<8x32xf32>
    %279 = arith.mulf %278, %276 : vector<8x32xf32>
    %280 = arith.mulf %271, %247 : vector<8x32xf32>
    %281 = arith.addf %279, %280 : vector<8x32xf32>
    %c7 = arith.constant 7 : index
    %c0_59 = arith.constant 0 : index
    %c0_60 = arith.constant 0 : index
    %282 = vector.load %arg10[%c7, %c0_59, %c0_60] : memref<8x8x32xf32, #tpu.memory_space<vmem>>, vector<1x8x32xf32>
    %283 = vector.shape_cast %282 : vector<1x8x32xf32> to vector<8x32xf32>
    %284 = vector.shape_cast %281 : vector<8x32xf32> to vector<1x8x32xf32>
    tpu.vector_store %arg10[%c7, %c0_59, %c0_60], %284 {strides = array<i32>} : memref<8x8x32xf32, #tpu.memory_space<vmem>>, vector<1x8x32xf32>,
    %c0_61 = arith.constant 0 : index
    %c0_62 = arith.constant 0 : index
    %c0_63 = arith.constant 0 : index
    %285 = vector.load %arg10[%c0_61, %c0_62, %c0_63] : memref<8x8x32xf32, #tpu.memory_space<vmem>>, vector<8x8x32xf32>
    %286 = vector.shape_cast %285 : vector<8x8x32xf32> to vector<64x32xf32>
    %c0_64 = arith.constant 0 : index
    %c0_65 = arith.constant 0 : index
    %287 = vector.load %arg5[%c0_64, %c0_65] : memref<32x32xf32, #tpu.memory_space<vmem>>, vector<32x32xf32>
    %cst_66 = arith.constant dense<0.000000e+00> : vector<64x32xf32>
    %288 = tpu.matmul %286, %287, %cst_66 {dimension_numbers = #tpu.dot_dimension_numbers<[1], [0], [0], [1], [0, 0, 1, 1], [], []>} : vector<64x32xf32>, vector<32x32xf32>, vector<64x32xf32> -> vector<64x32xf32>
    %c0_67 = arith.constant 0 : index
    %c0_68 = arith.constant 0 : index
    %289 = vector.load %arg6[%c0_67, %c0_68] : memref<1x32xf32, #tpu.memory_space<vmem>>, vector<1x32xf32>
    %290 = vector.broadcast %289 : vector<1x32xf32> to vector<64x32xf32>
    %291 = arith.addf %288, %290 : vector<64x32xf32>
    %cst_69 = arith.constant 0.000000e+00 : f32
    %292 = vector.broadcast %cst_69 : f32 to vector<64x32xf32>
    %293 = arith.maximumf %291, %292 : vector<64x32xf32>
    %c0_70 = arith.constant 0 : index
    %c0_71 = arith.constant 0 : index
    %294 = vector.load %arg7[%c0_70, %c0_71] : memref<32x5xf32, #tpu.memory_space<vmem>>, vector<32x5xf32>
    %cst_72 = arith.constant dense<0.000000e+00> : vector<64x5xf32>
    %295 = tpu.matmul %293, %294, %cst_72 {dimension_numbers = #tpu.dot_dimension_numbers<[1], [0], [0], [1], [0, 0, 1, 1], [], []>} : vector<64x32xf32>, vector<32x5xf32>, vector<64x5xf32> -> vector<64x5xf32>
    %c0_73 = arith.constant 0 : index
    %c0_74 = arith.constant 0 : index
    %296 = vector.load %arg8[%c0_73, %c0_74] : memref<1x5xf32, #tpu.memory_space<vmem>>, vector<1x5xf32>
    %297 = vector.broadcast %296 : vector<1x5xf32> to vector<64x5xf32>
    %298 = arith.addf %295, %297 : vector<64x5xf32>
    %cst_75 = arith.constant dense<0xFF800000> : vector<64xf32>
    %299 = vector.multi_reduction <maximumf>, %298, %cst_75 [1] : vector<64x5xf32> to vector<64xf32>
    %300 = vector.shape_cast %299 : vector<64xf32> to vector<64x1xf32>
    %301 = vector.broadcast %300 : vector<64x1xf32> to vector<64x5xf32>
    %302 = arith.subf %298, %301 : vector<64x5xf32>
    %303 = math.exp %302 : vector<64x5xf32>
    %cst_76 = arith.constant dense<0.000000e+00> : vector<64xf32>
    %304 = vector.multi_reduction <add>, %303, %cst_76 [1] : vector<64x5xf32> to vector<64xf32>
    %305 = vector.shape_cast %304 : vector<64xf32> to vector<64x1xf32>
    %306 = math.log %305 : vector<64x1xf32>
    %307 = arith.addf %306, %300 : vector<64x1xf32>
    %308 = vector.broadcast %307 : vector<64x1xf32> to vector<64x5xf32>
    %309 = arith.subf %298, %308 : vector<64x5xf32>
    %310 = vector.shape_cast %309 : vector<64x5xf32> to vector<8x8x5xf32>
    %311 = vector.extract_strided_slice %310 {offsets = [0, 0, 0], sizes = [8, 1, 5], strides = [1, 1, 1]} : vector<8x8x5xf32> to vector<8x1x5xf32>
    %312 = vector.shape_cast %311 : vector<8x1x5xf32> to vector<8x5xf32>
    %c0_77 = arith.constant 0 : index
    %c0_78 = arith.constant 0 : index
    %c0_79 = arith.constant 0 : index
    %313 = vector.load %arg9[%c0_77, %c0_78, %c0_79] : memref<2x8x5xf32, #tpu.memory_space<vmem>>, vector<1x8x5xf32>
    %314 = vector.shape_cast %313 : vector<1x8x5xf32> to vector<8x5xf32>
    %315 = vector.shape_cast %312 : vector<8x5xf32> to vector<1x8x5xf32>
    tpu.vector_store %arg9[%c0_77, %c0_78, %c0_79], %315 {strides = array<i32>} : memref<2x8x5xf32, #tpu.memory_space<vmem>>, vector<1x8x5xf32>,
    %316 = vector.extract_strided_slice %310 {offsets = [0, 1, 0], sizes = [8, 1, 5], strides = [1, 1, 1]} : vector<8x8x5xf32> to vector<8x1x5xf32>
    %317 = vector.shape_cast %316 : vector<8x1x5xf32> to vector<8x5xf32>
    %c1_80 = arith.constant 1 : index
    %c0_81 = arith.constant 0 : index
    %c0_82 = arith.constant 0 : index
    %318 = vector.load %arg9[%c1_80, %c0_81, %c0_82] : memref<2x8x5xf32, #tpu.memory_space<vmem>>, vector<1x8x5xf32>
    %319 = vector.shape_cast %318 : vector<1x8x5xf32> to vector<8x5xf32>
    %320 = vector.shape_cast %317 : vector<8x5xf32> to vector<1x8x5xf32>
    tpu.vector_store %arg9[%c1_80, %c0_81, %c0_82], %320 {strides = array<i32>} : memref<2x8x5xf32, #tpu.memory_space<vmem>>, vector<1x8x5xf32>,
    return
  }
}

</mosaic_0001>

<llo_original>
// kernel: lv_behavior_forward.1
$region0: #{lv_behavior_forward.1}
  #allocation0 [shape = 'u32[]', space=smem, size = 0x4, offset = 0x4, fixed_abs, tag = 'smem constant byte address 0x4 - core index']
  #allocation1 [shape = 'u32[144,128]{1,0:T(1,128)}', space=vmem, size = 0x12000, scoped, tag = 'internal scratch']
  #allocation2 [shape = 'f32[8,8,32]{2,1,0:T(8,128)}', space=vmem, size = 0x8000, scoped, tag = 'scratch operand']
  %s0 = inlined_call_operand.vmem [shape: f32[2,8,4], index: 0, kind: input, shape index: {}]
  %s1 = inlined_call_operand.hbm [shape: f32[4,96], index: 1, kind: input, shape index: {}]
  %s2 = inlined_call_operand.vmem [shape: f32[32,96], index: 2, kind: input, shape index: {}]
  %s3 = inlined_call_operand.vmem [shape: f32[1,96], index: 3, kind: input, shape index: {}]
  %s4 = inlined_call_operand.vmem [shape: f32[1,96], index: 4, kind: input, shape index: {}]
  %s5 = inlined_call_operand.vmem [shape: f32[32,32], index: 5, kind: input, shape index: {}]
  %s6 = inlined_call_operand.vmem [shape: f32[1,32], index: 6, kind: input, shape index: {}]
  %s7 = inlined_call_operand.vmem [shape: f32[32,5], index: 7, kind: input, shape index: {}]
  %s8 = inlined_call_operand.vmem [shape: f32[1,5], index: 8, kind: input, shape index: {}]
  %s9 = inlined_call_operand.vmem [shape: f32[2,8,5], index: 9, kind: output, shape index: {}]
  %s10 = sld [smem:[#allocation0]]
  $region50: #{lv_behavior_forward.1} parent=0
    _
  %s12 = ssub.s32 1, %s10
  %s13 = scalar_select 0, %s12, %s10
  $region1: #{lv_behavior_forward.1} parent=0
    #allocation3 [shape = 'u8[2048]{0}', space=vmem, size = 0x800, scoped, tag = 'input window, operand 1, single buffered']
    #allocation4 [shape = 's32[1]{0}', space=sflag, size = 0x4, scoped, tag = 'scoped memory for lv_behavior_forward.1']
    %14 = vsyncpa [#allocation4], 0
    // Predicated region
    $region2: #{lv_behavior_forward.1} parent=1 // pred_check
      _
    $region3: #{lv_behavior_forward.1} parent=1 // pred_check_branch
      %16 = sbr.rel (0) target = $region5
    $region4: #{lv_behavior_forward.1} parent=1 // pred_region
      _
    $region5: #{lv_behavior_forward.1} parent=1 // pred_fallthru
      _
    // Predicated region
    $region6: #{lv_behavior_forward.1} parent=1 // pred_check
      _
    $region7: #{lv_behavior_forward.1} parent=1 // pred_check_branch
      %18 = sbr.rel (0) target = $region9
    $region8: #{lv_behavior_forward.1} parent=1 // pred_region
      %s20 = ssub.s32 64, 64
      %21 = vsyncadd [#allocation4], %s20
      %s23 = sshll.u32 [#allocation3], 4
      %s24 = int_to_ptr.vmem [resolvable:$true] %s23
      %26 = dma.hbm_to_vmem [thread:$0]  %s1, 64, %s24, [#allocation4]
    $region9: #{lv_behavior_forward.1} parent=1 // pred_fallthru
      _
    // Predicated region
    $region10: #{lv_behavior_forward.1} parent=1 // pred_check
      _
    $region11: #{lv_behavior_forward.1} parent=1 // pred_check_branch
      %28 = sbr.rel (0) target = $region13
    $region12: #{lv_behavior_forward.1} parent=1 // pred_region
      _
    $region13: #{lv_behavior_forward.1} parent=1 // pred_fallthru
      _
    // Predicated region
    $region14: #{lv_behavior_forward.1} parent=1 // pred_check
      _
    $region15: #{lv_behavior_forward.1} parent=1 // pred_check_branch
      %30 = sbr.rel (0) target = $region17
    $region16: #{lv_behavior_forward.1} parent=1 // pred_region
      _
    $region17: #{lv_behavior_forward.1} parent=1 // pred_fallthru
      _
    // Predicated region
    $region18: #{lv_behavior_forward.1} parent=1 // pred_check
      _
    $region19: #{lv_behavior_forward.1} parent=1 // pred_check_branch
      %32 = sbr.rel (0) target = $region21
    $region20: #{lv_behavior_forward.1} parent=1 // pred_region
      _
    $region21: #{lv_behavior_forward.1} parent=1 // pred_fallthru
      _
    // Predicated region
    $region22: #{lv_behavior_forward.1} parent=1 // pred_check
      _
    $region23: #{lv_behavior_forward.1} parent=1 // pred_check_branch
      %34 = sbr.rel (0) target = $region25
    $region24: #{lv_behavior_forward.1} parent=1 // pred_region
      _
    $region25: #{lv_behavior_forward.1} parent=1 // pred_fallthru
      _
    // Predicated region
    $region26: #{lv_behavior_forward.1} parent=1 // pred_check
      _
    $region27: #{lv_behavior_forward.1} parent=1 // pred_check_branch
      %36 = sbr.rel (0) target = $region29
    $region28: #{lv_behavior_forward.1} parent=1 // pred_region
      _
    $region29: #{lv_behavior_forward.1} parent=1 // pred_fallthru
      _
    // Predicated region
    $region30: #{lv_behavior_forward.1} parent=1 // pred_check
      _
    $region31: #{lv_behavior_forward.1} parent=1 // pred_check_branch
      %38 = sbr.rel (0) target = $region33
    $region32: #{lv_behavior_forward.1} parent=1 // pred_region
      _
    $region33: #{lv_behavior_forward.1} parent=1 // pred_fallthru
      _
    // Predicated region
    $region34: #{lv_behavior_forward.1} parent=1 // pred_check
      _
    $region35: #{lv_behavior_forward.1} parent=1 // pred_check_branch
      %40 = sbr.rel (0) target = $region37
    $region36: #{lv_behavior_forward.1} parent=1 // pred_region
      _
    $region37: #{lv_behavior_forward.1} parent=1 // pred_fallthru
      _
    // Predicated region
    $region38: #{lv_behavior_forward.1} parent=1 // pred_check
      _
    $region39: #{lv_behavior_forward.1} parent=1 // pred_check_branch
      %42 = sbr.rel (0) target = $region41
    $region40: #{lv_behavior_forward.1} parent=1 // pred_region
      %43 = dma.done [#allocation4], 64
    $region41: #{lv_behavior_forward.1} parent=1 // pred_fallthru
      _
    %v44 = vld [vmem:[%s0] sm:$0xff]
    %v45 = vld [vmem:[%s0 + $0x8] sm:$0xff]
    %v46 = vld [vmem:[#allocation3] sm:$0xf]
    %v47 = vld [vmem:[%s3] sm:$0x1]
    %v49 = vlaneseq
    %v50 = vshrl.u32 %v49, 7
    %v51 = vsub.s32 0, %v50
    %v52 = vrot.slane %v47, %v51
    %vm54 = vcmask 31744
    %v56 = vsel %vm54, %v44, 0
    %v59 = vsel %vm54, %v45, 0
    %v62 = vsel %vm54, 0.0, 0
    %vm64 = vcmask 1043456
    %v66 = vsel %vm64, %v46, 0
    %68 = vmatprep.subr.mxu0 0.0
    %69 = vmatpush1.msra.mxu0 %v66
    %70 = vmatprep.subr.mxu0 0.0
    %71 = vmatpush1.msra.mxu0 0.0
    %72 = vmatprep.subr.mxu0 0.0
    %73 = vmatpush1.msra.mxu0 0.0
    %74 = vmatprep.subr.mxu0 0.0
    %75 = vmatpush1.msra.mxu0 0.0
    %76 = vmatprep.subr.mxu0 0.0
    %77 = vmatpush1.msra.mxu0 0.0
    %78 = vmatprep.subr.mxu0 0.0
    %79 = vmatpush1.msra.mxu0 0.0
    %80 = vmatprep.subr.mxu0 0.0
    %81 = vmatpush1.msra.mxu0 0.0
    %82 = vmatprep.subr.mxu0 0.0
    %83 = vmatpush1.msra.mxu0 0.0
    %84 = vmatprep.subr.mxu0 0.0
    %85 = vmatpush1.msra.mxu0 0.0
    %86 = vmatprep.subr.mxu0 0.0
    %87 = vmatpush1.msra.mxu0 0.0
    %88 = vmatprep.subr.mxu0 0.0
    %89 = vmatpush1.msra.mxu0 0.0
    %90 = vmatprep.subr.mxu0 0.0
    %91 = vmatpush1.msra.mxu0 0.0
    %92 = vmatprep.subr.mxu0 0.0
    %93 = vmatpush1.msra.mxu0 0.0
    %94 = vmatprep.subr.mxu0 0.0
    %95 = vmatpush1.msra.mxu0 0.0
    %96 = vmatprep.subr.mxu0 0.0
    %97 = vmatpush1.msra.mxu0 0.0
    %98 = vmatprep.subr.mxu0 0.0
    %99 = vmatpush1.msra.mxu0 0.0
    %100 = vmatprep.subr.mxu0 0.0
    %101 = vmatpush1.msra.mxu0 0.0
    %102 = vmatprep.subr.mxu0 0.0
    %103 = vmatpush1.msra.mxu0 0.0
    %104 = vmatprep.subr.mxu0 0.0
    %105 = vmatpush1.msra.mxu0 0.0
    %106 = vmatprep.subr.mxu0 0.0
    %107 = vmatpush1.msra.mxu0 0.0
    %108 = vmatprep.subr.mxu0 0.0
    %109 = vmatpush1.msra.mxu0 0.0
    %110 = vmatprep.subr.mxu0 0.0
    %111 = vmatpush1.msra.mxu0 0.0
    %112 = vmatprep.subr.mxu0 0.0
    %113 = vmatpush1.msra.mxu0 0.0
    %114 = vmatprep.subr.mxu0 0.0
    %115 = vmatpush1.msra.mxu0 0.0
    %116 = vmatprep.subr.mxu0 0.0
    %117 = vmatpush1.msra.mxu0 0.0
    %118 = vmatprep.subr.mxu0 0.0
    %119 = vmatpush1.msra.mxu0 0.0
    %120 = vmatprep.subr.mxu0 0.0
    %121 = vmatpush1.msra.mxu0 0.0
    %122 = vmatprep.subr.mxu0 0.0
    %123 = vmatpush1.msra.mxu0 0.0
    %124 = vmatprep.subr.mxu0 0.0
    %125 = vmatpush1.msra.mxu0 0.0
    %126 = vmatprep.subr.mxu0 0.0
    %127 = vmatpush1.msra.mxu0 0.0
    %128 = vmatprep.subr.mxu0 0.0
    %129 = vmatpush1.msra.mxu0 0.0
    %130 = vmatprep.subr.mxu0 0.0
    %131 = vmatpush1.msra.mxu0 0.0
    %132 = vmatprep.mubr.f32.mxu0 0.0
    %133 = vmatmul.mubr.f32.gmra.mrb[0].mxu0 %v56
    %v134 = vpop.f32.mrb[0].mxu0
    %v135 = vadd.f32 %v52, %v134
    %v136 = vpop.f32.mrb[0].mxu0
    %137 = vmatprep.mubr.f32.mxu0 0.0
    %138 = vmatmul.mubr.f32.gmra.mrb[0].mxu0 %v59
    %v139 = vpop.f32.mrb[0].mxu0
    %v140 = vadd.f32 %v52, %v139
    %v141 = vpop.f32.mrb[0].mxu0
    %142 = vmatprep.mubr.f32.mxu0 0.0
    %143 = vmatmul.mubr.f32.gmra.mrb[0].mxu0 %v62
    %v144 = vpop.f32.mrb[0].mxu0
    %v145 = vadd.f32 %v52, %v144
    %v146 = vpop.f32.mrb[0].mxu0
    %147 = vmatprep.mubr.f32.mxu0 0.0
    %148 = vmatmul.mubr.f32.gmra.mrb[0].mxu0 %v62
    %v149 = vpop.f32.mrb[0].mxu0
    %v150 = vadd.f32 %v52, %v149
    %v151 = vpop.f32.mrb[0].mxu0
    %152 = vmatprep.mubr.f32.mxu0 0.0
    %153 = vmatmul.mubr.f32.gmra.mrb[0].mxu0 %v62
    %v154 = vpop.f32.mrb[0].mxu0
    %v155 = vadd.f32 %v52, %v154
    %v156 = vpop.f32.mrb[0].mxu0
    %157 = vmatprep.mubr.f32.mxu0 0.0
    %158 = vmatmul.mubr.f32.gmra.mrb[0].mxu0 %v62
    %v159 = vpop.f32.mrb[0].mxu0
    %v160 = vadd.f32 %v52, %v159
    %v161 = vpop.f32.mrb[0].mxu0
    %162 = vmatprep.mubr.f32.mxu0 0.0
    %163 = vmatmul.mubr.f32.gmra.mrb[0].mxu0 %v62
    %v164 = vpop.f32.mrb[0].mxu0
    %v165 = vadd.f32 %v52, %v164
    %v166 = vpop.f32.mrb[0].mxu0
    %167 = vmatprep.mubr.f32.mxu0 0.0
    %168 = vmatmul.mubr.f32.gmra.mrb[0].mxu0 %v62
    %v169 = vpop.f32.mrb[0].mxu0
    %v170 = vadd.f32 %v52, %v169
    %v171 = vpop.f32.mrb[0].mxu0
    %172 = vdwg.mxu0
    %v173 = vld [vmem:[%s2] sm:$0xff]
    %v174 = vld [vmem:[%s2 + $0x8] sm:$0xff]
    %v175 = vld [vmem:[%s2 + $0x10] sm:$0xff]
    %v176 = vld [vmem:[%s2 + $0x18] sm:$0xff]
    %v177 = vld [vmem:[%s4] sm:$0x1]
    %v179 = vlaneseq
    %v180 = vshrl.u32 %v179, 7
    %v181 = vsub.s32 0, %v180
    %v182 = vrot.slane %v177, %v181
    %vm184 = vcmask 261120
    %v185 = vsel %vm184, 0.0, 0
    %187 = vmatprep.subr.mxu0 0.0
    %188 = vmatpush1.msra.mxu0 %v173
    %189 = vmatprep.subr.mxu0 0.0
    %190 = vmatpush1.msra.mxu0 %v174
    %191 = vmatprep.subr.mxu0 0.0
    %192 = vmatpush1.msra.mxu0 %v175
    %193 = vmatprep.subr.mxu0 0.0
    %194 = vmatpush1.msra.mxu0 %v176
    %195 = vmatprep.subr.mxu0 0.0
    %196 = vmatpush1.msra.mxu0 0.0
    %197 = vmatprep.subr.mxu0 0.0
    %198 = vmatpush1.msra.mxu0 0.0
    %199 = vmatprep.subr.mxu0 0.0
    %200 = vmatpush1.msra.mxu0 0.0
    %201 = vmatprep.subr.mxu0 0.0
    %202 = vmatpush1.msra.mxu0 0.0
    %203 = vmatprep.subr.mxu0 0.0
    %204 = vmatpush1.msra.mxu0 0.0
    %205 = vmatprep.subr.mxu0 0.0
    %206 = vmatpush1.msra.mxu0 0.0
    %207 = vmatprep.subr.mxu0 0.0
    %208 = vmatpush1.msra.mxu0 0.0
    %209 = vmatprep.subr.mxu0 0.0
    %210 = vmatpush1.msra.mxu0 0.0
    %211 = vmatprep.subr.mxu0 0.0
    %212 = vmatpush1.msra.mxu0 0.0
    %213 = vmatprep.subr.mxu0 0.0
    %214 = vmatpush1.msra.mxu0 0.0
    %215 = vmatprep.subr.mxu0 0.0
    %216 = vmatpush1.msra.mxu0 0.0
    %217 = vmatprep.subr.mxu0 0.0
    %218 = vmatpush1.msra.mxu0 0.0
    %219 = vmatprep.subr.mxu0 0.0
    %220 = vmatpush1.msra.mxu0 0.0
    %221 = vmatprep.subr.mxu0 0.0
    %222 = vmatpush1.msra.mxu0 0.0
    %223 = vmatprep.subr.mxu0 0.0
    %224 = vmatpush1.msra.mxu0 0.0
    %225 = vmatprep.subr.mxu0 0.0
    %226 = vmatpush1.msra.mxu0 0.0
    %227 = vmatprep.subr.mxu0 0.0
    %228 = vmatpush1.msra.mxu0 0.0
    %229 = vmatprep.subr.mxu0 0.0
    %230 = vmatpush1.msra.mxu0 0.0
    %231 = vmatprep.subr.mxu0 0.0
    %232 = vmatpush1.msra.mxu0 0.0
    %233 = vmatprep.subr.mxu0 0.0
    %234 = vmatpush1.msra.mxu0 0.0
    %235 = vmatprep.subr.mxu0 0.0
    %236 = vmatpush1.msra.mxu0 0.0
    %237 = vmatprep.subr.mxu0 0.0
    %238 = vmatpush1.msra.mxu0 0.0
    %239 = vmatprep.subr.mxu0 0.0
    %240 = vmatpush1.msra.mxu0 0.0
    %241 = vmatprep.subr.mxu0 0.0
    %242 = vmatpush1.msra.mxu0 0.0
    %243 = vmatprep.subr.mxu0 0.0
    %244 = vmatpush1.msra.mxu0 0.0
    %245 = vmatprep.subr.mxu0 0.0
    %246 = vmatpush1.msra.mxu0 0.0
    %247 = vmatprep.subr.mxu0 0.0
    %248 = vmatpush1.msra.mxu0 0.0
    %249 = vmatprep.subr.mxu0 0.0
    %250 = vmatpush1.msra.mxu0 0.0
    %251 = vmatprep.mubr.f32.mxu0 0.0
    %252 = vmatmul.mubr.f32.gmra.mrb[0].mxu0 %v185
    %v253 = vpop.f32.mrb[0].mxu0
    %v254 = vadd.f32 %v182, %v253
    %v255 = vpop.f32.mrb[0].mxu0
    %256 = vdwg.mxu0
    %v258 = vrot.slane %v254, 1
    %v259 = vrot.slane %v254, 2
    %v260 = vrot.slane %v254, 3
    %v261 = vrot.slane %v254, 4
    %v262 = vrot.slane %v254, 5
    %v263 = vrot.slane %v254, 6
    %v264 = vrot.slane %v254, 7
    %v273 = vadd.f32 %v135, %v254
    %v274 = vadd.f32 %v140, %v258
    %v275 = vadd.f32 %v145, %v259
    %v276 = vadd.f32 %v150, %v260
    %v277 = vadd.f32 %v155, %v261
    %v278 = vadd.f32 %v160, %v262
    %v279 = vadd.f32 %v165, %v263
    %v280 = vadd.f32 %v170, %v264
    %v281 = vxor.u32 %v273, 2147483648
    %v282 = vxor.u32 %v274, 2147483648
    %v283 = vxor.u32 %v275, 2147483648
    %v284 = vxor.u32 %v276, 2147483648
    %v285 = vxor.u32 %v277, 2147483648
    %v286 = vxor.u32 %v278, 2147483648
    %v287 = vxor.u32 %v279, 2147483648
    %v288 = vxor.u32 %v280, 2147483648
    %v289 = vmul.f32 %v281, 1.442695
    %v290 = vpow.pop %v289
    %v291 = vmul.f32 %v282, 1.442695
    %v292 = vpow.pop %v291
    %v293 = vmul.f32 %v283, 1.442695
    %v294 = vpow.pop %v293
    %v295 = vmul.f32 %v284, 1.442695
    %v296 = vpow.pop %v295
    %v297 = vmul.f32 %v285, 1.442695
    %v298 = vpow.pop %v297
    %v299 = vmul.f32 %v286, 1.442695
    %v300 = vpow.pop %v299
    %v301 = vmul.f32 %v287, 1.442695
    %v302 = vpow.pop %v301
    %v303 = vmul.f32 %v288, 1.442695
    %v304 = vpow.pop %v303
    %v305 = vadd.f32 %v290, 1.0
    %v306 = vadd.f32 %v292, 1.0
    %v307 = vadd.f32 %v294, 1.0
    %v308 = vadd.f32 %v296, 1.0
    %v309 = vadd.f32 %v298, 1.0
    %v310 = vadd.f32 %v300, 1.0
    %v311 = vadd.f32 %v302, 1.0
    %v312 = vadd.f32 %v304, 1.0
    %v313 = vrcp.pop %v305
    %v314 = vmul.f32 1.0, %v313
    %v315 = vrcp.pop %v306
    %v316 = vmul.f32 1.0, %v315
    %v317 = vrcp.pop %v307
    %v318 = vmul.f32 1.0, %v317
    %v319 = vrcp.pop %v308
    %v320 = vmul.f32 1.0, %v319
    %v321 = vrcp.pop %v309
    %v322 = vmul.f32 1.0, %v321
    %v323 = vrcp.pop %v310
    %v324 = vmul.f32 1.0, %v323
    %v325 = vrcp.pop %v311
    %v326 = vmul.f32 1.0, %v325
    %v327 = vrcp.pop %v312
    %v328 = vmul.f32 1.0, %v327
    %329 = vrot.lane.b32.xlu0 %v254, 64
    %v330 = vpop.permute.xlu0 %329
    %331 = vrot.lane.b32.xlu0 %v258, 64
    %v332 = vpop.permute.xlu0 %331
    %333 = vrot.lane.b32.xlu0 %v259, 64
    %v334 = vpop.permute.xlu0 %333
    %335 = vrot.lane.b32.xlu0 %v260, 64
    %v336 = vpop.permute.xlu0 %335
    %337 = vrot.lane.b32.xlu0 %v261, 64
    %v338 = vpop.permute.xlu0 %337
    %339 = vrot.lane.b32.xlu0 %v262, 64
    %v340 = vpop.permute.xlu0 %339
    %341 = vrot.lane.b32.xlu0 %v263, 64
    %v342 = vpop.permute.xlu0 %341
    %343 = vrot.lane.b32.xlu0 %v264, 64
    %v344 = vpop.permute.xlu0 %343
    %v353 = vmul.f32 %v314, %v330
    %v354 = vmul.f32 %v316, %v332
    %v355 = vmul.f32 %v318, %v334
    %v356 = vmul.f32 %v320, %v336
    %v357 = vmul.f32 %v322, %v338
    %v358 = vmul.f32 %v324, %v340
    %v359 = vmul.f32 %v326, %v342
    %v360 = vmul.f32 %v328, %v344
    %369 = vrot.lane.b32.xlu0 %v353, 64
    %v370 = vpop.permute.xlu0 %369
    %371 = vrot.lane.b32.xlu0 %v354, 64
    %v372 = vpop.permute.xlu0 %371
    %373 = vrot.lane.b32.xlu0 %v355, 64
    %v374 = vpop.permute.xlu0 %373
    %375 = vrot.lane.b32.xlu0 %v356, 64
    %v376 = vpop.permute.xlu0 %375
    %377 = vrot.lane.b32.xlu0 %v357, 64
    %v378 = vpop.permute.xlu0 %377
    %379 = vrot.lane.b32.xlu0 %v358, 64
    %v380 = vpop.permute.xlu0 %379
    %381 = vrot.lane.b32.xlu0 %v359, 64
    %v382 = vpop.permute.xlu0 %381
    %383 = vrot.lane.b32.xlu0 %v360, 64
    %v384 = vpop.permute.xlu0 %383
    %v393 = vadd.f32 %v135, %v370
    %v394 = vadd.f32 %v140, %v372
    %v395 = vadd.f32 %v145, %v374
    %v396 = vadd.f32 %v150, %v376
    %v397 = vadd.f32 %v155, %v378
    %v398 = vadd.f32 %v160, %v380
    %v399 = vadd.f32 %v165, %v382
    %v400 = vadd.f32 %v170, %v384
    %v401 = vtanh.pop %v393
    %v402 = vtanh.pop %v394
    %v403 = vtanh.pop %v395
    %v404 = vtanh.pop %v396
    %v405 = vtanh.pop %v397
    %v406 = vtanh.pop %v398
    %v407 = vtanh.pop %v399
    %v408 = vtanh.pop %v400
    %v409 = vsub.f32 1.0, %v314
    %v410 = vsub.f32 1.0, %v316
    %v411 = vsub.f32 1.0, %v318
    %v412 = vsub.f32 1.0, %v320
    %v413 = vsub.f32 1.0, %v322
    %v414 = vsub.f32 1.0, %v324
    %v415 = vsub.f32 1.0, %v326
    %v416 = vsub.f32 1.0, %v328
    %425 = vrot.lane.b32.xlu0 %v401, 96
    %v426 = vpop.permute.xlu0 %425
    %427 = vrot.lane.b32.xlu0 %v402, 96
    %v428 = vpop.permute.xlu0 %427
    %429 = vrot.lane.b32.xlu0 %v403, 96
    %v430 = vpop.permute.xlu0 %429
    %431 = vrot.lane.b32.xlu0 %v404, 96
    %v432 = vpop.permute.xlu0 %431
    %433 = vrot.lane.b32.xlu0 %v405, 96
    %v434 = vpop.permute.xlu0 %433
    %435 = vrot.lane.b32.xlu0 %v406, 96
    %v436 = vpop.permute.xlu0 %435
    %437 = vrot.lane.b32.xlu0 %v407, 96
    %v438 = vpop.permute.xlu0 %437
    %439 = vrot.lane.b32.xlu0 %v408, 96
    %v440 = vpop.permute.xlu0 %439
    %v449 = vmul.f32 %v409, %v426
    %v450 = vmul.f32 %v410, %v428
    %v451 = vmul.f32 %v411, %v430
    %v452 = vmul.f32 %v412, %v432
    %v453 = vmul.f32 %v413, %v434
    %v454 = vmul.f32 %v414, %v436
    %v455 = vmul.f32 %v415, %v438
    %v456 = vmul.f32 %v416, %v440
    %v457 = vmul.f32 %v314, 0.0
    %v458 = vmul.f32 %v316, 0.0
    %v459 = vmul.f32 %v318, 0.0
    %v460 = vmul.f32 %v320, 0.0
    %v461 = vmul.f32 %v322, 0.0
    %v462 = vmul.f32 %v324, 0.0
    %v463 = vmul.f32 %v326, 0.0
    %v464 = vmul.f32 %v328, 0.0
    %v465 = vadd.f32 %v449, %v457
    %v466 = vadd.f32 %v450, %v458
    %v467 = vadd.f32 %v451, %v459
    %v468 = vadd.f32 %v452, %v460
    %v469 = vadd.f32 %v453, %v461
    %v470 = vadd.f32 %v454, %v462
    %v471 = vadd.f32 %v455, %v463
    %v472 = vadd.f32 %v456, %v464
    %v481 = vrot.slane %v466, 7
    %vm482 = vcmask 1041409
    %v483 = vsel %vm482, %v481, %v465
    %v484 = vrot.slane %v467, 6
    %vm485 = vcmask 1042434
    %v486 = vsel %vm485, %v484, %v483
    %v487 = vrot.slane %v468, 5
    %vm488 = vcmask 1043459
    %v489 = vsel %vm488, %v487, %v486
    %v490 = vrot.slane %v469, 4
    %vm491 = vcmask 1044484
    %v492 = vsel %vm491, %v490, %v489
    %v493 = vrot.slane %v470, 3
    %vm494 = vcmask 1045509
    %v495 = vsel %vm494, %v493, %v492
    %v496 = vrot.slane %v471, 2
    %vm497 = vcmask 1046534
    %v498 = vsel %vm497, %v496, %v495
    %v499 = vrot.slane %v472, 1
    %vm500 = vcmask 1047559
    %v501 = vsel %vm500, %v499, %v498
    %502 = vrot.lane.b32.xlu0 %v501, 96
    %v503 = vpop.permute.xlu0 %502
    %505 = vst.msk [vmem:[#allocation2] sm:$0xff] %vm184, %v503
    %v506 = vsel %vm184, %v503, 0
    %508 = vmatprep.subr.mxu0 0.0
    %509 = vmatpush1.msra.mxu0 %v173
    %510 = vmatprep.subr.mxu0 0.0
    %511 = vmatpush1.msra.mxu0 %v174
    %512 = vmatprep.subr.mxu0 0.0
    %513 = vmatpush1.msra.mxu0 %v175
    %514 = vmatprep.subr.mxu0 0.0
    %515 = vmatpush1.msra.mxu0 %v176
    %516 = vmatprep.subr.mxu0 0.0
    %517 = vmatpush1.msra.mxu0 0.0
    %518 = vmatprep.subr.mxu0 0.0
    %519 = vmatpush1.msra.mxu0 0.0
    %520 = vmatprep.subr.mxu0 0.0
    %521 = vmatpush1.msra.mxu0 0.0
    %522 = vmatprep.subr.mxu0 0.0
    %523 = vmatpush1.msra.mxu0 0.0
    %524 = vmatprep.subr.mxu0 0.0
    %525 = vmatpush1.msra.mxu0 0.0
    %526 = vmatprep.subr.mxu0 0.0
    %527 = vmatpush1.msra.mxu0 0.0
    %528 = vmatprep.subr.mxu0 0.0
    %529 = vmatpush1.msra.mxu0 0.0
    %530 = vmatprep.subr.mxu0 0.0
    %531 = vmatpush1.msra.mxu0 0.0
    %532 = vmatprep.subr.mxu0 0.0
    %533 = vmatpush1.msra.mxu0 0.0
    %534 = vmatprep.subr.mxu0 0.0
    %535 = vmatpush1.msra.mxu0 0.0
    %536 = vmatprep.subr.mxu0 0.0
    %537 = vmatpush1.msra.mxu0 0.0
    %538 = vmatprep.subr.mxu0 0.0
    %539 = vmatpush1.msra.mxu0 0.0
    %540 = vmatprep.subr.mxu0 0.0
    %541 = vmatpush1.msra.mxu0 0.0
    %542 = vmatprep.subr.mxu0 0.0
    %543 = vmatpush1.msra.mxu0 0.0
    %544 = vmatprep.subr.mxu0 0.0
    %545 = vmatpush1.msra.mxu0 0.0
    %546 = vmatprep.subr.mxu0 0.0
    %547 = vmatpush1.msra.mxu0 0.0
    %548 = vmatprep.subr.mxu0 0.0
    %549 = vmatpush1.msra.mxu0 0.0
    %550 = vmatprep.subr.mxu0 0.0
    %551 = vmatpush1.msra.mxu0 0.0
    %552 = vmatprep.subr.mxu0 0.0
    %553 = vmatpush1.msra.mxu0 0.0
    %554 = vmatprep.subr.mxu0 0.0
    %555 = vmatpush1.msra.mxu0 0.0
    %556 = vmatprep.subr.mxu0 0.0
    %557 = vmatpush1.msra.mxu0 0.0
    %558 = vmatprep.subr.mxu0 0.0
    %559 = vmatpush1.msra.mxu0 0.0
    %560 = vmatprep.subr.mxu0 0.0
    %561 = vmatpush1.msra.mxu0 0.0
    %562 = vmatprep.subr.mxu0 0.0
    %563 = vmatpush1.msra.mxu0 0.0
    %564 = vmatprep.subr.mxu0 0.0
    %565 = vmatpush1.msra.mxu0 0.0
    %566 = vmatprep.subr.mxu0 0.0
    %567 = vmatpush1.msra.mxu0 0.0
    %568 = vmatprep.subr.mxu0 0.0
    %569 = vmatpush1.msra.mxu0 0.0
    %570 = vmatprep.subr.mxu0 0.0
    %571 = vmatpush1.msra.mxu0 0.0
    %572 = vmatprep.mubr.f32.mxu0 0.0
    %573 = vmatmul.mubr.f32.gmra.mrb[0].mxu0 %v506
    %v574 = vpop.f32.mrb[0].mxu0
    %v575 = vadd.f32 %v182, %v574
    %v576 = vpop.f32.mrb[0].mxu0
    %577 = vdwg.mxu0
    %v579 = vrot.slane %v575, 7
    %v580 = vrot.slane %v575, 1
    %v581 = vrot.slane %v575, 2
    %v582 = vrot.slane %v575, 3
    %v583 = vrot.slane %v575, 4
    %v584 = vrot.slane %v575, 5
    %v585 = vrot.slane %v575, 6
    %v594 = vadd.f32 %v135, %v579
    %v595 = vadd.f32 %v140, %v575
    %v596 = vadd.f32 %v145, %v580
    %v597 = vadd.f32 %v150, %v581
    %v598 = vadd.f32 %v155, %v582
    %v599 = vadd.f32 %v160, %v583
    %v600 = vadd.f32 %v165, %v584
    %v601 = vadd.f32 %v170, %v585
    %v602 = vxor.u32 %v594, 2147483648
    %v603 = vxor.u32 %v595, 2147483648
    %v604 = vxor.u32 %v596, 2147483648
    %v605 = vxor.u32 %v597, 2147483648
    %v606 = vxor.u32 %v598, 2147483648
    %v607 = vxor.u32 %v599, 2147483648
    %v608 = vxor.u32 %v600, 2147483648
    %v609 = vxor.u32 %v601, 2147483648
    %v610 = vmul.f32 %v602, 1.442695
    %v611 = vpow.pop %v610
    %v612 = vmul.f32 %v603, 1.442695
    %v613 = vpow.pop %v612
    %v614 = vmul.f32 %v604, 1.442695
    %v615 = vpow.pop %v614
    %v616 = vmul.f32 %v605, 1.442695
    %v617 = vpow.pop %v616
    %v618 = vmul.f32 %v606, 1.442695
    %v619 = vpow.pop %v618
    %v620 = vmul.f32 %v607, 1.442695
    %v621 = vpow.pop %v620
    %v622 = vmul.f32 %v608, 1.442695
    %v623 = vpow.pop %v622
    %v624 = vmul.f32 %v609, 1.442695
    %v625 = vpow.pop %v624
    %v626 = vadd.f32 %v611, 1.0
    %v627 = vadd.f32 %v613, 1.0
    %v628 = vadd.f32 %v615, 1.0
    %v629 = vadd.f32 %v617, 1.0
    %v630 = vadd.f32 %v619, 1.0
    %v631 = vadd.f32 %v621, 1.0
    %v632 = vadd.f32 %v623, 1.0
    %v633 = vadd.f32 %v625, 1.0
    %v634 = vrcp.pop %v626
    %v635 = vmul.f32 1.0, %v634
    %v636 = vrcp.pop %v627
    %v637 = vmul.f32 1.0, %v636
    %v638 = vrcp.pop %v628
    %v639 = vmul.f32 1.0, %v638
    %v640 = vrcp.pop %v629
    %v641 = vmul.f32 1.0, %v640
    %v642 = vrcp.pop %v630
    %v643 = vmul.f32 1.0, %v642
    %v644 = vrcp.pop %v631
    %v645 = vmul.f32 1.0, %v644
    %v646 = vrcp.pop %v632
    %v647 = vmul.f32 1.0, %v646
    %v648 = vrcp.pop %v633
    %v649 = vmul.f32 1.0, %v648
    %650 = vrot.lane.b32.xlu0 %v579, 64
    %v651 = vpop.permute.xlu0 %650
    %652 = vrot.lane.b32.xlu0 %v575, 64
    %v653 = vpop.permute.xlu0 %652
    %654 = vrot.lane.b32.xlu0 %v580, 64
    %v655 = vpop.permute.xlu0 %654
    %656 = vrot.lane.b32.xlu0 %v581, 64
    %v657 = vpop.permute.xlu0 %656
    %658 = vrot.lane.b32.xlu0 %v582, 64
    %v659 = vpop.permute.xlu0 %658
    %660 = vrot.lane.b32.xlu0 %v583, 64
    %v661 = vpop.permute.xlu0 %660
    %662 = vrot.lane.b32.xlu0 %v584, 64
    %v663 = vpop.permute.xlu0 %662
    %664 = vrot.lane.b32.xlu0 %v585, 64
    %v665 = vpop.permute.xlu0 %664
    %v674 = vmul.f32 %v635, %v651
    %v675 = vmul.f32 %v637, %v653
    %v676 = vmul.f32 %v639, %v655
    %v677 = vmul.f32 %v641, %v657
    %v678 = vmul.f32 %v643, %v659
    %v679 = vmul.f32 %v645, %v661
    %v680 = vmul.f32 %v647, %v663
    %v681 = vmul.f32 %v649, %v665
    %690 = vrot.lane.b32.xlu0 %v674, 64
    %v691 = vpop.permute.xlu0 %690
    %692 = vrot.lane.b32.xlu0 %v675, 64
    %v693 = vpop.permute.xlu0 %692
    %694 = vrot.lane.b32.xlu0 %v676, 64
    %v695 = vpop.permute.xlu0 %694
    %696 = vrot.lane.b32.xlu0 %v677, 64
    %v697 = vpop.permute.xlu0 %696
    %698 = vrot.lane.b32.xlu0 %v678, 64
    %v699 = vpop.permute.xlu0 %698
    %700 = vrot.lane.b32.xlu0 %v679, 64
    %v701 = vpop.permute.xlu0 %700
    %702 = vrot.lane.b32.xlu0 %v680, 64
    %v703 = vpop.permute.xlu0 %702
    %704 = vrot.lane.b32.xlu0 %v681, 64
    %v705 = vpop.permute.xlu0 %704
    %v714 = vadd.f32 %v135, %v691
    %v715 = vadd.f32 %v140, %v693
    %v716 = vadd.f32 %v145, %v695
    %v717 = vadd.f32 %v150, %v697
    %v718 = vadd.f32 %v155, %v699
    %v719 = vadd.f32 %v160, %v701
    %v720 = vadd.f32 %v165, %v703
    %v721 = vadd.f32 %v170, %v705
    %v722 = vtanh.pop %v714
    %v723 = vtanh.pop %v715
    %v724 = vtanh.pop %v716
    %v725 = vtanh.pop %v717
    %v726 = vtanh.pop %v718
    %v727 = vtanh.pop %v719
    %v728 = vtanh.pop %v720
    %v729 = vtanh.pop %v721
    %v730 = vsub.f32 1.0, %v635
    %v731 = vsub.f32 1.0, %v637
    %v732 = vsub.f32 1.0, %v639
    %v733 = vsub.f32 1.0, %v641
    %v734 = vsub.f32 1.0, %v643
    %v735 = vsub.f32 1.0, %v645
    %v736 = vsub.f32 1.0, %v647
    %v737 = vsub.f32 1.0, %v649
    %746 = vrot.lane.b32.xlu0 %v722, 96
    %v747 = vpop.permute.xlu0 %746
    %748 = vrot.lane.b32.xlu0 %v723, 96
    %v749 = vpop.permute.xlu0 %748
    %750 = vrot.lane.b32.xlu0 %v724, 96
    %v751 = vpop.permute.xlu0 %750
    %752 = vrot.lane.b32.xlu0 %v725, 96
    %v753 = vpop.permute.xlu0 %752
    %754 = vrot.lane.b32.xlu0 %v726, 96
    %v755 = vpop.permute.xlu0 %754
    %756 = vrot.lane.b32.xlu0 %v727, 96
    %v757 = vpop.permute.xlu0 %756
    %758 = vrot.lane.b32.xlu0 %v728, 96
    %v759 = vpop.permute.xlu0 %758
    %760 = vrot.lane.b32.xlu0 %v729, 96
    %v761 = vpop.permute.xlu0 %760
    %v770 = vmul.f32 %v730, %v747
    %v771 = vmul.f32 %v731, %v749
    %v772 = vmul.f32 %v732, %v751
    %v773 = vmul.f32 %v733, %v753
    %v774 = vmul.f32 %v734, %v755
    %v775 = vmul.f32 %v735, %v757
    %v776 = vmul.f32 %v736, %v759
    %v777 = vmul.f32 %v737, %v761
    %v778 = vrot.slane %v465, 7
    %v779 = vrot.slane %v467, 7
    %v780 = vrot.slane %v468, 7
    %v781 = vrot.slane %v469, 7
    %v782 = vrot.slane %v470, 7
    %v783 = vrot.slane %v471, 7
    %v784 = vrot.slane %v472, 7
    %v793 = vmul.f32 %v635, %v778
    %v794 = vmul.f32 %v637, %v481
    %v795 = vmul.f32 %v639, %v779
    %v796 = vmul.f32 %v641, %v780
    %v797 = vmul.f32 %v643, %v781
    %v798 = vmul.f32 %v645, %v782
    %v799 = vmul.f32 %v647, %v783
    %v800 = vmul.f32 %v649, %v784
    %v801 = vadd.f32 %v770, %v793
    %v802 = vadd.f32 %v771, %v794
    %v803 = vadd.f32 %v772, %v795
    %v804 = vadd.f32 %v773, %v796
    %v805 = vadd.f32 %v774, %v797
    %v806 = vadd.f32 %v775, %v798
    %v807 = vadd.f32 %v776, %v799
    %v808 = vadd.f32 %v777, %v800
    %v817 = vrot.slane %v802, 7
    %v818 = vsel %vm485, %v817, %v801
    %v819 = vrot.slane %v803, 6
    %v820 = vsel %vm488, %v819, %v818
    %v821 = vrot.slane %v804, 5
    %v822 = vsel %vm491, %v821, %v820
    %v823 = vrot.slane %v805, 4
    %v824 = vsel %vm494, %v823, %v822
    %v825 = vrot.slane %v806, 3
    %v826 = vsel %vm497, %v825, %v824
    %v827 = vrot.slane %v807, 2
    %v828 = vsel %vm500, %v827, %v826
    %v829 = vrot.slane %v808, 1
    %830 = vrot.lane.b32.xlu0 %v828, 96
    %v831 = vpop.permute.xlu0 %830
    %832 = vrot.lane.b32.xlu0 %v829, 96
    %v833 = vpop.permute.xlu0 %832
    %s836 = scalar_lea.vmem [#allocation2], 8
    %vm837 = vcmask 261121
    %838 = vst.msk [vmem:[%s836 - $0x1] sm:$0xfe] %vm837, %v831
    %vm839 = vcmask 253952
    %840 = vst.msk [vmem:[%s836 + $0x7] sm:$0x1] %vm839, %v833
    %v841 = vrot.slane %v801, 1
    %v842 = vsel %vm482, %v802, %v841
    %v843 = vrot.slane %v803, 7
    %v844 = vsel %vm485, %v843, %v842
    %v845 = vrot.slane %v804, 6
    %v846 = vsel %vm488, %v845, %v844
    %v847 = vrot.slane %v805, 5
    %v848 = vsel %vm491, %v847, %v846
    %v849 = vrot.slane %v806, 4
    %v850 = vsel %vm494, %v849, %v848
    %v851 = vrot.slane %v807, 3
    %v852 = vsel %vm497, %v851, %v850
    %v853 = vrot.slane %v808, 2
    %v854 = vsel %vm500, %v853, %v852
    %855 = vrot.lane.b32.xlu0 %v854, 96
    %v856 = vpop.permute.xlu0 %855
    %v857 = vsel %vm184, %v856, 0
    %859 = vmatprep.subr.mxu0 0.0
    %860 = vmatpush1.msra.mxu0 %v173
    %861 = vmatprep.subr.mxu0 0.0
    %862 = vmatpush1.msra.mxu0 %v174
    %863 = vmatprep.subr.mxu0 0.0
    %864 = vmatpush1.msra.mxu0 %v175
    %865 = vmatprep.subr.mxu0 0.0
    %866 = vmatpush1.msra.mxu0 %v176
    %867 = vmatprep.subr.mxu0 0.0
    %868 = vmatpush1.msra.mxu0 0.0
    %869 = vmatprep.subr.mxu0 0.0
    %870 = vmatpush1.msra.mxu0 0.0
    %871 = vmatprep.subr.mxu0 0.0
    %872 = vmatpush1.msra.mxu0 0.0
    %873 = vmatprep.subr.mxu0 0.0
    %874 = vmatpush1.msra.mxu0 0.0
    %875 = vmatprep.subr.mxu0 0.0
    %876 = vmatpush1.msra.mxu0 0.0
    %877 = vmatprep.subr.mxu0 0.0
    %878 = vmatpush1.msra.mxu0 0.0
    %879 = vmatprep.subr.mxu0 0.0
    %880 = vmatpush1.msra.mxu0 0.0
    %881 = vmatprep.subr.mxu0 0.0
    %882 = vmatpush1.msra.mxu0 0.0
    %883 = vmatprep.subr.mxu0 0.0
    %884 = vmatpush1.msra.mxu0 0.0
    %885 = vmatprep.subr.mxu0 0.0
    %886 = vmatpush1.msra.mxu0 0.0
    %887 = vmatprep.subr.mxu0 0.0
    %888 = vmatpush1.msra.mxu0 0.0
    %889 = vmatprep.subr.mxu0 0.0
    %890 = vmatpush1.msra.mxu0 0.0
    %891 = vmatprep.subr.mxu0 0.0
    %892 = vmatpush1.msra.mxu0 0.0
    %893 = vmatprep.subr.mxu0 0.0
    %894 = vmatpush1.msra.mxu0 0.0
    %895 = vmatprep.subr.mxu0 0.0
    %896 = vmatpush1.msra.mxu0 0.0
    %897 = vmatprep.subr.mxu0 0.0
    %898 = vmatpush1.msra.mxu0 0.0
    %899 = vmatprep.subr.mxu0 0.0
    %900 = vmatpush1.msra.mxu0 0.0
    %901 = vmatprep.subr.mxu0 0.0
    %902 = vmatpush1.msra.mxu0 0.0
    %903 = vmatprep.subr.mxu0 0.0
    %904 = vmatpush1.msra.mxu0 0.0
    %905 = vmatprep.subr.mxu0 0.0
    %906 = vmatpush1.msra.mxu0 0.0
    %907 = vmatprep.subr.mxu0 0.0
    %908 = vmatpush1.msra.mxu0 0.0
    %909 = vmatprep.subr.mxu0 0.0
    %910 = vmatpush1.msra.mxu0 0.0
    %911 = vmatprep.subr.mxu0 0.0
    %912 = vmatpush1.msra.mxu0 0.0
    %913 = vmatprep.subr.mxu0 0.0
    %914 = vmatpush1.msra.mxu0 0.0
    %915 = vmatprep.subr.mxu0 0.0
    %916 = vmatpush1.msra.mxu0 0.0
    %917 = vmatprep.subr.mxu0 0.0
    %918 = vmatpush1.msra.mxu0 0.0
    %919 = vmatprep.subr.mxu0 0.0
    %920 = vmatpush1.msra.mxu0 0.0
    %921 = vmatprep.subr.mxu0 0.0
    %922 = vmatpush1.msra.mxu0 0.0
    %923 = vmatprep.mubr.f32.mxu0 0.0
    %924 = vmatmul.mubr.f32.gmra.mrb[0].mxu0 %v857
    %v925 = vpop.f32.mrb[0].mxu0
    %v926 = vadd.f32 %v182, %v925
    %v927 = vpop.f32.mrb[0].mxu0
    %928 = vdwg.mxu0
    %v930 = vrot.slane %v926, 6
    %v931 = vrot.slane %v926, 7
    %v932 = vrot.slane %v926, 1
    %v933 = vrot.slane %v926, 2
    %v934 = vrot.slane %v926, 3
    %v935 = vrot.slane %v926, 4
    %v936 = vrot.slane %v926, 5
    %v945 = vadd.f32 %v135, %v930
    %v946 = vadd.f32 %v140, %v931
    %v947 = vadd.f32 %v145, %v926
    %v948 = vadd.f32 %v150, %v932
    %v949 = vadd.f32 %v155, %v933
    %v950 = vadd.f32 %v160, %v934
    %v951 = vadd.f32 %v165, %v935
    %v952 = vadd.f32 %v170, %v936
    %v953 = vxor.u32 %v945, 2147483648
    %v954 = vxor.u32 %v946, 2147483648
    %v955 = vxor.u32 %v947, 2147483648
    %v956 = vxor.u32 %v948, 2147483648
    %v957 = vxor.u32 %v949, 2147483648
    %v958 = vxor.u32 %v950, 2147483648
    %v959 = vxor.u32 %v951, 2147483648
    %v960 = vxor.u32 %v952, 2147483648
    %v961 = vmul.f32 %v953, 1.442695
    %v962 = vpow.pop %v961
    %v963 = vmul.f32 %v954, 1.442695
    %v964 = vpow.pop %v963
    %v965 = vmul.f32 %v955, 1.442695
    %v966 = vpow.pop %v965
    %v967 = vmul.f32 %v956, 1.442695
    %v968 = vpow.pop %v967
    %v969 = vmul.f32 %v957, 1.442695
    %v970 = vpow.pop %v969
    %v971 = vmul.f32 %v958, 1.442695
    %v972 = vpow.pop %v971
    %v973 = vmul.f32 %v959, 1.442695
    %v974 = vpow.pop %v973
    %v975 = vmul.f32 %v960, 1.442695
    %v976 = vpow.pop %v975
    %v977 = vadd.f32 %v962, 1.0
    %v978 = vadd.f32 %v964, 1.0
    %v979 = vadd.f32 %v966, 1.0
    %v980 = vadd.f32 %v968, 1.0
    %v981 = vadd.f32 %v970, 1.0
    %v982 = vadd.f32 %v972, 1.0
    %v983 = vadd.f32 %v974, 1.0
    %v984 = vadd.f32 %v976, 1.0
    %v985 = vrcp.pop %v977
    %v986 = vmul.f32 1.0, %v985
    %v987 = vrcp.pop %v978
    %v988 = vmul.f32 1.0, %v987
    %v989 = vrcp.pop %v979
    %v990 = vmul.f32 1.0, %v989
    %v991 = vrcp.pop %v980
    %v992 = vmul.f32 1.0, %v991
    %v993 = vrcp.pop %v981
    %v994 = vmul.f32 1.0, %v993
    %v995 = vrcp.pop %v982
    %v996 = vmul.f32 1.0, %v995
    %v997 = vrcp.pop %v983
    %v998 = vmul.f32 1.0, %v997
    %v999 = vrcp.pop %v984
    %v1000 = vmul.f32 1.0, %v999
    %1001 = vrot.lane.b32.xlu0 %v930, 64
    %v1002 = vpop.permute.xlu0 %1001
    %1003 = vrot.lane.b32.xlu0 %v931, 64
    %v1004 = vpop.permute.xlu0 %1003
    %1005 = vrot.lane.b32.xlu0 %v926, 64
    %v1006 = vpop.permute.xlu0 %1005
    %1007 = vrot.lane.b32.xlu0 %v932, 64
    %v1008 = vpop.permute.xlu0 %1007
    %1009 = vrot.lane.b32.xlu0 %v933, 64
    %v1010 = vpop.permute.xlu0 %1009
    %1011 = vrot.lane.b32.xlu0 %v934, 64
    %v1012 = vpop.permute.xlu0 %1011
    %1013 = vrot.lane.b32.xlu0 %v935, 64
    %v1014 = vpop.permute.xlu0 %1013
    %1015 = vrot.lane.b32.xlu0 %v936, 64
    %v1016 = vpop.permute.xlu0 %1015
    %v1025 = vmul.f32 %v986, %v1002
    %v1026 = vmul.f32 %v988, %v1004
    %v1027 = vmul.f32 %v990, %v1006
    %v1028 = vmul.f32 %v992, %v1008
    %v1029 = vmul.f32 %v994, %v1010
    %v1030 = vmul.f32 %v996, %v1012
    %v1031 = vmul.f32 %v998, %v1014
    %v1032 = vmul.f32 %v1000, %v1016
    %1041 = vrot.lane.b32.xlu0 %v1025, 64
    %v1042 = vpop.permute.xlu0 %1041
    %1043 = vrot.lane.b32.xlu0 %v1026, 64
    %v1044 = vpop.permute.xlu0 %1043
    %1045 = vrot.lane.b32.xlu0 %v1027, 64
    %v1046 = vpop.permute.xlu0 %1045
    %1047 = vrot.lane.b32.xlu0 %v1028, 64
    %v1048 = vpop.permute.xlu0 %1047
    %1049 = vrot.lane.b32.xlu0 %v1029, 64
    %v1050 = vpop.permute.xlu0 %1049
    %1051 = vrot.lane.b32.xlu0 %v1030, 64
    %v1052 = vpop.permute.xlu0 %1051
    %1053 = vrot.lane.b32.xlu0 %v1031, 64
    %v1054 = vpop.permute.xlu0 %1053
    %1055 = vrot.lane.b32.xlu0 %v1032, 64
    %v1056 = vpop.permute.xlu0 %1055
    %v1065 = vadd.f32 %v135, %v1042
    %v1066 = vadd.f32 %v140, %v1044
    %v1067 = vadd.f32 %v145, %v1046
    %v1068 = vadd.f32 %v150, %v1048
    %v1069 = vadd.f32 %v155, %v1050
    %v1070 = vadd.f32 %v160, %v1052
    %v1071 = vadd.f32 %v165, %v1054
    %v1072 = vadd.f32 %v170, %v1056
    %v1073 = vtanh.pop %v1065
    %v1074 = vtanh.pop %v1066
    %v1075 = vtanh.pop %v1067
    %v1076 = vtanh.pop %v1068
    %v1077 = vtanh.pop %v1069
    %v1078 = vtanh.pop %v1070
    %v1079 = vtanh.pop %v1071
    %v1080 = vtanh.pop %v1072
    %v1081 = vsub.f32 1.0, %v986
    %v1082 = vsub.f32 1.0, %v988
    %v1083 = vsub.f32 1.0, %v990
    %v1084 = vsub.f32 1.0, %v992
    %v1085 = vsub.f32 1.0, %v994
    %v1086 = vsub.f32 1.0, %v996
    %v1087 = vsub.f32 1.0, %v998
    %v1088 = vsub.f32 1.0, %v1000
    %1097 = vrot.lane.b32.xlu0 %v1073, 96
    %v1098 = vpop.permute.xlu0 %1097
    %1099 = vrot.lane.b32.xlu0 %v1074, 96
    %v1100 = vpop.permute.xlu0 %1099
    %1101 = vrot.lane.b32.xlu0 %v1075, 96
    %v1102 = vpop.permute.xlu0 %1101
    %1103 = vrot.lane.b32.xlu0 %v1076, 96
    %v1104 = vpop.permute.xlu0 %1103
    %1105 = vrot.lane.b32.xlu0 %v1077, 96
    %v1106 = vpop.permute.xlu0 %1105
    %1107 = vrot.lane.b32.xlu0 %v1078, 96
    %v1108 = vpop.permute.xlu0 %1107
    %1109 = vrot.lane.b32.xlu0 %v1079, 96
    %v1110 = vpop.permute.xlu0 %1109
    %1111 = vrot.lane.b32.xlu0 %v1080, 96
    %v1112 = vpop.permute.xlu0 %1111
    %v1121 = vmul.f32 %v1081, %v1098
    %v1122 = vmul.f32 %v1082, %v1100
    %v1123 = vmul.f32 %v1083, %v1102
    %v1124 = vmul.f32 %v1084, %v1104
    %v1125 = vmul.f32 %v1085, %v1106
    %v1126 = vmul.f32 %v1086, %v1108
    %v1127 = vmul.f32 %v1087, %v1110
    %v1128 = vmul.f32 %v1088, %v1112
    %v1129 = vrot.slane %v801, 7
    %v1130 = vrot.slane %v804, 7
    %v1131 = vrot.slane %v805, 7
    %v1132 = vrot.slane %v806, 7
    %v1133 = vrot.slane %v807, 7
    %v1134 = vrot.slane %v808, 7
    %v1143 = vmul.f32 %v986, %v1129
    %v1144 = vmul.f32 %v988, %v817
    %v1145 = vmul.f32 %v990, %v843
    %v1146 = vmul.f32 %v992, %v1130
    %v1147 = vmul.f32 %v994, %v1131
    %v1148 = vmul.f32 %v996, %v1132
    %v1149 = vmul.f32 %v998, %v1133
    %v1150 = vmul.f32 %v1000, %v1134
    %v1151 = vadd.f32 %v1121, %v1143
    %v1152 = vadd.f32 %v1122, %v1144
    %v1153 = vadd.f32 %v1123, %v1145
    %v1154 = vadd.f32 %v1124, %v1146
    %v1155 = vadd.f32 %v1125, %v1147
    %v1156 = vadd.f32 %v1126, %v1148
    %v1157 = vadd.f32 %v1127, %v1149
    %v1158 = vadd.f32 %v1128, %v1150
    %v1167 = vrot.slane %v1152, 7
    %v1168 = vsel %vm488, %v1167, %v1151
    %v1169 = vrot.slane %v1153, 6
    %v1170 = vsel %vm491, %v1169, %v1168
    %v1171 = vrot.slane %v1154, 5
    %v1172 = vsel %vm494, %v1171, %v1170
    %v1173 = vrot.slane %v1155, 4
    %v1174 = vsel %vm497, %v1173, %v1172
    %v1175 = vrot.slane %v1156, 3
    %v1176 = vsel %vm500, %v1175, %v1174
    %v1177 = vrot.slane %v1157, 2
    %v1178 = vrot.slane %v1158, 1
    %v1179 = vsel %vm482, %v1178, %v1177
    %1180 = vrot.lane.b32.xlu0 %v1176, 96
    %v1181 = vpop.permute.xlu0 %1180
    %1182 = vrot.lane.b32.xlu0 %v1179, 96
    %v1183 = vpop.permute.xlu0 %1182
    %s1186 = scalar_lea.vmem [#allocation2], 16
    %vm1187 = vcmask 261122
    %1188 = vst.msk [vmem:[%s1186 - $0x2] sm:$0xfc] %vm1187, %v1181
    %vm1189 = vcmask 254976
    %1190 = vst.msk [vmem:[%s1186 + $0x6] sm:$0x3] %vm1189, %v1183
    %v1191 = vrot.slane %v1151, 2
    %v1192 = vrot.slane %v1152, 1
    %v1193 = vsel %vm482, %v1192, %v1191
    %v1194 = vsel %vm485, %v1153, %v1193
    %v1195 = vrot.slane %v1154, 7
    %v1196 = vsel %vm488, %v1195, %v1194
    %v1197 = vrot.slane %v1155, 6
    %v1198 = vsel %vm491, %v1197, %v1196
    %v1199 = vrot.slane %v1156, 5
    %v1200 = vsel %vm494, %v1199, %v1198
    %v1201 = vrot.slane %v1157, 4
    %v1202 = vsel %vm497, %v1201, %v1200
    %v1203 = vrot.slane %v1158, 3
    %v1204 = vsel %vm500, %v1203, %v1202
    %1205 = vrot.lane.b32.xlu0 %v1204, 96
    %v1206 = vpop.permute.xlu0 %1205
    %v1207 = vsel %vm184, %v1206, 0
    %1209 = vmatprep.subr.mxu0 0.0
    %1210 = vmatpush1.msra.mxu0 %v173
    %1211 = vmatprep.subr.mxu0 0.0
    %1212 = vmatpush1.msra.mxu0 %v174
    %1213 = vmatprep.subr.mxu0 0.0
    %1214 = vmatpush1.msra.mxu0 %v175
    %1215 = vmatprep.subr.mxu0 0.0
    %1216 = vmatpush1.msra.mxu0 %v176
    %1217 = vmatprep.subr.mxu0 0.0
    %1218 = vmatpush1.msra.mxu0 0.0
    %1219 = vmatprep.subr.mxu0 0.0
    %1220 = vmatpush1.msra.mxu0 0.0
    %1221 = vmatprep.subr.mxu0 0.0
    %1222 = vmatpush1.msra.mxu0 0.0
    %1223 = vmatprep.subr.mxu0 0.0
    %1224 = vmatpush1.msra.mxu0 0.0
    %1225 = vmatprep.subr.mxu0 0.0
    %1226 = vmatpush1.msra.mxu0 0.0
    %1227 = vmatprep.subr.mxu0 0.0
    %1228 = vmatpush1.msra.mxu0 0.0
    %1229 = vmatprep.subr.mxu0 0.0
    %1230 = vmatpush1.msra.mxu0 0.0
    %1231 = vmatprep.subr.mxu0 0.0
    %1232 = vmatpush1.msra.mxu0 0.0
    %1233 = vmatprep.subr.mxu0 0.0
    %1234 = vmatpush1.msra.mxu0 0.0
    %1235 = vmatprep.subr.mxu0 0.0
    %1236 = vmatpush1.msra.mxu0 0.0
    %1237 = vmatprep.subr.mxu0 0.0
    %1238 = vmatpush1.msra.mxu0 0.0
    %1239 = vmatprep.subr.mxu0 0.0
    %1240 = vmatpush1.msra.mxu0 0.0
    %1241 = vmatprep.subr.mxu0 0.0
    %1242 = vmatpush1.msra.mxu0 0.0
    %1243 = vmatprep.subr.mxu0 0.0
    %1244 = vmatpush1.msra.mxu0 0.0
    %1245 = vmatprep.subr.mxu0 0.0
    %1246 = vmatpush1.msra.mxu0 0.0
    %1247 = vmatprep.subr.mxu0 0.0
    %1248 = vmatpush1.msra.mxu0 0.0
    %1249 = vmatprep.subr.mxu0 0.0
    %1250 = vmatpush1.msra.mxu0 0.0
    %1251 = vmatprep.subr.mxu0 0.0
    %1252 = vmatpush1.msra.mxu0 0.0
    %1253 = vmatprep.subr.mxu0 0.0
    %1254 = vmatpush1.msra.mxu0 0.0
    %1255 = vmatprep.subr.mxu0 0.0
    %1256 = vmatpush1.msra.mxu0 0.0
    %1257 = vmatprep.subr.mxu0 0.0
    %1258 = vmatpush1.msra.mxu0 0.0
    %1259 = vmatprep.subr.mxu0 0.0
    %1260 = vmatpush1.msra.mxu0 0.0
    %1261 = vmatprep.subr.mxu0 0.0
    %1262 = vmatpush1.msra.mxu0 0.0
    %1263 = vmatprep.subr.mxu0 0.0
    %1264 = vmatpush1.msra.mxu0 0.0
    %1265 = vmatprep.subr.mxu0 0.0
    %1266 = vmatpush1.msra.mxu0 0.0
    %1267 = vmatprep.subr.mxu0 0.0
    %1268 = vmatpush1.msra.mxu0 0.0
    %1269 = vmatprep.subr.mxu0 0.0
    %1270 = vmatpush1.msra.mxu0 0.0
    %1271 = vmatprep.subr.mxu0 0.0
    %1272 = vmatpush1.msra.mxu0 0.0
    %1273 = vmatprep.mubr.f32.mxu0 0.0
    %1274 = vmatmul.mubr.f32.gmra.mrb[0].mxu0 %v1207
    %v1275 = vpop.f32.mrb[0].mxu0
    %v1276 = vadd.f32 %v182, %v1275
    %v1277 = vpop.f32.mrb[0].mxu0
    %1278 = vdwg.mxu0
    %v1280 = vrot.slane %v1276, 5
    %v1281 = vrot.slane %v1276, 6
    %v1282 = vrot.slane %v1276, 7
    %v1283 = vrot.slane %v1276, 1
    %v1284 = vrot.slane %v1276, 2
    %v1285 = vrot.slane %v1276, 3
    %v1286 = vrot.slane %v1276, 4
    %v1295 = vadd.f32 %v135, %v1280
    %v1296 = vadd.f32 %v140, %v1281
    %v1297 = vadd.f32 %v145, %v1282
    %v1298 = vadd.f32 %v150, %v1276
    %v1299 = vadd.f32 %v155, %v1283
    %v1300 = vadd.f32 %v160, %v1284
    %v1301 = vadd.f32 %v165, %v1285
    %v1302 = vadd.f32 %v170, %v1286
    %v1303 = vxor.u32 %v1295, 2147483648
    %v1304 = vxor.u32 %v1296, 2147483648
    %v1305 = vxor.u32 %v1297, 2147483648
    %v1306 = vxor.u32 %v1298, 2147483648
    %v1307 = vxor.u32 %v1299, 2147483648
    %v1308 = vxor.u32 %v1300, 2147483648
    %v1309 = vxor.u32 %v1301, 2147483648
    %v1310 = vxor.u32 %v1302, 2147483648
    %v1311 = vmul.f32 %v1303, 1.442695
    %v1312 = vpow.pop %v1311
    %v1313 = vmul.f32 %v1304, 1.442695
    %v1314 = vpow.pop %v1313
    %v1315 = vmul.f32 %v1305, 1.442695
    %v1316 = vpow.pop %v1315
    %v1317 = vmul.f32 %v1306, 1.442695
    %v1318 = vpow.pop %v1317
    %v1319 = vmul.f32 %v1307, 1.442695
    %v1320 = vpow.pop %v1319
    %v1321 = vmul.f32 %v1308, 1.442695
    %v1322 = vpow.pop %v1321
    %v1323 = vmul.f32 %v1309, 1.442695
    %v1324 = vpow.pop %v1323
    %v1325 = vmul.f32 %v1310, 1.442695
    %v1326 = vpow.pop %v1325
    %v1327 = vadd.f32 %v1312, 1.0
    %v1328 = vadd.f32 %v1314, 1.0
    %v1329 = vadd.f32 %v1316, 1.0
    %v1330 = vadd.f32 %v1318, 1.0
    %v1331 = vadd.f32 %v1320, 1.0
    %v1332 = vadd.f32 %v1322, 1.0
    %v1333 = vadd.f32 %v1324, 1.0
    %v1334 = vadd.f32 %v1326, 1.0
    %v1335 = vrcp.pop %v1327
    %v1336 = vmul.f32 1.0, %v1335
    %v1337 = vrcp.pop %v1328
    %v1338 = vmul.f32 1.0, %v1337
    %v1339 = vrcp.pop %v1329
    %v1340 = vmul.f32 1.0, %v1339
    %v1341 = vrcp.pop %v1330
    %v1342 = vmul.f32 1.0, %v1341
    %v1343 = vrcp.pop %v1331
    %v1344 = vmul.f32 1.0, %v1343
    %v1345 = vrcp.pop %v1332
    %v1346 = vmul.f32 1.0, %v1345
    %v1347 = vrcp.pop %v1333
    %v1348 = vmul.f32 1.0, %v1347
    %v1349 = vrcp.pop %v1334
    %v1350 = vmul.f32 1.0, %v1349
    %1351 = vrot.lane.b32.xlu0 %v1280, 64
    %v1352 = vpop.permute.xlu0 %1351
    %1353 = vrot.lane.b32.xlu0 %v1281, 64
    %v1354 = vpop.permute.xlu0 %1353
    %1355 = vrot.lane.b32.xlu0 %v1282, 64
    %v1356 = vpop.permute.xlu0 %1355
    %1357 = vrot.lane.b32.xlu0 %v1276, 64
    %v1358 = vpop.permute.xlu0 %1357
    %1359 = vrot.lane.b32.xlu0 %v1283, 64
    %v1360 = vpop.permute.xlu0 %1359
    %1361 = vrot.lane.b32.xlu0 %v1284, 64
    %v1362 = vpop.permute.xlu0 %1361
    %1363 = vrot.lane.b32.xlu0 %v1285, 64
    %v1364 = vpop.permute.xlu0 %1363
    %1365 = vrot.lane.b32.xlu0 %v1286, 64
    %v1366 = vpop.permute.xlu0 %1365
    %v1375 = vmul.f32 %v1336, %v1352
    %v1376 = vmul.f32 %v1338, %v1354
    %v1377 = vmul.f32 %v1340, %v1356
    %v1378 = vmul.f32 %v1342, %v1358
    %v1379 = vmul.f32 %v1344, %v1360
    %v1380 = vmul.f32 %v1346, %v1362
    %v1381 = vmul.f32 %v1348, %v1364
    %v1382 = vmul.f32 %v1350, %v1366
    %1391 = vrot.lane.b32.xlu0 %v1375, 64
    %v1392 = vpop.permute.xlu0 %1391
    %1393 = vrot.lane.b32.xlu0 %v1376, 64
    %v1394 = vpop.permute.xlu0 %1393
    %1395 = vrot.lane.b32.xlu0 %v1377, 64
    %v1396 = vpop.permute.xlu0 %1395
    %1397 = vrot.lane.b32.xlu0 %v1378, 64
    %v1398 = vpop.permute.xlu0 %1397
    %1399 = vrot.lane.b32.xlu0 %v1379, 64
    %v1400 = vpop.permute.xlu0 %1399
    %1401 = vrot.lane.b32.xlu0 %v1380, 64
    %v1402 = vpop.permute.xlu0 %1401
    %1403 = vrot.lane.b32.xlu0 %v1381, 64
    %v1404 = vpop.permute.xlu0 %1403
    %1405 = vrot.lane.b32.xlu0 %v1382, 64
    %v1406 = vpop.permute.xlu0 %1405
    %v1415 = vadd.f32 %v135, %v1392
    %v1416 = vadd.f32 %v140, %v1394
    %v1417 = vadd.f32 %v145, %v1396
    %v1418 = vadd.f32 %v150, %v1398
    %v1419 = vadd.f32 %v155, %v1400
    %v1420 = vadd.f32 %v160, %v1402
    %v1421 = vadd.f32 %v165, %v1404
    %v1422 = vadd.f32 %v170, %v1406
    %v1423 = vtanh.pop %v1415
    %v1424 = vtanh.pop %v1416
    %v1425 = vtanh.pop %v1417
    %v1426 = vtanh.pop %v1418
    %v1427 = vtanh.pop %v1419
    %v1428 = vtanh.pop %v1420
    %v1429 = vtanh.pop %v1421
    %v1430 = vtanh.pop %v1422
    %v1431 = vsub.f32 1.0, %v1336
    %v1432 = vsub.f32 1.0, %v1338
    %v1433 = vsub.f32 1.0, %v1340
    %v1434 = vsub.f32 1.0, %v1342
    %v1435 = vsub.f32 1.0, %v1344
    %v1436 = vsub.f32 1.0, %v1346
    %v1437 = vsub.f32 1.0, %v1348
    %v1438 = vsub.f32 1.0, %v1350
    %1447 = vrot.lane.b32.xlu0 %v1423, 96
    %v1448 = vpop.permute.xlu0 %1447
    %1449 = vrot.lane.b32.xlu0 %v1424, 96
    %v1450 = vpop.permute.xlu0 %1449
    %1451 = vrot.lane.b32.xlu0 %v1425, 96
    %v1452 = vpop.permute.xlu0 %1451
    %1453 = vrot.lane.b32.xlu0 %v1426, 96
    %v1454 = vpop.permute.xlu0 %1453
    %1455 = vrot.lane.b32.xlu0 %v1427, 96
    %v1456 = vpop.permute.xlu0 %1455
    %1457 = vrot.lane.b32.xlu0 %v1428, 96
    %v1458 = vpop.permute.xlu0 %1457
    %1459 = vrot.lane.b32.xlu0 %v1429, 96
    %v1460 = vpop.permute.xlu0 %1459
    %1461 = vrot.lane.b32.xlu0 %v1430, 96
    %v1462 = vpop.permute.xlu0 %1461
    %v1471 = vmul.f32 %v1431, %v1448
    %v1472 = vmul.f32 %v1432, %v1450
    %v1473 = vmul.f32 %v1433, %v1452
    %v1474 = vmul.f32 %v1434, %v1454
    %v1475 = vmul.f32 %v1435, %v1456
    %v1476 = vmul.f32 %v1436, %v1458
    %v1477 = vmul.f32 %v1437, %v1460
    %v1478 = vmul.f32 %v1438, %v1462
    %v1479 = vrot.slane %v1151, 7
    %v1480 = vrot.slane %v1153, 7
    %v1481 = vrot.slane %v1155, 7
    %v1482 = vrot.slane %v1156, 7
    %v1483 = vrot.slane %v1157, 7
    %v1484 = vrot.slane %v1158, 7
    %v1493 = vmul.f32 %v1336, %v1479
    %v1494 = vmul.f32 %v1338, %v1167
    %v1495 = vmul.f32 %v1340, %v1480
    %v1496 = vmul.f32 %v1342, %v1195
    %v1497 = vmul.f32 %v1344, %v1481
    %v1498 = vmul.f32 %v1346, %v1482
    %v1499 = vmul.f32 %v1348, %v1483
    %v1500 = vmul.f32 %v1350, %v1484
    %v1501 = vadd.f32 %v1471, %v1493
    %v1502 = vadd.f32 %v1472, %v1494
    %v1503 = vadd.f32 %v1473, %v1495
    %v1504 = vadd.f32 %v1474, %v1496
    %v1505 = vadd.f32 %v1475, %v1497
    %v1506 = vadd.f32 %v1476, %v1498
    %v1507 = vadd.f32 %v1477, %v1499
    %v1508 = vadd.f32 %v1478, %v1500
    %v1517 = vrot.slane %v1502, 7
    %v1518 = vsel %vm491, %v1517, %v1501
    %v1519 = vrot.slane %v1503, 6
    %v1520 = vsel %vm494, %v1519, %v1518
    %v1521 = vrot.slane %v1504, 5
    %v1522 = vsel %vm497, %v1521, %v1520
    %v1523 = vrot.slane %v1505, 4
    %v1524 = vsel %vm500, %v1523, %v1522
    %v1525 = vrot.slane %v1506, 3
    %v1526 = vrot.slane %v1507, 2
    %v1527 = vsel %vm482, %v1526, %v1525
    %v1528 = vrot.slane %v1508, 1
    %v1529 = vsel %vm485, %v1528, %v1527
    %1530 = vrot.lane.b32.xlu0 %v1524, 96
    %v1531 = vpop.permute.xlu0 %1530
    %1532 = vrot.lane.b32.xlu0 %v1529, 96
    %v1533 = vpop.permute.xlu0 %1532
    %s1536 = scalar_lea.vmem [#allocation2], 24
    %vm1537 = vcmask 261123
    %1538 = vst.msk [vmem:[%s1536 - $0x3] sm:$0xf8] %vm1537, %v1531
    %vm1539 = vcmask 256000
    %1540 = vst.msk [vmem:[%s1536 + $0x5] sm:$0x7] %vm1539, %v1533
    %v1541 = vrot.slane %v1501, 3
    %v1542 = vrot.slane %v1502, 2
    %v1543 = vsel %vm482, %v1542, %v1541
    %v1544 = vrot.slane %v1503, 1
    %v1545 = vsel %vm485, %v1544, %v1543
    %v1546 = vsel %vm488, %v1504, %v1545
    %v1547 = vrot.slane %v1505, 7
    %v1548 = vsel %vm491, %v1547, %v1546
    %v1549 = vrot.slane %v1506, 6
    %v1550 = vsel %vm494, %v1549, %v1548
    %v1551 = vrot.slane %v1507, 5
    %v1552 = vsel %vm497, %v1551, %v1550
    %v1553 = vrot.slane %v1508, 4
    %v1554 = vsel %vm500, %v1553, %v1552
    %1555 = vrot.lane.b32.xlu0 %v1554, 96
    %v1556 = vpop.permute.xlu0 %1555
    %v1557 = vsel %vm184, %v1556, 0
    %1559 = vmatprep.subr.mxu0 0.0
    %1560 = vmatpush1.msra.mxu0 %v173
    %1561 = vmatprep.subr.mxu0 0.0
    %1562 = vmatpush1.msra.mxu0 %v174
    %1563 = vmatprep.subr.mxu0 0.0
    %1564 = vmatpush1.msra.mxu0 %v175
    %1565 = vmatprep.subr.mxu0 0.0
    %1566 = vmatpush1.msra.mxu0 %v176
    %1567 = vmatprep.subr.mxu0 0.0
    %1568 = vmatpush1.msra.mxu0 0.0
    %1569 = vmatprep.subr.mxu0 0.0
    %1570 = vmatpush1.msra.mxu0 0.0
    %1571 = vmatprep.subr.mxu0 0.0
    %1572 = vmatpush1.msra.mxu0 0.0
    %1573 = vmatprep.subr.mxu0 0.0
    %1574 = vmatpush1.msra.mxu0 0.0
    %1575 = vmatprep.subr.mxu0 0.0
    %1576 = vmatpush1.msra.mxu0 0.0
    %1577 = vmatprep.subr.mxu0 0.0
    %1578 = vmatpush1.msra.mxu0 0.0
    %1579 = vmatprep.subr.mxu0 0.0
    %1580 = vmatpush1.msra.mxu0 0.0
    %1581 = vmatprep.subr.mxu0 0.0
    %1582 = vmatpush1.msra.mxu0 0.0
    %1583 = vmatprep.subr.mxu0 0.0
    %1584 = vmatpush1.msra.mxu0 0.0
    %1585 = vmatprep.subr.mxu0 0.0
    %1586 = vmatpush1.msra.mxu0 0.0
    %1587 = vmatprep.subr.mxu0 0.0
    %1588 = vmatpush1.msra.mxu0 0.0
    %1589 = vmatprep.subr.mxu0 0.0
    %1590 = vmatpush1.msra.mxu0 0.0
    %1591 = vmatprep.subr.mxu0 0.0
    %1592 = vmatpush1.msra.mxu0 0.0
    %1593 = vmatprep.subr.mxu0 0.0
    %1594 = vmatpush1.msra.mxu0 0.0
    %1595 = vmatprep.subr.mxu0 0.0
    %1596 = vmatpush1.msra.mxu0 0.0
    %1597 = vmatprep.subr.mxu0 0.0
    %1598 = vmatpush1.msra.mxu0 0.0
    %1599 = vmatprep.subr.mxu0 0.0
    %1600 = vmatpush1.msra.mxu0 0.0
    %1601 = vmatprep.subr.mxu0 0.0
    %1602 = vmatpush1.msra.mxu0 0.0
    %1603 = vmatprep.subr.mxu0 0.0
    %1604 = vmatpush1.msra.mxu0 0.0
    %1605 = vmatprep.subr.mxu0 0.0
    %1606 = vmatpush1.msra.mxu0 0.0
    %1607 = vmatprep.subr.mxu0 0.0
    %1608 = vmatpush1.msra.mxu0 0.0
    %1609 = vmatprep.subr.mxu0 0.0
    %1610 = vmatpush1.msra.mxu0 0.0
    %1611 = vmatprep.subr.mxu0 0.0
    %1612 = vmatpush1.msra.mxu0 0.0
    %1613 = vmatprep.subr.mxu0 0.0
    %1614 = vmatpush1.msra.mxu0 0.0
    %1615 = vmatprep.subr.mxu0 0.0
    %1616 = vmatpush1.msra.mxu0 0.0
    %1617 = vmatprep.subr.mxu0 0.0
    %1618 = vmatpush1.msra.mxu0 0.0
    %1619 = vmatprep.subr.mxu0 0.0
    %1620 = vmatpush1.msra.mxu0 0.0
    %1621 = vmatprep.subr.mxu0 0.0
    %1622 = vmatpush1.msra.mxu0 0.0
    %1623 = vmatprep.mubr.f32.mxu0 0.0
    %1624 = vmatmul.mubr.f32.gmra.mrb[0].mxu0 %v1557
    %v1625 = vpop.f32.mrb[0].mxu0
    %v1626 = vadd.f32 %v182, %v1625
    %v1627 = vpop.f32.mrb[0].mxu0
    %1628 = vdwg.mxu0
    %v1630 = vrot.slane %v1626, 4
    %v1631 = vrot.slane %v1626, 5
    %v1632 = vrot.slane %v1626, 6
    %v1633 = vrot.slane %v1626, 7
    %v1634 = vrot.slane %v1626, 1
    %v1635 = vrot.slane %v1626, 2
    %v1636 = vrot.slane %v1626, 3
    %v1645 = vadd.f32 %v135, %v1630
    %v1646 = vadd.f32 %v140, %v1631
    %v1647 = vadd.f32 %v145, %v1632
    %v1648 = vadd.f32 %v150, %v1633
    %v1649 = vadd.f32 %v155, %v1626
    %v1650 = vadd.f32 %v160, %v1634
    %v1651 = vadd.f32 %v165, %v1635
    %v1652 = vadd.f32 %v170, %v1636
    %v1653 = vxor.u32 %v1645, 2147483648
    %v1654 = vxor.u32 %v1646, 2147483648
    %v1655 = vxor.u32 %v1647, 2147483648
    %v1656 = vxor.u32 %v1648, 2147483648
    %v1657 = vxor.u32 %v1649, 2147483648
    %v1658 = vxor.u32 %v1650, 2147483648
    %v1659 = vxor.u32 %v1651, 2147483648
    %v1660 = vxor.u32 %v1652, 2147483648
    %v1661 = vmul.f32 %v1653, 1.442695
    %v1662 = vpow.pop %v1661
    %v1663 = vmul.f32 %v1654, 1.442695
    %v1664 = vpow.pop %v1663
    %v1665 = vmul.f32 %v1655, 1.442695
    %v1666 = vpow.pop %v1665
    %v1667 = vmul.f32 %v1656, 1.442695
    %v1668 = vpow.pop %v1667
    %v1669 = vmul.f32 %v1657, 1.442695
    %v1670 = vpow.pop %v1669
    %v1671 = vmul.f32 %v1658, 1.442695
    %v1672 = vpow.pop %v1671
    %v1673 = vmul.f32 %v1659, 1.442695
    %v1674 = vpow.pop %v1673
    %v1675 = vmul.f32 %v1660, 1.442695
    %v1676 = vpow.pop %v1675
    %v1677 = vadd.f32 %v1662, 1.0
    %v1678 = vadd.f32 %v1664, 1.0
    %v1679 = vadd.f32 %v1666, 1.0
    %v1680 = vadd.f32 %v1668, 1.0
    %v1681 = vadd.f32 %v1670, 1.0
    %v1682 = vadd.f32 %v1672, 1.0
    %v1683 = vadd.f32 %v1674, 1.0
    %v1684 = vadd.f32 %v1676, 1.0
    %v1685 = vrcp.pop %v1677
    %v1686 = vmul.f32 1.0, %v1685
    %v1687 = vrcp.pop %v1678
    %v1688 = vmul.f32 1.0, %v1687
    %v1689 = vrcp.pop %v1679
    %v1690 = vmul.f32 1.0, %v1689
    %v1691 = vrcp.pop %v1680
    %v1692 = vmul.f32 1.0, %v1691
    %v1693 = vrcp.pop %v1681
    %v1694 = vmul.f32 1.0, %v1693
    %v1695 = vrcp.pop %v1682
    %v1696 = vmul.f32 1.0, %v1695
    %v1697 = vrcp.pop %v1683
    %v1698 = vmul.f32 1.0, %v1697
    %v1699 = vrcp.pop %v1684
    %v1700 = vmul.f32 1.0, %v1699
    %1701 = vrot.lane.b32.xlu0 %v1630, 64
    %v1702 = vpop.permute.xlu0 %1701
    %1703 = vrot.lane.b32.xlu0 %v1631, 64
    %v1704 = vpop.permute.xlu0 %1703
    %1705 = vrot.lane.b32.xlu0 %v1632, 64
    %v1706 = vpop.permute.xlu0 %1705
    %1707 = vrot.lane.b32.xlu0 %v1633, 64
    %v1708 = vpop.permute.xlu0 %1707
    %1709 = vrot.lane.b32.xlu0 %v1626, 64
    %v1710 = vpop.permute.xlu0 %1709
    %1711 = vrot.lane.b32.xlu0 %v1634, 64
    %v1712 = vpop.permute.xlu0 %1711
    %1713 = vrot.lane.b32.xlu0 %v1635, 64
    %v1714 = vpop.permute.xlu0 %1713
    %1715 = vrot.lane.b32.xlu0 %v1636, 64
    %v1716 = vpop.permute.xlu0 %1715
    %v1725 = vmul.f32 %v1686, %v1702
    %v1726 = vmul.f32 %v1688, %v1704
    %v1727 = vmul.f32 %v1690, %v1706
    %v1728 = vmul.f32 %v1692, %v1708
    %v1729 = vmul.f32 %v1694, %v1710
    %v1730 = vmul.f32 %v1696, %v1712
    %v1731 = vmul.f32 %v1698, %v1714
    %v1732 = vmul.f32 %v1700, %v1716
    %1741 = vrot.lane.b32.xlu0 %v1725, 64
    %v1742 = vpop.permute.xlu0 %1741
    %1743 = vrot.lane.b32.xlu0 %v1726, 64
    %v1744 = vpop.permute.xlu0 %1743
    %1745 = vrot.lane.b32.xlu0 %v1727, 64
    %v1746 = vpop.permute.xlu0 %1745
    %1747 = vrot.lane.b32.xlu0 %v1728, 64
    %v1748 = vpop.permute.xlu0 %1747
    %1749 = vrot.lane.b32.xlu0 %v1729, 64
    %v1750 = vpop.permute.xlu0 %1749
    %1751 = vrot.lane.b32.xlu0 %v1730, 64
    %v1752 = vpop.permute.xlu0 %1751
    %1753 = vrot.lane.b32.xlu0 %v1731, 64
    %v1754 = vpop.permute.xlu0 %1753
    %1755 = vrot.lane.b32.xlu0 %v1732, 64
    %v1756 = vpop.permute.xlu0 %1755
    %v1765 = vadd.f32 %v135, %v1742
    %v1766 = vadd.f32 %v140, %v1744
    %v1767 = vadd.f32 %v145, %v1746
    %v1768 = vadd.f32 %v150, %v1748
    %v1769 = vadd.f32 %v155, %v1750
    %v1770 = vadd.f32 %v160, %v1752
    %v1771 = vadd.f32 %v165, %v1754
    %v1772 = vadd.f32 %v170, %v1756
    %v1773 = vtanh.pop %v1765
    %v1774 = vtanh.pop %v1766
    %v1775 = vtanh.pop %v1767
    %v1776 = vtanh.pop %v1768
    %v1777 = vtanh.pop %v1769
    %v1778 = vtanh.pop %v1770
    %v1779 = vtanh.pop %v1771
    %v1780 = vtanh.pop %v1772
    %v1781 = vsub.f32 1.0, %v1686
    %v1782 = vsub.f32 1.0, %v1688
    %v1783 = vsub.f32 1.0, %v1690
    %v1784 = vsub.f32 1.0, %v1692
    %v1785 = vsub.f32 1.0, %v1694
    %v1786 = vsub.f32 1.0, %v1696
    %v1787 = vsub.f32 1.0, %v1698
    %v1788 = vsub.f32 1.0, %v1700
    %1797 = vrot.lane.b32.xlu0 %v1773, 96
    %v1798 = vpop.permute.xlu0 %1797
    %1799 = vrot.lane.b32.xlu0 %v1774, 96
    %v1800 = vpop.permute.xlu0 %1799
    %1801 = vrot.lane.b32.xlu0 %v1775, 96
    %v1802 = vpop.permute.xlu0 %1801
    %1803 = vrot.lane.b32.xlu0 %v1776, 96
    %v1804 = vpop.permute.xlu0 %1803
    %1805 = vrot.lane.b32.xlu0 %v1777, 96
    %v1806 = vpop.permute.xlu0 %1805
    %1807 = vrot.lane.b32.xlu0 %v1778, 96
    %v1808 = vpop.permute.xlu0 %1807
    %1809 = vrot.lane.b32.xlu0 %v1779, 96
    %v1810 = vpop.permute.xlu0 %1809
    %1811 = vrot.lane.b32.xlu0 %v1780, 96
    %v1812 = vpop.permute.xlu0 %1811
    %v1821 = vmul.f32 %v1781, %v1798
    %v1822 = vmul.f32 %v1782, %v1800
    %v1823 = vmul.f32 %v1783, %v1802
    %v1824 = vmul.f32 %v1784, %v1804
    %v1825 = vmul.f32 %v1785, %v1806
    %v1826 = vmul.f32 %v1786, %v1808
    %v1827 = vmul.f32 %v1787, %v1810
    %v1828 = vmul.f32 %v1788, %v1812
    %v1829 = vrot.slane %v1501, 7
    %v1830 = vrot.slane %v1503, 7
    %v1831 = vrot.slane %v1504, 7
    %v1832 = vrot.slane %v1506, 7
    %v1833 = vrot.slane %v1507, 7
    %v1834 = vrot.slane %v1508, 7
    %v1843 = vmul.f32 %v1686, %v1829
    %v1844 = vmul.f32 %v1688, %v1517
    %v1845 = vmul.f32 %v1690, %v1830
    %v1846 = vmul.f32 %v1692, %v1831
    %v1847 = vmul.f32 %v1694, %v1547
    %v1848 = vmul.f32 %v1696, %v1832
    %v1849 = vmul.f32 %v1698, %v1833
    %v1850 = vmul.f32 %v1700, %v1834
    %v1851 = vadd.f32 %v1821, %v1843
    %v1852 = vadd.f32 %v1822, %v1844
    %v1853 = vadd.f32 %v1823, %v1845
    %v1854 = vadd.f32 %v1824, %v1846
    %v1855 = vadd.f32 %v1825, %v1847
    %v1856 = vadd.f32 %v1826, %v1848
    %v1857 = vadd.f32 %v1827, %v1849
    %v1858 = vadd.f32 %v1828, %v1850
    %v1867 = vrot.slane %v1852, 7
    %v1868 = vsel %vm494, %v1867, %v1851
    %v1869 = vrot.slane %v1853, 6
    %v1870 = vsel %vm497, %v1869, %v1868
    %v1871 = vrot.slane %v1854, 5
    %v1872 = vsel %vm500, %v1871, %v1870
    %v1873 = vrot.slane %v1855, 4
    %v1874 = vrot.slane %v1856, 3
    %v1875 = vsel %vm482, %v1874, %v1873
    %v1876 = vrot.slane %v1857, 2
    %v1877 = vsel %vm485, %v1876, %v1875
    %v1878 = vrot.slane %v1858, 1
    %v1879 = vsel %vm488, %v1878, %v1877
    %1880 = vrot.lane.b32.xlu0 %v1872, 96
    %v1881 = vpop.permute.xlu0 %1880
    %1882 = vrot.lane.b32.xlu0 %v1879, 96
    %v1883 = vpop.permute.xlu0 %1882
    %s1886 = scalar_lea.vmem [#allocation2], 32
    %vm1887 = vcmask 261124
    %1888 = vst.msk [vmem:[%s1886 - $0x4] sm:$0xf0] %vm1887, %v1881
    %vm1889 = vcmask 257024
    %1890 = vst.msk [vmem:[%s1886 + $0x4] sm:$0xf] %vm1889, %v1883
    %v1891 = vrot.slane %v1851, 4
    %v1892 = vrot.slane %v1852, 3
    %v1893 = vsel %vm482, %v1892, %v1891
    %v1894 = vrot.slane %v1853, 2
    %v1895 = vsel %vm485, %v1894, %v1893
    %v1896 = vrot.slane %v1854, 1
    %v1897 = vsel %vm488, %v1896, %v1895
    %v1898 = vsel %vm491, %v1855, %v1897
    %v1899 = vrot.slane %v1856, 7
    %v1900 = vsel %vm494, %v1899, %v1898
    %v1901 = vrot.slane %v1857, 6
    %v1902 = vsel %vm497, %v1901, %v1900
    %v1903 = vrot.slane %v1858, 5
    %v1904 = vsel %vm500, %v1903, %v1902
    %1905 = vrot.lane.b32.xlu0 %v1904, 96
    %v1906 = vpop.permute.xlu0 %1905
    %v1907 = vsel %vm184, %v1906, 0
    %1909 = vmatprep.subr.mxu0 0.0
    %1910 = vmatpush1.msra.mxu0 %v173
    %1911 = vmatprep.subr.mxu0 0.0
    %1912 = vmatpush1.msra.mxu0 %v174
    %1913 = vmatprep.subr.mxu0 0.0
    %1914 = vmatpush1.msra.mxu0 %v175
    %1915 = vmatprep.subr.mxu0 0.0
    %1916 = vmatpush1.msra.mxu0 %v176
    %1917 = vmatprep.subr.mxu0 0.0
    %1918 = vmatpush1.msra.mxu0 0.0
    %1919 = vmatprep.subr.mxu0 0.0
    %1920 = vmatpush1.msra.mxu0 0.0
    %1921 = vmatprep.subr.mxu0 0.0
    %1922 = vmatpush1.msra.mxu0 0.0
    %1923 = vmatprep.subr.mxu0 0.0
    %1924 = vmatpush1.msra.mxu0 0.0
    %1925 = vmatprep.subr.mxu0 0.0
    %1926 = vmatpush1.msra.mxu0 0.0
    %1927 = vmatprep.subr.mxu0 0.0
    %1928 = vmatpush1.msra.mxu0 0.0
    %1929 = vmatprep.subr.mxu0 0.0
    %1930 = vmatpush1.msra.mxu0 0.0
    %1931 = vmatprep.subr.mxu0 0.0
    %1932 = vmatpush1.msra.mxu0 0.0
    %1933 = vmatprep.subr.mxu0 0.0
    %1934 = vmatpush1.msra.mxu0 0.0
    %1935 = vmatprep.subr.mxu0 0.0
    %1936 = vmatpush1.msra.mxu0 0.0
    %1937 = vmatprep.subr.mxu0 0.0
    %1938 = vmatpush1.msra.mxu0 0.0
    %1939 = vmatprep.subr.mxu0 0.0
    %1940 = vmatpush1.msra.mxu0 0.0
    %1941 = vmatprep.subr.mxu0 0.0
    %1942 = vmatpush1.msra.mxu0 0.0
    %1943 = vmatprep.subr.mxu0 0.0
    %1944 = vmatpush1.msra.mxu0 0.0
    %1945 = vmatprep.subr.mxu0 0.0
    %1946 = vmatpush1.msra.mxu0 0.0
    %1947 = vmatprep.subr.mxu0 0.0
    %1948 = vmatpush1.msra.mxu0 0.0
    %1949 = vmatprep.subr.mxu0 0.0
    %1950 = vmatpush1.msra.mxu0 0.0
    %1951 = vmatprep.subr.mxu0 0.0
    %1952 = vmatpush1.msra.mxu0 0.0
    %1953 = vmatprep.subr.mxu0 0.0
    %1954 = vmatpush1.msra.mxu0 0.0
    %1955 = vmatprep.subr.mxu0 0.0
    %1956 = vmatpush1.msra.mxu0 0.0
    %1957 = vmatprep.subr.mxu0 0.0
    %1958 = vmatpush1.msra.mxu0 0.0
    %1959 = vmatprep.subr.mxu0 0.0
    %1960 = vmatpush1.msra.mxu0 0.0
    %1961 = vmatprep.subr.mxu0 0.0
    %1962 = vmatpush1.msra.mxu0 0.0
    %1963 = vmatprep.subr.mxu0 0.0
    %1964 = vmatpush1.msra.mxu0 0.0
    %1965 = vmatprep.subr.mxu0 0.0
    %1966 = vmatpush1.msra.mxu0 0.0
    %1967 = vmatprep.subr.mxu0 0.0
    %1968 = vmatpush1.msra.mxu0 0.0
    %1969 = vmatprep.subr.mxu0 0.0
    %1970 = vmatpush1.msra.mxu0 0.0
    %1971 = vmatprep.subr.mxu0 0.0
    %1972 = vmatpush1.msra.mxu0 0.0
    %1973 = vmatprep.mubr.f32.mxu0 0.0
    %1974 = vmatmul.mubr.f32.gmra.mrb[0].mxu0 %v1907
    %v1975 = vpop.f32.mrb[0].mxu0
    %v1976 = vadd.f32 %v182, %v1975
    %v1977 = vpop.f32.mrb[0].mxu0
    %1978 = vdwg.mxu0
    %v1980 = vrot.slane %v1976, 3
    %v1981 = vrot.slane %v1976, 4
    %v1982 = vrot.slane %v1976, 5
    %v1983 = vrot.slane %v1976, 6
    %v1984 = vrot.slane %v1976, 7
    %v1985 = vrot.slane %v1976, 1
    %v1986 = vrot.slane %v1976, 2
    %v1995 = vadd.f32 %v135, %v1980
    %v1996 = vadd.f32 %v140, %v1981
    %v1997 = vadd.f32 %v145, %v1982
    %v1998 = vadd.f32 %v150, %v1983
    %v1999 = vadd.f32 %v155, %v1984
    %v2000 = vadd.f32 %v160, %v1976
    %v2001 = vadd.f32 %v165, %v1985
    %v2002 = vadd.f32 %v170, %v1986
    %v2003 = vxor.u32 %v1995, 2147483648
    %v2004 = vxor.u32 %v1996, 2147483648
    %v2005 = vxor.u32 %v1997, 2147483648
    %v2006 = vxor.u32 %v1998, 2147483648
    %v2007 = vxor.u32 %v1999, 2147483648
    %v2008 = vxor.u32 %v2000, 2147483648
    %v2009 = vxor.u32 %v2001, 2147483648
    %v2010 = vxor.u32 %v2002, 2147483648
    %v2011 = vmul.f32 %v2003, 1.442695
    %v2012 = vpow.pop %v2011
    %v2013 = vmul.f32 %v2004, 1.442695
    %v2014 = vpow.pop %v2013
    %v2015 = vmul.f32 %v2005, 1.442695
    %v2016 = vpow.pop %v2015
    %v2017 = vmul.f32 %v2006, 1.442695
    %v2018 = vpow.pop %v2017
    %v2019 = vmul.f32 %v2007, 1.442695
    %v2020 = vpow.pop %v2019
    %v2021 = vmul.f32 %v2008, 1.442695
    %v2022 = vpow.pop %v2021
    %v2023 = vmul.f32 %v2009, 1.442695
    %v2024 = vpow.pop %v2023
    %v2025 = vmul.f32 %v2010, 1.442695
    %v2026 = vpow.pop %v2025
    %v2027 = vadd.f32 %v2012, 1.0
    %v2028 = vadd.f32 %v2014, 1.0
    %v2029 = vadd.f32 %v2016, 1.0
    %v2030 = vadd.f32 %v2018, 1.0
    %v2031 = vadd.f32 %v2020, 1.0
    %v2032 = vadd.f32 %v2022, 1.0
    %v2033 = vadd.f32 %v2024, 1.0
    %v2034 = vadd.f32 %v2026, 1.0
    %v2035 = vrcp.pop %v2027
    %v2036 = vmul.f32 1.0, %v2035
    %v2037 = vrcp.pop %v2028
    %v2038 = vmul.f32 1.0, %v2037
    %v2039 = vrcp.pop %v2029
    %v2040 = vmul.f32 1.0, %v2039
    %v2041 = vrcp.pop %v2030
    %v2042 = vmul.f32 1.0, %v2041
    %v2043 = vrcp.pop %v2031
    %v2044 = vmul.f32 1.0, %v2043
    %v2045 = vrcp.pop %v2032
    %v2046 = vmul.f32 1.0, %v2045
    %v2047 = vrcp.pop %v2033
    %v2048 = vmul.f32 1.0, %v2047
    %v2049 = vrcp.pop %v2034
    %v2050 = vmul.f32 1.0, %v2049
    %2051 = vrot.lane.b32.xlu0 %v1980, 64
    %v2052 = vpop.permute.xlu0 %2051
    %2053 = vrot.lane.b32.xlu0 %v1981, 64
    %v2054 = vpop.permute.xlu0 %2053
    %2055 = vrot.lane.b32.xlu0 %v1982, 64
    %v2056 = vpop.permute.xlu0 %2055
    %2057 = vrot.lane.b32.xlu0 %v1983, 64
    %v2058 = vpop.permute.xlu0 %2057
    %2059 = vrot.lane.b32.xlu0 %v1984, 64
    %v2060 = vpop.permute.xlu0 %2059
    %2061 = vrot.lane.b32.xlu0 %v1976, 64
    %v2062 = vpop.permute.xlu0 %2061
    %2063 = vrot.lane.b32.xlu0 %v1985, 64
    %v2064 = vpop.permute.xlu0 %2063
    %2065 = vrot.lane.b32.xlu0 %v1986, 64
    %v2066 = vpop.permute.xlu0 %2065
    %v2075 = vmul.f32 %v2036, %v2052
    %v2076 = vmul.f32 %v2038, %v2054
    %v2077 = vmul.f32 %v2040, %v2056
    %v2078 = vmul.f32 %v2042, %v2058
    %v2079 = vmul.f32 %v2044, %v2060
    %v2080 = vmul.f32 %v2046, %v2062
    %v2081 = vmul.f32 %v2048, %v2064
    %v2082 = vmul.f32 %v2050, %v2066
    %2091 = vrot.lane.b32.xlu0 %v2075, 64
    %v2092 = vpop.permute.xlu0 %2091
    %2093 = vrot.lane.b32.xlu0 %v2076, 64
    %v2094 = vpop.permute.xlu0 %2093
    %2095 = vrot.lane.b32.xlu0 %v2077, 64
    %v2096 = vpop.permute.xlu0 %2095
    %2097 = vrot.lane.b32.xlu0 %v2078, 64
    %v2098 = vpop.permute.xlu0 %2097
    %2099 = vrot.lane.b32.xlu0 %v2079, 64
    %v2100 = vpop.permute.xlu0 %2099
    %2101 = vrot.lane.b32.xlu0 %v2080, 64
    %v2102 = vpop.permute.xlu0 %2101
    %2103 = vrot.lane.b32.xlu0 %v2081, 64
    %v2104 = vpop.permute.xlu0 %2103
    %2105 = vrot.lane.b32.xlu0 %v2082, 64
    %v2106 = vpop.permute.xlu0 %2105
    %v2115 = vadd.f32 %v135, %v2092
    %v2116 = vadd.f32 %v140, %v2094
    %v2117 = vadd.f32 %v145, %v2096
    %v2118 = vadd.f32 %v150, %v2098
    %v2119 = vadd.f32 %v155, %v2100
    %v2120 = vadd.f32 %v160, %v2102
    %v2121 = vadd.f32 %v165, %v2104
    %v2122 = vadd.f32 %v170, %v2106
    %v2123 = vtanh.pop %v2115
    %v2124 = vtanh.pop %v2116
    %v2125 = vtanh.pop %v2117
    %v2126 = vtanh.pop %v2118
    %v2127 = vtanh.pop %v2119
    %v2128 = vtanh.pop %v2120
    %v2129 = vtanh.pop %v2121
    %v2130 = vtanh.pop %v2122
    %v2131 = vsub.f32 1.0, %v2036
    %v2132 = vsub.f32 1.0, %v2038
    %v2133 = vsub.f32 1.0, %v2040
    %v2134 = vsub.f32 1.0, %v2042
    %v2135 = vsub.f32 1.0, %v2044
    %v2136 = vsub.f32 1.0, %v2046
    %v2137 = vsub.f32 1.0, %v2048
    %v2138 = vsub.f32 1.0, %v2050
    %2147 = vrot.lane.b32.xlu0 %v2123, 96
    %v2148 = vpop.permute.xlu0 %2147
    %2149 = vrot.lane.b32.xlu0 %v2124, 96
    %v2150 = vpop.permute.xlu0 %2149
    %2151 = vrot.lane.b32.xlu0 %v2125, 96
    %v2152 = vpop.permute.xlu0 %2151
    %2153 = vrot.lane.b32.xlu0 %v2126, 96
    %v2154 = vpop.permute.xlu0 %2153
    %2155 = vrot.lane.b32.xlu0 %v2127, 96
    %v2156 = vpop.permute.xlu0 %2155
    %2157 = vrot.lane.b32.xlu0 %v2128, 96
    %v2158 = vpop.permute.xlu0 %2157
    %2159 = vrot.lane.b32.xlu0 %v2129, 96
    %v2160 = vpop.permute.xlu0 %2159
    %2161 = vrot.lane.b32.xlu0 %v2130, 96
    %v2162 = vpop.permute.xlu0 %2161
    %v2171 = vmul.f32 %v2131, %v2148
    %v2172 = vmul.f32 %v2132, %v2150
    %v2173 = vmul.f32 %v2133, %v2152
    %v2174 = vmul.f32 %v2134, %v2154
    %v2175 = vmul.f32 %v2135, %v2156
    %v2176 = vmul.f32 %v2136, %v2158
    %v2177 = vmul.f32 %v2137, %v2160
    %v2178 = vmul.f32 %v2138, %v2162
    %v2179 = vrot.slane %v1851, 7
    %v2180 = vrot.slane %v1853, 7
    %v2181 = vrot.slane %v1854, 7
    %v2182 = vrot.slane %v1855, 7
    %v2183 = vrot.slane %v1857, 7
    %v2184 = vrot.slane %v1858, 7
    %v2193 = vmul.f32 %v2036, %v2179
    %v2194 = vmul.f32 %v2038, %v1867
    %v2195 = vmul.f32 %v2040, %v2180
    %v2196 = vmul.f32 %v2042, %v2181
    %v2197 = vmul.f32 %v2044, %v2182
    %v2198 = vmul.f32 %v2046, %v1899
    %v2199 = vmul.f32 %v2048, %v2183
    %v2200 = vmul.f32 %v2050, %v2184
    %v2201 = vadd.f32 %v2171, %v2193
    %v2202 = vadd.f32 %v2172, %v2194
    %v2203 = vadd.f32 %v2173, %v2195
    %v2204 = vadd.f32 %v2174, %v2196
    %v2205 = vadd.f32 %v2175, %v2197
    %v2206 = vadd.f32 %v2176, %v2198
    %v2207 = vadd.f32 %v2177, %v2199
    %v2208 = vadd.f32 %v2178, %v2200
    %v2217 = vrot.slane %v2202, 7
    %v2218 = vsel %vm497, %v2217, %v2201
    %v2219 = vrot.slane %v2203, 6
    %v2220 = vsel %vm500, %v2219, %v2218
    %v2221 = vrot.slane %v2204, 5
    %v2222 = vrot.slane %v2205, 4
    %v2223 = vsel %vm482, %v2222, %v2221
    %v2224 = vrot.slane %v2206, 3
    %v2225 = vsel %vm485, %v2224, %v2223
    %v2226 = vrot.slane %v2207, 2
    %v2227 = vsel %vm488, %v2226, %v2225
    %v2228 = vrot.slane %v2208, 1
    %v2229 = vsel %vm491, %v2228, %v2227
    %2230 = vrot.lane.b32.xlu0 %v2220, 96
    %v2231 = vpop.permute.xlu0 %2230
    %2232 = vrot.lane.b32.xlu0 %v2229, 96
    %v2233 = vpop.permute.xlu0 %2232
    %s2236 = scalar_lea.vmem [#allocation2], 40
    %vm2237 = vcmask 261125
    %2238 = vst.msk [vmem:[%s2236 - $0x5] sm:$0xe0] %vm2237, %v2231
    %vm2239 = vcmask 258048
    %2240 = vst.msk [vmem:[%s2236 + $0x3] sm:$0x1f] %vm2239, %v2233
    %v2241 = vrot.slane %v2201, 5
    %v2242 = vrot.slane %v2202, 4
    %v2243 = vsel %vm482, %v2242, %v2241
    %v2244 = vrot.slane %v2203, 3
    %v2245 = vsel %vm485, %v2244, %v2243
    %v2246 = vrot.slane %v2204, 2
    %v2247 = vsel %vm488, %v2246, %v2245
    %v2248 = vrot.slane %v2205, 1
    %v2249 = vsel %vm491, %v2248, %v2247
    %v2250 = vsel %vm494, %v2206, %v2249
    %v2251 = vrot.slane %v2207, 7
    %v2252 = vsel %vm497, %v2251, %v2250
    %v2253 = vrot.slane %v2208, 6
    %v2254 = vsel %vm500, %v2253, %v2252
    %2255 = vrot.lane.b32.xlu0 %v2254, 96
    %v2256 = vpop.permute.xlu0 %2255
    %v2257 = vsel %vm184, %v2256, 0
    %2259 = vmatprep.subr.mxu0 0.0
    %2260 = vmatpush1.msra.mxu0 %v173
    %2261 = vmatprep.subr.mxu0 0.0
    %2262 = vmatpush1.msra.mxu0 %v174
    %2263 = vmatprep.subr.mxu0 0.0
    %2264 = vmatpush1.msra.mxu0 %v175
    %2265 = vmatprep.subr.mxu0 0.0
    %2266 = vmatpush1.msra.mxu0 %v176
    %2267 = vmatprep.subr.mxu0 0.0
    %2268 = vmatpush1.msra.mxu0 0.0
    %2269 = vmatprep.subr.mxu0 0.0
    %2270 = vmatpush1.msra.mxu0 0.0
    %2271 = vmatprep.subr.mxu0 0.0
    %2272 = vmatpush1.msra.mxu0 0.0
    %2273 = vmatprep.subr.mxu0 0.0
    %2274 = vmatpush1.msra.mxu0 0.0
    %2275 = vmatprep.subr.mxu0 0.0
    %2276 = vmatpush1.msra.mxu0 0.0
    %2277 = vmatprep.subr.mxu0 0.0
    %2278 = vmatpush1.msra.mxu0 0.0
    %2279 = vmatprep.subr.mxu0 0.0
    %2280 = vmatpush1.msra.mxu0 0.0
    %2281 = vmatprep.subr.mxu0 0.0
    %2282 = vmatpush1.msra.mxu0 0.0
    %2283 = vmatprep.subr.mxu0 0.0
    %2284 = vmatpush1.msra.mxu0 0.0
    %2285 = vmatprep.subr.mxu0 0.0
    %2286 = vmatpush1.msra.mxu0 0.0
    %2287 = vmatprep.subr.mxu0 0.0
    %2288 = vmatpush1.msra.mxu0 0.0
    %2289 = vmatprep.subr.mxu0 0.0
    %2290 = vmatpush1.msra.mxu0 0.0
    %2291 = vmatprep.subr.mxu0 0.0
    %2292 = vmatpush1.msra.mxu0 0.0
    %2293 = vmatprep.subr.mxu0 0.0
    %2294 = vmatpush1.msra.mxu0 0.0
    %2295 = vmatprep.subr.mxu0 0.0
    %2296 = vmatpush1.msra.mxu0 0.0
    %2297 = vmatprep.subr.mxu0 0.0
    %2298 = vmatpush1.msra.mxu0 0.0
    %2299 = vmatprep.subr.mxu0 0.0
    %2300 = vmatpush1.msra.mxu0 0.0
    %2301 = vmatprep.subr.mxu0 0.0
    %2302 = vmatpush1.msra.mxu0 0.0
    %2303 = vmatprep.subr.mxu0 0.0
    %2304 = vmatpush1.msra.mxu0 0.0
    %2305 = vmatprep.subr.mxu0 0.0
    %2306 = vmatpush1.msra.mxu0 0.0
    %2307 = vmatprep.subr.mxu0 0.0
    %2308 = vmatpush1.msra.mxu0 0.0
    %2309 = vmatprep.subr.mxu0 0.0
    %2310 = vmatpush1.msra.mxu0 0.0
    %2311 = vmatprep.subr.mxu0 0.0
    %2312 = vmatpush1.msra.mxu0 0.0
    %2313 = vmatprep.subr.mxu0 0.0
    %2314 = vmatpush1.msra.mxu0 0.0
    %2315 = vmatprep.subr.mxu0 0.0
    %2316 = vmatpush1.msra.mxu0 0.0
    %2317 = vmatprep.subr.mxu0 0.0
    %2318 = vmatpush1.msra.mxu0 0.0
    %2319 = vmatprep.subr.mxu0 0.0
    %2320 = vmatpush1.msra.mxu0 0.0
    %2321 = vmatprep.subr.mxu0 0.0
    %2322 = vmatpush1.msra.mxu0 0.0
    %2323 = vmatprep.mubr.f32.mxu0 0.0
    %2324 = vmatmul.mubr.f32.gmra.mrb[0].mxu0 %v2257
    %v2325 = vpop.f32.mrb[0].mxu0
    %v2326 = vadd.f32 %v182, %v2325
    %v2327 = vpop.f32.mrb[0].mxu0
    %2328 = vdwg.mxu0
    %v2330 = vrot.slane %v2326, 2
    %v2331 = vrot.slane %v2326, 3
    %v2332 = vrot.slane %v2326, 4
    %v2333 = vrot.slane %v2326, 5
    %v2334 = vrot.slane %v2326, 6
    %v2335 = vrot.slane %v2326, 7
    %v2336 = vrot.slane %v2326, 1
    %v2345 = vadd.f32 %v135, %v2330
    %v2346 = vadd.f32 %v140, %v2331
    %v2347 = vadd.f32 %v145, %v2332
    %v2348 = vadd.f32 %v150, %v2333
    %v2349 = vadd.f32 %v155, %v2334
    %v2350 = vadd.f32 %v160, %v2335
    %v2351 = vadd.f32 %v165, %v2326
    %v2352 = vadd.f32 %v170, %v2336
    %v2353 = vxor.u32 %v2345, 2147483648
    %v2354 = vxor.u32 %v2346, 2147483648
    %v2355 = vxor.u32 %v2347, 2147483648
    %v2356 = vxor.u32 %v2348, 2147483648
    %v2357 = vxor.u32 %v2349, 2147483648
    %v2358 = vxor.u32 %v2350, 2147483648
    %v2359 = vxor.u32 %v2351, 2147483648
    %v2360 = vxor.u32 %v2352, 2147483648
    %v2361 = vmul.f32 %v2353, 1.442695
    %v2362 = vpow.pop %v2361
    %v2363 = vmul.f32 %v2354, 1.442695
    %v2364 = vpow.pop %v2363
    %v2365 = vmul.f32 %v2355, 1.442695
    %v2366 = vpow.pop %v2365
    %v2367 = vmul.f32 %v2356, 1.442695
    %v2368 = vpow.pop %v2367
    %v2369 = vmul.f32 %v2357, 1.442695
    %v2370 = vpow.pop %v2369
    %v2371 = vmul.f32 %v2358, 1.442695
    %v2372 = vpow.pop %v2371
    %v2373 = vmul.f32 %v2359, 1.442695
    %v2374 = vpow.pop %v2373
    %v2375 = vmul.f32 %v2360, 1.442695
    %v2376 = vpow.pop %v2375
    %v2377 = vadd.f32 %v2362, 1.0
    %v2378 = vadd.f32 %v2364, 1.0
    %v2379 = vadd.f32 %v2366, 1.0
    %v2380 = vadd.f32 %v2368, 1.0
    %v2381 = vadd.f32 %v2370, 1.0
    %v2382 = vadd.f32 %v2372, 1.0
    %v2383 = vadd.f32 %v2374, 1.0
    %v2384 = vadd.f32 %v2376, 1.0
    %v2385 = vrcp.pop %v2377
    %v2386 = vmul.f32 1.0, %v2385
    %v2387 = vrcp.pop %v2378
    %v2388 = vmul.f32 1.0, %v2387
    %v2389 = vrcp.pop %v2379
    %v2390 = vmul.f32 1.0, %v2389
    %v2391 = vrcp.pop %v2380
    %v2392 = vmul.f32 1.0, %v2391
    %v2393 = vrcp.pop %v2381
    %v2394 = vmul.f32 1.0, %v2393
    %v2395 = vrcp.pop %v2382
    %v2396 = vmul.f32 1.0, %v2395
    %v2397 = vrcp.pop %v2383
    %v2398 = vmul.f32 1.0, %v2397
    %v2399 = vrcp.pop %v2384
    %v2400 = vmul.f32 1.0, %v2399
    %2401 = vrot.lane.b32.xlu0 %v2330, 64
    %v2402 = vpop.permute.xlu0 %2401
    %2403 = vrot.lane.b32.xlu0 %v2331, 64
    %v2404 = vpop.permute.xlu0 %2403
    %2405 = vrot.lane.b32.xlu0 %v2332, 64
    %v2406 = vpop.permute.xlu0 %2405
    %2407 = vrot.lane.b32.xlu0 %v2333, 64
    %v2408 = vpop.permute.xlu0 %2407
    %2409 = vrot.lane.b32.xlu0 %v2334, 64
    %v2410 = vpop.permute.xlu0 %2409
    %2411 = vrot.lane.b32.xlu0 %v2335, 64
    %v2412 = vpop.permute.xlu0 %2411
    %2413 = vrot.lane.b32.xlu0 %v2326, 64
    %v2414 = vpop.permute.xlu0 %2413
    %2415 = vrot.lane.b32.xlu0 %v2336, 64
    %v2416 = vpop.permute.xlu0 %2415
    %v2425 = vmul.f32 %v2386, %v2402
    %v2426 = vmul.f32 %v2388, %v2404
    %v2427 = vmul.f32 %v2390, %v2406
    %v2428 = vmul.f32 %v2392, %v2408
    %v2429 = vmul.f32 %v2394, %v2410
    %v2430 = vmul.f32 %v2396, %v2412
    %v2431 = vmul.f32 %v2398, %v2414
    %v2432 = vmul.f32 %v2400, %v2416
    %2441 = vrot.lane.b32.xlu0 %v2425, 64
    %v2442 = vpop.permute.xlu0 %2441
    %2443 = vrot.lane.b32.xlu0 %v2426, 64
    %v2444 = vpop.permute.xlu0 %2443
    %2445 = vrot.lane.b32.xlu0 %v2427, 64
    %v2446 = vpop.permute.xlu0 %2445
    %2447 = vrot.lane.b32.xlu0 %v2428, 64
    %v2448 = vpop.permute.xlu0 %2447
    %2449 = vrot.lane.b32.xlu0 %v2429, 64
    %v2450 = vpop.permute.xlu0 %2449
    %2451 = vrot.lane.b32.xlu0 %v2430, 64
    %v2452 = vpop.permute.xlu0 %2451
    %2453 = vrot.lane.b32.xlu0 %v2431, 64
    %v2454 = vpop.permute.xlu0 %2453
    %2455 = vrot.lane.b32.xlu0 %v2432, 64
    %v2456 = vpop.permute.xlu0 %2455
    %v2465 = vadd.f32 %v135, %v2442
    %v2466 = vadd.f32 %v140, %v2444
    %v2467 = vadd.f32 %v145, %v2446
    %v2468 = vadd.f32 %v150, %v2448
    %v2469 = vadd.f32 %v155, %v2450
    %v2470 = vadd.f32 %v160, %v2452
    %v2471 = vadd.f32 %v165, %v2454
    %v2472 = vadd.f32 %v170, %v2456
    %v2473 = vtanh.pop %v2465
    %v2474 = vtanh.pop %v2466
    %v2475 = vtanh.pop %v2467
    %v2476 = vtanh.pop %v2468
    %v2477 = vtanh.pop %v2469
    %v2478 = vtanh.pop %v2470
    %v2479 = vtanh.pop %v2471
    %v2480 = vtanh.pop %v2472
    %v2481 = vsub.f32 1.0, %v2386
    %v2482 = vsub.f32 1.0, %v2388
    %v2483 = vsub.f32 1.0, %v2390
    %v2484 = vsub.f32 1.0, %v2392
    %v2485 = vsub.f32 1.0, %v2394
    %v2486 = vsub.f32 1.0, %v2396
    %v2487 = vsub.f32 1.0, %v2398
    %v2488 = vsub.f32 1.0, %v2400
    %2497 = vrot.lane.b32.xlu0 %v2473, 96
    %v2498 = vpop.permute.xlu0 %2497
    %2499 = vrot.lane.b32.xlu0 %v2474, 96
    %v2500 = vpop.permute.xlu0 %2499
    %2501 = vrot.lane.b32.xlu0 %v2475, 96
    %v2502 = vpop.permute.xlu0 %2501
    %2503 = vrot.lane.b32.xlu0 %v2476, 96
    %v2504 = vpop.permute.xlu0 %2503
    %2505 = vrot.lane.b32.xlu0 %v2477, 96
    %v2506 = vpop.permute.xlu0 %2505
    %2507 = vrot.lane.b32.xlu0 %v2478, 96
    %v2508 = vpop.permute.xlu0 %2507
    %2509 = vrot.lane.b32.xlu0 %v2479, 96
    %v2510 = vpop.permute.xlu0 %2509
    %2511 = vrot.lane.b32.xlu0 %v2480, 96
    %v2512 = vpop.permute.xlu0 %2511
    %v2521 = vmul.f32 %v2481, %v2498
    %v2522 = vmul.f32 %v2482, %v2500
    %v2523 = vmul.f32 %v2483, %v2502
    %v2524 = vmul.f32 %v2484, %v2504
    %v2525 = vmul.f32 %v2485, %v2506
    %v2526 = vmul.f32 %v2486, %v2508
    %v2527 = vmul.f32 %v2487, %v2510
    %v2528 = vmul.f32 %v2488, %v2512
    %v2529 = vrot.slane %v2201, 7
    %v2530 = vrot.slane %v2203, 7
    %v2531 = vrot.slane %v2204, 7
    %v2532 = vrot.slane %v2205, 7
    %v2533 = vrot.slane %v2206, 7
    %v2534 = vrot.slane %v2208, 7
    %v2543 = vmul.f32 %v2386, %v2529
    %v2544 = vmul.f32 %v2388, %v2217
    %v2545 = vmul.f32 %v2390, %v2530
    %v2546 = vmul.f32 %v2392, %v2531
    %v2547 = vmul.f32 %v2394, %v2532
    %v2548 = vmul.f32 %v2396, %v2533
    %v2549 = vmul.f32 %v2398, %v2251
    %v2550 = vmul.f32 %v2400, %v2534
    %v2551 = vadd.f32 %v2521, %v2543
    %v2552 = vadd.f32 %v2522, %v2544
    %v2553 = vadd.f32 %v2523, %v2545
    %v2554 = vadd.f32 %v2524, %v2546
    %v2555 = vadd.f32 %v2525, %v2547
    %v2556 = vadd.f32 %v2526, %v2548
    %v2557 = vadd.f32 %v2527, %v2549
    %v2558 = vadd.f32 %v2528, %v2550
    %v2567 = vrot.slane %v2552, 7
    %v2568 = vsel %vm500, %v2567, %v2551
    %v2569 = vrot.slane %v2553, 6
    %v2570 = vrot.slane %v2554, 5
    %v2571 = vsel %vm482, %v2570, %v2569
    %v2572 = vrot.slane %v2555, 4
    %v2573 = vsel %vm485, %v2572, %v2571
    %v2574 = vrot.slane %v2556, 3
    %v2575 = vsel %vm488, %v2574, %v2573
    %v2576 = vrot.slane %v2557, 2
    %v2577 = vsel %vm491, %v2576, %v2575
    %v2578 = vrot.slane %v2558, 1
    %v2579 = vsel %vm494, %v2578, %v2577
    %2580 = vrot.lane.b32.xlu0 %v2568, 96
    %v2581 = vpop.permute.xlu0 %2580
    %2582 = vrot.lane.b32.xlu0 %v2579, 96
    %v2583 = vpop.permute.xlu0 %2582
    %s2586 = scalar_lea.vmem [#allocation2], 48
    %vm2587 = vcmask 261126
    %2588 = vst.msk [vmem:[%s2586 - $0x6] sm:$0xc0] %vm2587, %v2581
    %vm2589 = vcmask 259072
    %2590 = vst.msk [vmem:[%s2586 + $0x2] sm:$0x3f] %vm2589, %v2583
    %v2591 = vrot.slane %v2551, 6
    %v2592 = vrot.slane %v2552, 5
    %v2593 = vsel %vm482, %v2592, %v2591
    %v2594 = vrot.slane %v2553, 4
    %v2595 = vsel %vm485, %v2594, %v2593
    %v2596 = vrot.slane %v2554, 3
    %v2597 = vsel %vm488, %v2596, %v2595
    %v2598 = vrot.slane %v2555, 2
    %v2599 = vsel %vm491, %v2598, %v2597
    %v2600 = vrot.slane %v2556, 1
    %v2601 = vsel %vm494, %v2600, %v2599
    %v2602 = vsel %vm497, %v2557, %v2601
    %v2603 = vrot.slane %v2558, 7
    %v2604 = vsel %vm500, %v2603, %v2602
    %2605 = vrot.lane.b32.xlu0 %v2604, 96
    %v2606 = vpop.permute.xlu0 %2605
    %v2607 = vsel %vm184, %v2606, 0
    %2609 = vmatprep.subr.mxu0 0.0
    %2610 = vmatpush1.msra.mxu0 %v173
    %2611 = vmatprep.subr.mxu0 0.0
    %2612 = vmatpush1.msra.mxu0 %v174
    %2613 = vmatprep.subr.mxu0 0.0
    %2614 = vmatpush1.msra.mxu0 %v175
    %2615 = vmatprep.subr.mxu0 0.0
    %2616 = vmatpush1.msra.mxu0 %v176
    %2617 = vmatprep.subr.mxu0 0.0
    %2618 = vmatpush1.msra.mxu0 0.0
    %2619 = vmatprep.subr.mxu0 0.0
    %2620 = vmatpush1.msra.mxu0 0.0
    %2621 = vmatprep.subr.mxu0 0.0
    %2622 = vmatpush1.msra.mxu0 0.0
    %2623 = vmatprep.subr.mxu0 0.0
    %2624 = vmatpush1.msra.mxu0 0.0
    %2625 = vmatprep.subr.mxu0 0.0
    %2626 = vmatpush1.msra.mxu0 0.0
    %2627 = vmatprep.subr.mxu0 0.0
    %2628 = vmatpush1.msra.mxu0 0.0
    %2629 = vmatprep.subr.mxu0 0.0
    %2630 = vmatpush1.msra.mxu0 0.0
    %2631 = vmatprep.subr.mxu0 0.0
    %2632 = vmatpush1.msra.mxu0 0.0
    %2633 = vmatprep.subr.mxu0 0.0
    %2634 = vmatpush1.msra.mxu0 0.0
    %2635 = vmatprep.subr.mxu0 0.0
    %2636 = vmatpush1.msra.mxu0 0.0
    %2637 = vmatprep.subr.mxu0 0.0
    %2638 = vmatpush1.msra.mxu0 0.0
    %2639 = vmatprep.subr.mxu0 0.0
    %2640 = vmatpush1.msra.mxu0 0.0
    %2641 = vmatprep.subr.mxu0 0.0
    %2642 = vmatpush1.msra.mxu0 0.0
    %2643 = vmatprep.subr.mxu0 0.0
    %2644 = vmatpush1.msra.mxu0 0.0
    %2645 = vmatprep.subr.mxu0 0.0
    %2646 = vmatpush1.msra.mxu0 0.0
    %2647 = vmatprep.subr.mxu0 0.0
    %2648 = vmatpush1.msra.mxu0 0.0
    %2649 = vmatprep.subr.mxu0 0.0
    %2650 = vmatpush1.msra.mxu0 0.0
    %2651 = vmatprep.subr.mxu0 0.0
    %2652 = vmatpush1.msra.mxu0 0.0
    %2653 = vmatprep.subr.mxu0 0.0
    %2654 = vmatpush1.msra.mxu0 0.0
    %2655 = vmatprep.subr.mxu0 0.0
    %2656 = vmatpush1.msra.mxu0 0.0
    %2657 = vmatprep.subr.mxu0 0.0
    %2658 = vmatpush1.msra.mxu0 0.0
    %2659 = vmatprep.subr.mxu0 0.0
    %2660 = vmatpush1.msra.mxu0 0.0
    %2661 = vmatprep.subr.mxu0 0.0
    %2662 = vmatpush1.msra.mxu0 0.0
    %2663 = vmatprep.subr.mxu0 0.0
    %2664 = vmatpush1.msra.mxu0 0.0
    %2665 = vmatprep.subr.mxu0 0.0
    %2666 = vmatpush1.msra.mxu0 0.0
    %2667 = vmatprep.subr.mxu0 0.0
    %2668 = vmatpush1.msra.mxu0 0.0
    %2669 = vmatprep.subr.mxu0 0.0
    %2670 = vmatpush1.msra.mxu0 0.0
    %2671 = vmatprep.subr.mxu0 0.0
    %2672 = vmatpush1.msra.mxu0 0.0
    %2673 = vmatprep.mubr.f32.mxu0 0.0
    %2674 = vmatmul.mubr.f32.gmra.mrb[0].mxu0 %v2607
    %v2675 = vpop.f32.mrb[0].mxu0
    %v2676 = vadd.f32 %v182, %v2675
    %v2677 = vpop.f32.mrb[0].mxu0
    %2678 = vdwg.mxu0
    %v2680 = vrot.slane %v2676, 1
    %v2681 = vrot.slane %v2676, 2
    %v2682 = vrot.slane %v2676, 3
    %v2683 = vrot.slane %v2676, 4
    %v2684 = vrot.slane %v2676, 5
    %v2685 = vrot.slane %v2676, 6
    %v2686 = vrot.slane %v2676, 7
    %v2695 = vadd.f32 %v135, %v2680
    %v2696 = vadd.f32 %v140, %v2681
    %v2697 = vadd.f32 %v145, %v2682
    %v2698 = vadd.f32 %v150, %v2683
    %v2699 = vadd.f32 %v155, %v2684
    %v2700 = vadd.f32 %v160, %v2685
    %v2701 = vadd.f32 %v165, %v2686
    %v2702 = vadd.f32 %v170, %v2676
    %v2703 = vxor.u32 %v2695, 2147483648
    %v2704 = vxor.u32 %v2696, 2147483648
    %v2705 = vxor.u32 %v2697, 2147483648
    %v2706 = vxor.u32 %v2698, 2147483648
    %v2707 = vxor.u32 %v2699, 2147483648
    %v2708 = vxor.u32 %v2700, 2147483648
    %v2709 = vxor.u32 %v2701, 2147483648
    %v2710 = vxor.u32 %v2702, 2147483648
    %v2711 = vmul.f32 %v2703, 1.442695
    %v2712 = vpow.pop %v2711
    %v2713 = vmul.f32 %v2704, 1.442695
    %v2714 = vpow.pop %v2713
    %v2715 = vmul.f32 %v2705, 1.442695
    %v2716 = vpow.pop %v2715
    %v2717 = vmul.f32 %v2706, 1.442695
    %v2718 = vpow.pop %v2717
    %v2719 = vmul.f32 %v2707, 1.442695
    %v2720 = vpow.pop %v2719
    %v2721 = vmul.f32 %v2708, 1.442695
    %v2722 = vpow.pop %v2721
    %v2723 = vmul.f32 %v2709, 1.442695
    %v2724 = vpow.pop %v2723
    %v2725 = vmul.f32 %v2710, 1.442695
    %v2726 = vpow.pop %v2725
    %v2727 = vadd.f32 %v2712, 1.0
    %v2728 = vadd.f32 %v2714, 1.0
    %v2729 = vadd.f32 %v2716, 1.0
    %v2730 = vadd.f32 %v2718, 1.0
    %v2731 = vadd.f32 %v2720, 1.0
    %v2732 = vadd.f32 %v2722, 1.0
    %v2733 = vadd.f32 %v2724, 1.0
    %v2734 = vadd.f32 %v2726, 1.0
    %v2735 = vrcp.pop %v2727
    %v2736 = vmul.f32 1.0, %v2735
    %v2737 = vrcp.pop %v2728
    %v2738 = vmul.f32 1.0, %v2737
    %v2739 = vrcp.pop %v2729
    %v2740 = vmul.f32 1.0, %v2739
    %v2741 = vrcp.pop %v2730
    %v2742 = vmul.f32 1.0, %v2741
    %v2743 = vrcp.pop %v2731
    %v2744 = vmul.f32 1.0, %v2743
    %v2745 = vrcp.pop %v2732
    %v2746 = vmul.f32 1.0, %v2745
    %v2747 = vrcp.pop %v2733
    %v2748 = vmul.f32 1.0, %v2747
    %v2749 = vrcp.pop %v2734
    %v2750 = vmul.f32 1.0, %v2749
    %2751 = vrot.lane.b32.xlu0 %v2680, 64
    %v2752 = vpop.permute.xlu0 %2751
    %2753 = vrot.lane.b32.xlu0 %v2681, 64
    %v2754 = vpop.permute.xlu0 %2753
    %2755 = vrot.lane.b32.xlu0 %v2682, 64
    %v2756 = vpop.permute.xlu0 %2755
    %2757 = vrot.lane.b32.xlu0 %v2683, 64
    %v2758 = vpop.permute.xlu0 %2757
    %2759 = vrot.lane.b32.xlu0 %v2684, 64
    %v2760 = vpop.permute.xlu0 %2759
    %2761 = vrot.lane.b32.xlu0 %v2685, 64
    %v2762 = vpop.permute.xlu0 %2761
    %2763 = vrot.lane.b32.xlu0 %v2686, 64
    %v2764 = vpop.permute.xlu0 %2763
    %2765 = vrot.lane.b32.xlu0 %v2676, 64
    %v2766 = vpop.permute.xlu0 %2765
    %v2775 = vmul.f32 %v2736, %v2752
    %v2776 = vmul.f32 %v2738, %v2754
    %v2777 = vmul.f32 %v2740, %v2756
    %v2778 = vmul.f32 %v2742, %v2758
    %v2779 = vmul.f32 %v2744, %v2760
    %v2780 = vmul.f32 %v2746, %v2762
    %v2781 = vmul.f32 %v2748, %v2764
    %v2782 = vmul.f32 %v2750, %v2766
    %2791 = vrot.lane.b32.xlu0 %v2775, 64
    %v2792 = vpop.permute.xlu0 %2791
    %2793 = vrot.lane.b32.xlu0 %v2776, 64
    %v2794 = vpop.permute.xlu0 %2793
    %2795 = vrot.lane.b32.xlu0 %v2777, 64
    %v2796 = vpop.permute.xlu0 %2795
    %2797 = vrot.lane.b32.xlu0 %v2778, 64
    %v2798 = vpop.permute.xlu0 %2797
    %2799 = vrot.lane.b32.xlu0 %v2779, 64
    %v2800 = vpop.permute.xlu0 %2799
    %2801 = vrot.lane.b32.xlu0 %v2780, 64
    %v2802 = vpop.permute.xlu0 %2801
    %2803 = vrot.lane.b32.xlu0 %v2781, 64
    %v2804 = vpop.permute.xlu0 %2803
    %2805 = vrot.lane.b32.xlu0 %v2782, 64
    %v2806 = vpop.permute.xlu0 %2805
    %v2815 = vadd.f32 %v135, %v2792
    %v2816 = vadd.f32 %v140, %v2794
    %v2817 = vadd.f32 %v145, %v2796
    %v2818 = vadd.f32 %v150, %v2798
    %v2819 = vadd.f32 %v155, %v2800
    %v2820 = vadd.f32 %v160, %v2802
    %v2821 = vadd.f32 %v165, %v2804
    %v2822 = vadd.f32 %v170, %v2806
    %v2823 = vtanh.pop %v2815
    %v2824 = vtanh.pop %v2816
    %v2825 = vtanh.pop %v2817
    %v2826 = vtanh.pop %v2818
    %v2827 = vtanh.pop %v2819
    %v2828 = vtanh.pop %v2820
    %v2829 = vtanh.pop %v2821
    %v2830 = vtanh.pop %v2822
    %v2831 = vsub.f32 1.0, %v2736
    %v2832 = vsub.f32 1.0, %v2738
    %v2833 = vsub.f32 1.0, %v2740
    %v2834 = vsub.f32 1.0, %v2742
    %v2835 = vsub.f32 1.0, %v2744
    %v2836 = vsub.f32 1.0, %v2746
    %v2837 = vsub.f32 1.0, %v2748
    %v2838 = vsub.f32 1.0, %v2750
    %2847 = vrot.lane.b32.xlu0 %v2823, 96
    %v2848 = vpop.permute.xlu0 %2847
    %2849 = vrot.lane.b32.xlu0 %v2824, 96
    %v2850 = vpop.permute.xlu0 %2849
    %2851 = vrot.lane.b32.xlu0 %v2825, 96
    %v2852 = vpop.permute.xlu0 %2851
    %2853 = vrot.lane.b32.xlu0 %v2826, 96
    %v2854 = vpop.permute.xlu0 %2853
    %2855 = vrot.lane.b32.xlu0 %v2827, 96
    %v2856 = vpop.permute.xlu0 %2855
    %2857 = vrot.lane.b32.xlu0 %v2828, 96
    %v2858 = vpop.permute.xlu0 %2857
    %2859 = vrot.lane.b32.xlu0 %v2829, 96
    %v2860 = vpop.permute.xlu0 %2859
    %2861 = vrot.lane.b32.xlu0 %v2830, 96
    %v2862 = vpop.permute.xlu0 %2861
    %v2871 = vmul.f32 %v2831, %v2848
    %v2872 = vmul.f32 %v2832, %v2850
    %v2873 = vmul.f32 %v2833, %v2852
    %v2874 = vmul.f32 %v2834, %v2854
    %v2875 = vmul.f32 %v2835, %v2856
    %v2876 = vmul.f32 %v2836, %v2858
    %v2877 = vmul.f32 %v2837, %v2860
    %v2878 = vmul.f32 %v2838, %v2862
    %v2879 = vrot.slane %v2551, 7
    %v2880 = vrot.slane %v2553, 7
    %v2881 = vrot.slane %v2554, 7
    %v2882 = vrot.slane %v2555, 7
    %v2883 = vrot.slane %v2556, 7
    %v2884 = vrot.slane %v2557, 7
    %v2893 = vmul.f32 %v2736, %v2879
    %v2894 = vmul.f32 %v2738, %v2567
    %v2895 = vmul.f32 %v2740, %v2880
    %v2896 = vmul.f32 %v2742, %v2881
    %v2897 = vmul.f32 %v2744, %v2882
    %v2898 = vmul.f32 %v2746, %v2883
    %v2899 = vmul.f32 %v2748, %v2884
    %v2900 = vmul.f32 %v2750, %v2603
    %v2901 = vadd.f32 %v2871, %v2893
    %v2902 = vadd.f32 %v2872, %v2894
    %v2903 = vadd.f32 %v2873, %v2895
    %v2904 = vadd.f32 %v2874, %v2896
    %v2905 = vadd.f32 %v2875, %v2897
    %v2906 = vadd.f32 %v2876, %v2898
    %v2907 = vadd.f32 %v2877, %v2899
    %v2908 = vadd.f32 %v2878, %v2900
    %v2917 = vrot.slane %v2902, 7
    %v2918 = vrot.slane %v2903, 6
    %v2919 = vsel %vm482, %v2918, %v2917
    %v2920 = vrot.slane %v2904, 5
    %v2921 = vsel %vm485, %v2920, %v2919
    %v2922 = vrot.slane %v2905, 4
    %v2923 = vsel %vm488, %v2922, %v2921
    %v2924 = vrot.slane %v2906, 3
    %v2925 = vsel %vm491, %v2924, %v2923
    %v2926 = vrot.slane %v2907, 2
    %v2927 = vsel %vm494, %v2926, %v2925
    %v2928 = vrot.slane %v2908, 1
    %v2929 = vsel %vm497, %v2928, %v2927
    %2930 = vrot.lane.b32.xlu0 %v2901, 96
    %v2931 = vpop.permute.xlu0 %2930
    %2932 = vrot.lane.b32.xlu0 %v2929, 96
    %v2933 = vpop.permute.xlu0 %2932
    %s2936 = scalar_lea.vmem [#allocation2], 56
    %vm2937 = vcmask 261127
    %2938 = vst.msk [vmem:[%s2936 - $0x7] sm:$0x80] %vm2937, %v2931
    %vm2939 = vcmask 260096
    %2940 = vst.msk [vmem:[%s2936 + $0x1] sm:$0x7f] %vm2939, %v2933
    %v2941 = vld [vmem:[#allocation2] sm:$0xff]
    %v2942 = vld [vmem:[#allocation2 + $0x8] sm:$0xff]
    %v2943 = vld [vmem:[#allocation2 + $0x10] sm:$0xff]
    %v2944 = vld [vmem:[#allocation2 + $0x18] sm:$0xff]
    %v2945 = vld [vmem:[#allocation2 + $0x20] sm:$0xff]
    %v2946 = vld [vmem:[#allocation2 + $0x28] sm:$0xff]
    %v2947 = vld [vmem:[#allocation2 + $0x30] sm:$0xff]
    %v2948 = vld [vmem:[#allocation2 + $0x38] sm:$0xff]
    %v2949 = vld [vmem:[%s5] sm:$0xff]
    %v2950 = vld [vmem:[%s5 + $0x8] sm:$0xff]
    %v2951 = vld [vmem:[%s5 + $0x10] sm:$0xff]
    %v2952 = vld [vmem:[%s5 + $0x18] sm:$0xff]
    %v2953 = vld [vmem:[%s6] sm:$0x1]
    %v2955 = vlaneseq
    %v2956 = vshrl.u32 %v2955, 7
    %v2957 = vsub.s32 0, %v2956
    %v2958 = vrot.slane %v2953, %v2957
    %v2961 = vsel %vm184, %v2941, 0
    %v2964 = vsel %vm184, %v2942, 0
    %v2967 = vsel %vm184, %v2943, 0
    %v2970 = vsel %vm184, %v2944, 0
    %v2973 = vsel %vm184, %v2945, 0
    %v2976 = vsel %vm184, %v2946, 0
    %v2979 = vsel %vm184, %v2947, 0
    %v2982 = vsel %vm184, %v2948, 0
    %2984 = vmatprep.subr.mxu0 0.0
    %2985 = vmatpush1.msra.mxu0 %v2949
    %2986 = vmatprep.subr.mxu0 0.0
    %2987 = vmatpush1.msra.mxu0 %v2950
    %2988 = vmatprep.subr.mxu0 0.0
    %2989 = vmatpush1.msra.mxu0 %v2951
    %2990 = vmatprep.subr.mxu0 0.0
    %2991 = vmatpush1.msra.mxu0 %v2952
    %2992 = vmatprep.subr.mxu0 0.0
    %2993 = vmatpush1.msra.mxu0 0.0
    %2994 = vmatprep.subr.mxu0 0.0
    %2995 = vmatpush1.msra.mxu0 0.0
    %2996 = vmatprep.subr.mxu0 0.0
    %2997 = vmatpush1.msra.mxu0 0.0
    %2998 = vmatprep.subr.mxu0 0.0
    %2999 = vmatpush1.msra.mxu0 0.0
    %3000 = vmatprep.subr.mxu0 0.0
    %3001 = vmatpush1.msra.mxu0 0.0
    %3002 = vmatprep.subr.mxu0 0.0
    %3003 = vmatpush1.msra.mxu0 0.0
    %3004 = vmatprep.subr.mxu0 0.0
    %3005 = vmatpush1.msra.mxu0 0.0
    %3006 = vmatprep.subr.mxu0 0.0
    %3007 = vmatpush1.msra.mxu0 0.0
    %3008 = vmatprep.subr.mxu0 0.0
    %3009 = vmatpush1.msra.mxu0 0.0
    %3010 = vmatprep.subr.mxu0 0.0
    %3011 = vmatpush1.msra.mxu0 0.0
    %3012 = vmatprep.subr.mxu0 0.0
    %3013 = vmatpush1.msra.mxu0 0.0
    %3014 = vmatprep.subr.mxu0 0.0
    %3015 = vmatpush1.msra.mxu0 0.0
    %3016 = vmatprep.subr.mxu0 0.0
    %3017 = vmatpush1.msra.mxu0 0.0
    %3018 = vmatprep.subr.mxu0 0.0
    %3019 = vmatpush1.msra.mxu0 0.0
    %3020 = vmatprep.subr.mxu0 0.0
    %3021 = vmatpush1.msra.mxu0 0.0
    %3022 = vmatprep.subr.mxu0 0.0
    %3023 = vmatpush1.msra.mxu0 0.0
    %3024 = vmatprep.subr.mxu0 0.0
    %3025 = vmatpush1.msra.mxu0 0.0
    %3026 = vmatprep.subr.mxu0 0.0
    %3027 = vmatpush1.msra.mxu0 0.0
    %3028 = vmatprep.subr.mxu0 0.0
    %3029 = vmatpush1.msra.mxu0 0.0
    %3030 = vmatprep.subr.mxu0 0.0
    %3031 = vmatpush1.msra.mxu0 0.0
    %3032 = vmatprep.subr.mxu0 0.0
    %3033 = vmatpush1.msra.mxu0 0.0
    %3034 = vmatprep.subr.mxu0 0.0
    %3035 = vmatpush1.msra.mxu0 0.0
    %3036 = vmatprep.subr.mxu0 0.0
    %3037 = vmatpush1.msra.mxu0 0.0
    %3038 = vmatprep.subr.mxu0 0.0
    %3039 = vmatpush1.msra.mxu0 0.0
    %3040 = vmatprep.subr.mxu0 0.0
    %3041 = vmatpush1.msra.mxu0 0.0
    %3042 = vmatprep.subr.mxu0 0.0
    %3043 = vmatpush1.msra.mxu0 0.0
    %3044 = vmatprep.subr.mxu0 0.0
    %3045 = vmatpush1.msra.mxu0 0.0
    %3046 = vmatprep.subr.mxu0 0.0
    %3047 = vmatpush1.msra.mxu0 0.0
    %3048 = vmatprep.mubr.f32.mxu0 0.0
    %3049 = vmatmul.mubr.f32.gmra.mrb[0].mxu0 %v2961
    %v3050 = vpop.f32.mrb[0].mxu0
    %v3051 = vadd.f32 %v2958, %v3050
    %v3052 = vpop.f32.mrb[0].mxu0
    %3053 = vmatprep.mubr.f32.mxu0 0.0
    %3054 = vmatmul.mubr.f32.gmra.mrb[0].mxu0 %v2964
    %v3055 = vpop.f32.mrb[0].mxu0
    %v3056 = vadd.f32 %v2958, %v3055
    %v3057 = vpop.f32.mrb[0].mxu0
    %3058 = vmatprep.mubr.f32.mxu0 0.0
    %3059 = vmatmul.mubr.f32.gmra.mrb[0].mxu0 %v2967
    %v3060 = vpop.f32.mrb[0].mxu0
    %v3061 = vadd.f32 %v2958, %v3060
    %v3062 = vpop.f32.mrb[0].mxu0
    %3063 = vmatprep.mubr.f32.mxu0 0.0
    %3064 = vmatmul.mubr.f32.gmra.mrb[0].mxu0 %v2970
    %v3065 = vpop.f32.mrb[0].mxu0
    %v3066 = vadd.f32 %v2958, %v3065
    %v3067 = vpop.f32.mrb[0].mxu0
    %3068 = vmatprep.mubr.f32.mxu0 0.0
    %3069 = vmatmul.mubr.f32.gmra.mrb[0].mxu0 %v2973
    %v3070 = vpop.f32.mrb[0].mxu0
    %v3071 = vadd.f32 %v2958, %v3070
    %v3072 = vpop.f32.mrb[0].mxu0
    %3073 = vmatprep.mubr.f32.mxu0 0.0
    %3074 = vmatmul.mubr.f32.gmra.mrb[0].mxu0 %v2976
    %v3075 = vpop.f32.mrb[0].mxu0
    %v3076 = vadd.f32 %v2958, %v3075
    %v3077 = vpop.f32.mrb[0].mxu0
    %3078 = vmatprep.mubr.f32.mxu0 0.0
    %3079 = vmatmul.mubr.f32.gmra.mrb[0].mxu0 %v2979
    %v3080 = vpop.f32.mrb[0].mxu0
    %v3081 = vadd.f32 %v2958, %v3080
    %v3082 = vpop.f32.mrb[0].mxu0
    %3083 = vmatprep.mubr.f32.mxu0 0.0
    %3084 = vmatmul.mubr.f32.gmra.mrb[0].mxu0 %v2982
    %v3085 = vpop.f32.mrb[0].mxu0
    %v3086 = vadd.f32 %v2958, %v3085
    %v3087 = vpop.f32.mrb[0].mxu0
    %3088 = vdwg.mxu0
    %v3089 = vmax.f32 %v3051, 0.0
    %v3090 = vmax.f32 %v3056, 0.0
    %v3091 = vmax.f32 %v3061, 0.0
    %v3092 = vmax.f32 %v3066, 0.0
    %v3093 = vmax.f32 %v3071, 0.0
    %v3094 = vmax.f32 %v3076, 0.0
    %v3095 = vmax.f32 %v3081, 0.0
    %v3096 = vmax.f32 %v3086, 0.0
    %v3097 = vld [vmem:[%s7] sm:$0xff]
    %v3098 = vld [vmem:[%s7 + $0x8] sm:$0xff]
    %v3099 = vld [vmem:[%s7 + $0x10] sm:$0xff]
    %v3100 = vld [vmem:[%s7 + $0x18] sm:$0xff]
    %v3101 = vld [vmem:[%s8] sm:$0x1]
    %v3103 = vlaneseq
    %v3104 = vshrl.u32 %v3103, 7
    %v3105 = vsub.s32 0, %v3104
    %v3106 = vrot.slane %v3101, %v3105
    %v3109 = vsel %vm184, %v3089, 0
    %v3112 = vsel %vm184, %v3090, 0
    %v3115 = vsel %vm184, %v3091, 0
    %v3118 = vsel %vm184, %v3092, 0
    %v3121 = vsel %vm184, %v3093, 0
    %v3124 = vsel %vm184, %v3094, 0
    %v3127 = vsel %vm184, %v3095, 0
    %v3130 = vsel %vm184, %v3096, 0
    %3132 = vmatprep.subr.mxu0 0.0
    %3133 = vmatpush1.msra.mxu0 %v3097
    %3134 = vmatprep.subr.mxu0 0.0
    %3135 = vmatpush1.msra.mxu0 %v3098
    %3136 = vmatprep.subr.mxu0 0.0
    %3137 = vmatpush1.msra.mxu0 %v3099
    %3138 = vmatprep.subr.mxu0 0.0
    %3139 = vmatpush1.msra.mxu0 %v3100
    %3140 = vmatprep.subr.mxu0 0.0
    %3141 = vmatpush1.msra.mxu0 0.0
    %3142 = vmatprep.subr.mxu0 0.0
    %3143 = vmatpush1.msra.mxu0 0.0
    %3144 = vmatprep.subr.mxu0 0.0
    %3145 = vmatpush1.msra.mxu0 0.0
    %3146 = vmatprep.subr.mxu0 0.0
    %3147 = vmatpush1.msra.mxu0 0.0
    %3148 = vmatprep.subr.mxu0 0.0
    %3149 = vmatpush1.msra.mxu0 0.0
    %3150 = vmatprep.subr.mxu0 0.0
    %3151 = vmatpush1.msra.mxu0 0.0
    %3152 = vmatprep.subr.mxu0 0.0
    %3153 = vmatpush1.msra.mxu0 0.0
    %3154 = vmatprep.subr.mxu0 0.0
    %3155 = vmatpush1.msra.mxu0 0.0
    %3156 = vmatprep.subr.mxu0 0.0
    %3157 = vmatpush1.msra.mxu0 0.0
    %3158 = vmatprep.subr.mxu0 0.0
    %3159 = vmatpush1.msra.mxu0 0.0
    %3160 = vmatprep.subr.mxu0 0.0
    %3161 = vmatpush1.msra.mxu0 0.0
    %3162 = vmatprep.subr.mxu0 0.0
    %3163 = vmatpush1.msra.mxu0 0.0
    %3164 = vmatprep.subr.mxu0 0.0
    %3165 = vmatpush1.msra.mxu0 0.0
    %3166 = vmatprep.subr.mxu0 0.0
    %3167 = vmatpush1.msra.mxu0 0.0
    %3168 = vmatprep.subr.mxu0 0.0
    %3169 = vmatpush1.msra.mxu0 0.0
    %3170 = vmatprep.subr.mxu0 0.0
    %3171 = vmatpush1.msra.mxu0 0.0
    %3172 = vmatprep.subr.mxu0 0.0
    %3173 = vmatpush1.msra.mxu0 0.0
    %3174 = vmatprep.subr.mxu0 0.0
    %3175 = vmatpush1.msra.mxu0 0.0
    %3176 = vmatprep.subr.mxu0 0.0
    %3177 = vmatpush1.msra.mxu0 0.0
    %3178 = vmatprep.subr.mxu0 0.0
    %3179 = vmatpush1.msra.mxu0 0.0
    %3180 = vmatprep.subr.mxu0 0.0
    %3181 = vmatpush1.msra.mxu0 0.0
    %3182 = vmatprep.subr.mxu0 0.0
    %3183 = vmatpush1.msra.mxu0 0.0
    %3184 = vmatprep.subr.mxu0 0.0
    %3185 = vmatpush1.msra.mxu0 0.0
    %3186 = vmatprep.subr.mxu0 0.0
    %3187 = vmatpush1.msra.mxu0 0.0
    %3188 = vmatprep.subr.mxu0 0.0
    %3189 = vmatpush1.msra.mxu0 0.0
    %3190 = vmatprep.subr.mxu0 0.0
    %3191 = vmatpush1.msra.mxu0 0.0
    %3192 = vmatprep.subr.mxu0 0.0
    %3193 = vmatpush1.msra.mxu0 0.0
    %3194 = vmatprep.subr.mxu0 0.0
    %3195 = vmatpush1.msra.mxu0 0.0
    %3196 = vmatprep.mubr.f32.mxu0 0.0
    %3197 = vmatmul.mubr.f32.gmra.mrb[0].mxu0 %v3109
    %v3198 = vpop.f32.mrb[0].mxu0
    %v3199 = vadd.f32 %v3106, %v3198
    %v3200 = vpop.f32.mrb[0].mxu0
    %3201 = vmatprep.mubr.f32.mxu0 0.0
    %3202 = vmatmul.mubr.f32.gmra.mrb[0].mxu0 %v3112
    %v3203 = vpop.f32.mrb[0].mxu0
    %v3204 = vadd.f32 %v3106, %v3203
    %v3205 = vpop.f32.mrb[0].mxu0
    %3206 = vmatprep.mubr.f32.mxu0 0.0
    %3207 = vmatmul.mubr.f32.gmra.mrb[0].mxu0 %v3115
    %v3208 = vpop.f32.mrb[0].mxu0
    %v3209 = vadd.f32 %v3106, %v3208
    %v3210 = vpop.f32.mrb[0].mxu0
    %3211 = vmatprep.mubr.f32.mxu0 0.0
    %3212 = vmatmul.mubr.f32.gmra.mrb[0].mxu0 %v3118
    %v3213 = vpop.f32.mrb[0].mxu0
    %v3214 = vadd.f32 %v3106, %v3213
    %v3215 = vpop.f32.mrb[0].mxu0
    %3216 = vmatprep.mubr.f32.mxu0 0.0
    %3217 = vmatmul.mubr.f32.gmra.mrb[0].mxu0 %v3121
    %v3218 = vpop.f32.mrb[0].mxu0
    %v3219 = vadd.f32 %v3106, %v3218
    %v3220 = vpop.f32.mrb[0].mxu0
    %3221 = vmatprep.mubr.f32.mxu0 0.0
    %3222 = vmatmul.mubr.f32.gmra.mrb[0].mxu0 %v3124
    %v3223 = vpop.f32.mrb[0].mxu0
    %v3224 = vadd.f32 %v3106, %v3223
    %v3225 = vpop.f32.mrb[0].mxu0
    %3226 = vmatprep.mubr.f32.mxu0 0.0
    %3227 = vmatmul.mubr.f32.gmra.mrb[0].mxu0 %v3127
    %v3228 = vpop.f32.mrb[0].mxu0
    %v3229 = vadd.f32 %v3106, %v3228
    %v3230 = vpop.f32.mrb[0].mxu0
    %3231 = vmatprep.mubr.f32.mxu0 0.0
    %3232 = vmatmul.mubr.f32.gmra.mrb[0].mxu0 %v3130
    %v3233 = vpop.f32.mrb[0].mxu0
    %v3234 = vadd.f32 %v3106, %v3233
    %v3235 = vpop.f32.mrb[0].mxu0
    %3236 = vdwg.mxu0
    %vm3237 = vcmask 39936
    %v3238 = vsel %vm3237, %v3199, -inf
    %3239 = vmax.xlane.f32.xlu0 %v3238
    %v3240 = vpop.xlane.xlu0 %3239
    %v3241 = vsel %vm3237, %v3204, -inf
    %3242 = vmax.xlane.f32.xlu0 %v3241
    %v3243 = vpop.xlane.xlu0 %3242
    %v3244 = vsel %vm3237, %v3209, -inf
    %3245 = vmax.xlane.f32.xlu0 %v3244
    %v3246 = vpop.xlane.xlu0 %3245
    %v3247 = vsel %vm3237, %v3214, -inf
    %3248 = vmax.xlane.f32.xlu0 %v3247
    %v3249 = vpop.xlane.xlu0 %3248
    %v3250 = vsel %vm3237, %v3219, -inf
    %3251 = vmax.xlane.f32.xlu0 %v3250
    %v3252 = vpop.xlane.xlu0 %3251
    %v3253 = vsel %vm3237, %v3224, -inf
    %3254 = vmax.xlane.f32.xlu0 %v3253
    %v3255 = vpop.xlane.xlu0 %3254
    %v3256 = vsel %vm3237, %v3229, -inf
    %3257 = vmax.xlane.f32.xlu0 %v3256
    %v3258 = vpop.xlane.xlu0 %3257
    %v3259 = vsel %vm3237, %v3234, -inf
    %3260 = vmax.xlane.f32.xlu0 %v3259
    %v3261 = vpop.xlane.xlu0 %3260
    %v3262 = vsub.f32 %v3199, %v3240
    %v3263 = vsub.f32 %v3204, %v3243
    %v3264 = vsub.f32 %v3209, %v3246
    %v3265 = vsub.f32 %v3214, %v3249
    %v3266 = vsub.f32 %v3219, %v3252
    %v3267 = vsub.f32 %v3224, %v3255
    %v3268 = vsub.f32 %v3229, %v3258
    %v3269 = vsub.f32 %v3234, %v3261
    %v3270 = vmul.f32 %v3262, 1.442695
    %v3271 = vpow.pop %v3270
    %v3272 = vmul.f32 %v3263, 1.442695
    %v3273 = vpow.pop %v3272
    %v3274 = vmul.f32 %v3264, 1.442695
    %v3275 = vpow.pop %v3274
    %v3276 = vmul.f32 %v3265, 1.442695
    %v3277 = vpow.pop %v3276
    %v3278 = vmul.f32 %v3266, 1.442695
    %v3279 = vpow.pop %v3278
    %v3280 = vmul.f32 %v3267, 1.442695
    %v3281 = vpow.pop %v3280
    %v3282 = vmul.f32 %v3268, 1.442695
    %v3283 = vpow.pop %v3282
    %v3284 = vmul.f32 %v3269, 1.442695
    %v3285 = vpow.pop %v3284
    %v3286 = vsel %vm3237, %v3271, 0.0
    %3287 = vadd.xlane.f32.xlu0 %v3286
    %v3288 = vpop.xlane.xlu0 %3287
    %v3289 = vsel %vm3237, %v3273, 0.0
    %3290 = vadd.xlane.f32.xlu0 %v3289
    %v3291 = vpop.xlane.xlu0 %3290
    %v3292 = vsel %vm3237, %v3275, 0.0
    %3293 = vadd.xlane.f32.xlu0 %v3292
    %v3294 = vpop.xlane.xlu0 %3293
    %v3295 = vsel %vm3237, %v3277, 0.0
    %3296 = vadd.xlane.f32.xlu0 %v3295
    %v3297 = vpop.xlane.xlu0 %3296
    %v3298 = vsel %vm3237, %v3279, 0.0
    %3299 = vadd.xlane.f32.xlu0 %v3298
    %v3300 = vpop.xlane.xlu0 %3299
    %v3301 = vsel %vm3237, %v3281, 0.0
    %3302 = vadd.xlane.f32.xlu0 %v3301
    %v3303 = vpop.xlane.xlu0 %3302
    %v3304 = vsel %vm3237, %v3283, 0.0
    %3305 = vadd.xlane.f32.xlu0 %v3304
    %v3306 = vpop.xlane.xlu0 %3305
    %v3307 = vsel %vm3237, %v3285, 0.0
    %3308 = vadd.xlane.f32.xlu0 %v3307
    %v3309 = vpop.xlane.xlu0 %3308
    %v3310 = vlog2.pop %v3288
    %v3311 = vmul.f32 %v3310, 0.6931472
    %v3312 = vlog2.pop %v3291
    %v3313 = vmul.f32 %v3312, 0.6931472
    %v3314 = vlog2.pop %v3294
    %v3315 = vmul.f32 %v3314, 0.6931472
    %v3316 = vlog2.pop %v3297
    %v3317 = vmul.f32 %v3316, 0.6931472
    %v3318 = vlog2.pop %v3300
    %v3319 = vmul.f32 %v3318, 0.6931472
    %v3320 = vlog2.pop %v3303
    %v3321 = vmul.f32 %v3320, 0.6931472
    %v3322 = vlog2.pop %v3306
    %v3323 = vmul.f32 %v3322, 0.6931472
    %v3324 = vlog2.pop %v3309
    %v3325 = vmul.f32 %v3324, 0.6931472
    %v3326 = vadd.f32 %v3311, %v3240
    %v3327 = vadd.f32 %v3313, %v3243
    %v3328 = vadd.f32 %v3315, %v3246
    %v3329 = vadd.f32 %v3317, %v3249
    %v3330 = vadd.f32 %v3319, %v3252
    %v3331 = vadd.f32 %v3321, %v3255
    %v3332 = vadd.f32 %v3323, %v3258
    %v3333 = vadd.f32 %v3325, %v3261
    %v3334 = vsub.f32 %v3199, %v3326
    %v3335 = vsub.f32 %v3204, %v3327
    %v3336 = vsub.f32 %v3209, %v3328
    %v3337 = vsub.f32 %v3214, %v3329
    %v3338 = vsub.f32 %v3219, %v3330
    %v3339 = vsub.f32 %v3224, %v3331
    %v3340 = vsub.f32 %v3229, %v3332
    %v3341 = vsub.f32 %v3234, %v3333
    %v3350 = vrot.slane %v3335, 7
    %v3351 = vsel %vm482, %v3350, %v3334
    %v3352 = vrot.slane %v3336, 6
    %v3353 = vsel %vm485, %v3352, %v3351
    %v3354 = vrot.slane %v3337, 5
    %v3355 = vsel %vm488, %v3354, %v3353
    %v3356 = vrot.slane %v3338, 4
    %v3357 = vsel %vm491, %v3356, %v3355
    %v3358 = vrot.slane %v3339, 3
    %v3359 = vsel %vm494, %v3358, %v3357
    %v3360 = vrot.slane %v3340, 2
    %v3361 = vsel %vm497, %v3360, %v3359
    %v3362 = vrot.slane %v3341, 1
    %v3363 = vsel %vm500, %v3362, %v3361
    %3365 = vst.msk [vmem:[%s9] sm:$0xff] %vm3237, %v3363
    %v3366 = vsel %vm485, %v3350, %v3334
    %v3367 = vsel %vm488, %v3352, %v3366
    %v3368 = vsel %vm491, %v3354, %v3367
    %v3369 = vsel %vm494, %v3356, %v3368
    %v3370 = vsel %vm497, %v3358, %v3369
    %v3371 = vsel %vm500, %v3360, %v3370
    %s3374 = scalar_lea.vmem %s9, 8
    %vm3375 = vcmask 39937
    %3376 = vst.msk [vmem:[%s3374 - $0x1] sm:$0xfe] %vm3375, %v3371
    %vm3377 = vcmask 32768
    %3378 = vst.msk [vmem:[%s3374 + $0x7] sm:$0x1] %vm3377, %v3362
    // Predicated region
    $region42: #{lv_behavior_forward.1} parent=1 // pred_check
      _
    $region43: #{lv_behavior_forward.1} parent=1 // pred_check_branch
      %3380 = sbr.rel (0) target = $region45
    $region44: #{lv_behavior_forward.1} parent=1 // pred_region
      _
    $region45: #{lv_behavior_forward.1} parent=1 // pred_fallthru
      _
    // Predicated region
    $region46: #{lv_behavior_forward.1} parent=1 // pred_check
      _
    $region47: #{lv_behavior_forward.1} parent=1 // pred_check_branch
      %3382 = sbr.rel (0) target = $region49
    $region48: #{lv_behavior_forward.1} parent=1 // pred_region
      _
    $region49: #{lv_behavior_forward.1} parent=1 // pred_fallthru
      _
    %3383 = vsyncpa [#allocation4], 1

</llo_original>
